<compile_context>
chip_gen: v7x
topology: tpu7x:2x2x1
jax: 0.10.0
libtpu: 0.0.40
codegen_flags: <defaults>
</compile_context>

<pallas_src>
import math

import jax
import jax.numpy as jnp
from jax.experimental import pallas as pl
from jax.experimental.pallas import tpu as pltpu  # noqa: F401  (TPU backend)

# ---------------- config (small, Llama-style) ----------------
VOCAB = 128
HIDDEN = 64
N_LAYERS = 2
N_HEADS = 4
HEAD_DIM = HIDDEN // N_HEADS
INTER = 128
EPS = 1e-5
BATCH = 2
SEQ = 8


# ---------------- fused whole-model kernel ----------------
def _model_kernel(ids_ref, amask_ref, embed_ref, ln1_ref, ln2_ref,
                  wqkv_ref, wo_ref, wgu_ref, wd_ref, normf_ref,
                  cos_ref, sin_ref, o_ref):
    f32 = jnp.float32
    bf16 = jnp.bfloat16

    BS = ids_ref.shape[0]
    B, S = amask_ref.shape
    VOC, H = embed_ref.shape
    L = wqkv_ref.shape[0]
    Dh = cos_ref.shape[1]
    nH = H // Dh
    I = wd_ref.shape[1]
    scale = 1.0 / math.sqrt(Dh)
    half = Dh // 2

    # ---- embedding lookup as one-hot (BS, V) @ (V, H) on the MXU ----
    ids = ids_ref[...]                                              # (BS, 1) i32
    vocab_iota = jax.lax.broadcasted_iota(jnp.int32, (BS, VOC), 1)
    onehot = (vocab_iota == ids).astype(bf16)                       # (BS, V)
    hidden = jnp.dot(onehot, embed_ref[...],
                     preferred_element_type=f32)                    # (BS, H) f32

    # ---- additive attention masks built in-register (no (B,S,S) DMA) ----
    row = jax.lax.broadcasted_iota(jnp.int32, (S, S), 0)
    col = jax.lax.broadcasted_iota(jnp.int32, (S, S), 1)
    causal = jnp.where(row >= col, 0.0, -1e9).astype(f32)           # (S, S)
    amask = amask_ref[...]                                          # (B, S) f32
    add_masks = [
        causal + jnp.where(amask[b:b + 1, :] > 0.5, 0.0, -1e9).astype(f32)
        for b in range(B)
    ]

    cos = cos_ref[...]                                              # (S, Dh) f32
    sin = sin_ref[...]

    def rope(x):  # x: (S, Dh) f32
        rot = jnp.concatenate([-x[:, half:], x[:, :half]], axis=-1)
        return x * cos + rot * sin

    def rmsnorm(x, w):  # f32 in, f32 out
        var = jnp.mean(x * x, axis=-1, keepdims=True)
        return x * jax.lax.rsqrt(var + EPS) * w

    # ---- decoder layers (static unroll; weights indexed by layer) ----
    for l in range(L):
        # -------- self-attention block --------
        normed = rmsnorm(hidden, ln1_ref[l]).astype(bf16)           # (BS, H)
        qkv = jnp.dot(normed, wqkv_ref[l],
                      preferred_element_type=f32)                   # (BS, 3H) f32
        batch_outs = []
        for b in range(B):
            r0 = b * S
            qb = qkv[r0:r0 + S, 0:H]
            kb = qkv[r0:r0 + S, H:2 * H]
            vb = qkv[r0:r0 + S, 2 * H:3 * H]
            head_outs = []
            for h in range(nH):
                c0 = h * Dh
                q = rope(qb[:, c0:c0 + Dh])                         # (S, Dh) f32
                k = rope(kb[:, c0:c0 + Dh])
                v = vb[:, c0:c0 + Dh]
                s = jax.lax.dot_general(
                    q.astype(bf16), k.astype(bf16),
                    (((1,), (1,)), ((), ())),
                    preferred_element_type=f32) * scale             # (S, S)
                s = s + add_masks[b]
                m = jnp.max(s, axis=-1, keepdims=True)
                p = jnp.exp(s - m)
                p = p / jnp.sum(p, axis=-1, keepdims=True)
                head_outs.append(
                    jnp.dot(p.astype(bf16), v.astype(bf16),
                            preferred_element_type=f32))            # (S, Dh)
            batch_outs.append(jnp.concatenate(head_outs, axis=-1))  # (S, H)
        attn = jnp.concatenate(batch_outs, axis=0)                  # (BS, H)
        hidden = hidden + jnp.dot(attn.astype(bf16), wo_ref[l],
                                  preferred_element_type=f32)

        # -------- MLP block (fused gate+up: lane-dense (H, 2I) matmul) ------
        normed = rmsnorm(hidden, ln2_ref[l]).astype(bf16)
        gu = jnp.dot(normed, wgu_ref[l],
                     preferred_element_type=f32)                    # (BS, 2I)
        g = gu[:, :I]
        u = gu[:, I:]
        hact = (g * jax.nn.sigmoid(g)) * u                          # SiLU * up, f32
        hidden = hidden + jnp.dot(hact.astype(bf16), wd_ref[l],
                                  preferred_element_type=f32)

    # ---- final RMSNorm ----
    o_ref[...] = rmsnorm(hidden, normf_ref[...]).astype(o_ref.dtype)


# ---------------- params ----------------
def init_params(key):
    keys = jax.random.split(key, 1 + N_LAYERS)
    params = {
        "embed": jax.random.normal(keys[0], (VOCAB, HIDDEN), jnp.float32) * 0.02,
        "norm_w": jnp.ones((HIDDEN,), jnp.float32),
        "layers": [],
    }
    for l in range(N_LAYERS):
        lk = jax.random.split(keys[1 + l], 7)
        params["layers"].append(
            dict(
                input_ln=jnp.ones((HIDDEN,), jnp.float32),
                post_ln=jnp.ones((HIDDEN,), jnp.float32),
                wq=jax.random.normal(lk[0], (HIDDEN, HIDDEN), jnp.float32) * 0.02,
                wk=jax.random.normal(lk[1], (HIDDEN, HIDDEN), jnp.float32) * 0.02,
                wv=jax.random.normal(lk[2], (HIDDEN, HIDDEN), jnp.float32) * 0.02,
                wo=jax.random.normal(lk[3], (HIDDEN, HIDDEN), jnp.float32) * 0.02,
                wg=jax.random.normal(lk[4], (HIDDEN, INTER), jnp.float32) * 0.02,
                wu=jax.random.normal(lk[5], (HIDDEN, INTER), jnp.float32) * 0.02,
                wd=jax.random.normal(lk[6], (INTER, HIDDEN), jnp.float32) * 0.02,
            )
        )
    return params


# ---------------- wrapper: pack weights, one pallas_call ----------------
def smol_model(params, input_ids, attention_mask):
    B, S = input_ids.shape
    layers = params["layers"]

    # Fuse QKV and gate/up weights, stack layers, cast matmul weights to bf16.
    wqkv = jnp.stack(
        [jnp.concatenate([lp["wq"], lp["wk"], lp["wv"]], axis=1) for lp in layers]
    ).astype(jnp.bfloat16)                                          # (L, H, 3H)
    wo = jnp.stack([lp["wo"] for lp in layers]).astype(jnp.bfloat16)  # (L, H, H)
    wgu = jnp.stack(
        [jnp.concatenate([lp["wg"], lp["wu"]], axis=1) for lp in layers]
    ).astype(jnp.bfloat16)                                          # (L, H, 2I)
    wd = jnp.stack([lp["wd"] for lp in layers]).astype(jnp.bfloat16)  # (L, I, H)
    ln1 = jnp.stack([lp["input_ln"].reshape(1, HIDDEN) for lp in layers])  # f32
    ln2 = jnp.stack([lp["post_ln"].reshape(1, HIDDEN) for lp in layers])   # f32
    embed = params["embed"].astype(jnp.bfloat16)                    # (V, H)
    normf = params["norm_w"].reshape(1, HIDDEN)                     # f32

    # RoPE tables (tiny setup, fused by XLA under jit).
    pos = jnp.arange(S, dtype=jnp.float32)
    inv_freq = 1.0 / (
        10000.0 ** (jnp.arange(0, HEAD_DIM, 2, dtype=jnp.float32) / HEAD_DIM)
    )
    freqs = pos[:, None] * inv_freq[None, :]
    emb = jnp.concatenate([freqs, freqs], axis=-1)                  # (S, Dh)
    cos, sin = jnp.cos(emb), jnp.sin(emb)

    ids2d = input_ids.reshape(B * S, 1).astype(jnp.int32)
    amask = attention_mask.astype(jnp.float32)                      # (B, S)

    # Advisory cost estimate (model is dispatch/latency bound at this size).
    flops = 2 * B * S * VOCAB * HIDDEN
    flops += N_LAYERS * (
        2 * B * S * HIDDEN * (3 * HIDDEN)
        + 2 * B * N_HEADS * S * S * HEAD_DIM * 2
        + 2 * B * S * HIDDEN * HIDDEN
        + 2 * B * S * HIDDEN * (2 * INTER)
        + 2 * B * S * INTER * HIDDEN
    )
    transcendentals = N_LAYERS * (B * N_HEADS * S * S + B * S * INTER) + 3 * B * S
    operands = (ids2d, amask, embed, ln1, ln2, wqkv, wo, wgu, wd, normf, cos, sin)
    bytes_accessed = sum(int(x.size) * x.dtype.itemsize for x in operands)
    bytes_accessed += B * S * HIDDEN * 4

    out = pl.pallas_call(
        _model_kernel,
        out_shape=jax.ShapeDtypeStruct((B * S, HIDDEN), jnp.float32),
        cost_estimate=pl.CostEstimate(
            flops=flops,
            transcendentals=transcendentals,
            bytes_accessed=bytes_accessed,
        ),
    )(*operands)
    return out.reshape(B, S, HIDDEN)


if __name__ == "__main__":
    key = jax.random.PRNGKey(0)
    pkey, ikey = jax.random.split(key)
    params = init_params(pkey)

    input_ids = jax.random.randint(ikey, (BATCH, SEQ), 0, VOCAB, dtype=jnp.int32)
    attention_mask = jnp.ones((BATCH, SEQ), dtype=jnp.int32)
    attention_mask = attention_mask.at[1, SEQ - 2:].set(0)  # pad tail of batch 1

    fwd = jax.jit(smol_model)
    out = fwd(params, input_ids, attention_mask)
    out = jax.block_until_ready(out)
    assert out.shape == (BATCH, SEQ, HIDDEN)
    assert bool(jnp.all(jnp.isfinite(out)))
    print("KERNEL_OK")
</pallas_src>

<mosaic_0001>
module attributes {stable_mosaic.version = 11 : i64} {
  func.func @_model_kernel(%arg0: memref<16x1xi32, #tpu.memory_space<vmem>>, %arg1: memref<2x8xf32, #tpu.memory_space<vmem>>, %arg2: memref<128x64xbf16, #tpu.memory_space<vmem>>, %arg3: memref<2x1x64xf32, #tpu.memory_space<vmem>>, %arg4: memref<2x1x64xf32, #tpu.memory_space<vmem>>, %arg5: memref<2x64x192xbf16, #tpu.memory_space<vmem>>, %arg6: memref<2x64x64xbf16, #tpu.memory_space<vmem>>, %arg7: memref<2x64x256xbf16, #tpu.memory_space<vmem>>, %arg8: memref<2x128x64xbf16, #tpu.memory_space<vmem>>, %arg9: memref<1x64xf32, #tpu.memory_space<vmem>>, %arg10: memref<8x16xf32, #tpu.memory_space<vmem>>, %arg11: memref<8x16xf32, #tpu.memory_space<vmem>>, %arg12: memref<16x64xf32, #tpu.memory_space<vmem>>) attributes {dimension_semantics = [], scalar_prefetch = 0 : i64, scratch_operands = 0 : i64, tpu.core_type = #tpu.core_type<tc>} {
    %c0 = arith.constant 0 : index
    %c0_0 = arith.constant 0 : index
    %0 = vector.load %arg0[%c0, %c0_0] : memref<16x1xi32, #tpu.memory_space<vmem>>, vector<16x1xi32>
    %1 = tpu.iota {dimensions = array<i32: 1>} : vector<16x128xi32>
    %2 = vector.broadcast %0 : vector<16x1xi32> to vector<16x128xi32>
    %3 = arith.cmpi eq, %1, %2 : vector<16x128xi32>
    %4 = arith.extui %3 : vector<16x128xi1> to vector<16x128xi32>
    %5 = arith.sitofp %4 : vector<16x128xi32> to vector<16x128xf32>
    %6 = arith.truncf %5 : vector<16x128xf32> to vector<16x128xbf16>
    %c0_1 = arith.constant 0 : index
    %c0_2 = arith.constant 0 : index
    %7 = vector.load %arg2[%c0_1, %c0_2] : memref<128x64xbf16, #tpu.memory_space<vmem>>, vector<128x64xbf16>
    %cst = arith.constant dense<0.000000e+00> : vector<16x64xf32>
    %8 = tpu.matmul %6, %7, %cst {dimension_numbers = #tpu.dot_dimension_numbers<[1], [0], [0], [1], [0, 0, 1, 1], [], []>} : vector<16x128xbf16>, vector<128x64xbf16>, vector<16x64xf32> -> vector<16x64xf32>
    %9 = tpu.iota {dimensions = array<i32: 0>} : vector<8x8xi32>
    %10 = tpu.iota {dimensions = array<i32: 1>} : vector<8x8xi32>
    %11 = arith.cmpi sge, %9, %10 : vector<8x8xi32>
    %cst_3 = arith.constant 0.000000e+00 : f32
    %cst_4 = arith.constant -1.000000e+09 : f32
    %12 = vector.broadcast %cst_3 : f32 to vector<8x8xf32>
    %13 = vector.broadcast %cst_4 : f32 to vector<8x8xf32>
    %14 = arith.select %11, %12, %13 : vector<8x8xi1>, vector<8x8xf32>
    %c0_5 = arith.constant 0 : index
    %c0_6 = arith.constant 0 : index
    %15 = vector.load %arg1[%c0_5, %c0_6] : memref<2x8xf32, #tpu.memory_space<vmem>>, vector<2x8xf32>
    %16 = vector.extract_strided_slice %15 {offsets = [0, 0], sizes = [1, 8], strides = [1, 1]} : vector<2x8xf32> to vector<1x8xf32>
    %cst_7 = arith.constant 5.000000e-01 : f32
    %17 = vector.broadcast %cst_7 : f32 to vector<1x8xf32>
    %18 = arith.cmpf ogt, %16, %17 : vector<1x8xf32>
    %cst_8 = arith.constant 0.000000e+00 : f32
    %cst_9 = arith.constant -1.000000e+09 : f32
    %19 = vector.broadcast %cst_8 : f32 to vector<1x8xf32>
    %20 = vector.broadcast %cst_9 : f32 to vector<1x8xf32>
    %21 = arith.select %18, %19, %20 : vector<1x8xi1>, vector<1x8xf32>
    %22 = vector.broadcast %21 : vector<1x8xf32> to vector<8x8xf32>
    %23 = arith.addf %14, %22 : vector<8x8xf32>
    %24 = vector.extract_strided_slice %15 {offsets = [1, 0], sizes = [1, 8], strides = [1, 1]} : vector<2x8xf32> to vector<1x8xf32>
    %cst_10 = arith.constant 5.000000e-01 : f32
    %25 = vector.broadcast %cst_10 : f32 to vector<1x8xf32>
    %26 = arith.cmpf ogt, %24, %25 : vector<1x8xf32>
    %cst_11 = arith.constant 0.000000e+00 : f32
    %cst_12 = arith.constant -1.000000e+09 : f32
    %27 = vector.broadcast %cst_11 : f32 to vector<1x8xf32>
    %28 = vector.broadcast %cst_12 : f32 to vector<1x8xf32>
    %29 = arith.select %26, %27, %28 : vector<1x8xi1>, vector<1x8xf32>
    %30 = vector.broadcast %29 : vector<1x8xf32> to vector<8x8xf32>
    %31 = arith.addf %14, %30 : vector<8x8xf32>
    %c0_13 = arith.constant 0 : index
    %c0_14 = arith.constant 0 : index
    %32 = vector.load %arg10[%c0_13, %c0_14] : memref<8x16xf32, #tpu.memory_space<vmem>>, vector<8x16xf32>
    %c0_15 = arith.constant 0 : index
    %c0_16 = arith.constant 0 : index
    %33 = vector.load %arg11[%c0_15, %c0_16] : memref<8x16xf32, #tpu.memory_space<vmem>>, vector<8x16xf32>
    %c0_17 = arith.constant 0 : index
    %c0_18 = arith.constant 0 : index
    %c0_19 = arith.constant 0 : index
    %34 = vector.load %arg3[%c0_17, %c0_18, %c0_19] : memref<2x1x64xf32, #tpu.memory_space<vmem>>, vector<1x1x64xf32>
    %35 = vector.shape_cast %34 : vector<1x1x64xf32> to vector<1x64xf32>
    %36 = arith.mulf %8, %8 : vector<16x64xf32>
    %cst_20 = arith.constant dense<0.000000e+00> : vector<16xf32>
    %37 = vector.multi_reduction <add>, %36, %cst_20 [1] : vector<16x64xf32> to vector<16xf32>
    %38 = vector.shape_cast %37 : vector<16xf32> to vector<16x1xf32>
    %cst_21 = arith.constant 6.400000e+01 : f32
    %39 = vector.broadcast %cst_21 : f32 to vector<16x1xf32>
    %40 = arith.divf %38, %39 : vector<16x1xf32>
    %cst_22 = arith.constant 9.99999974E-6 : f32
    %41 = vector.broadcast %cst_22 : f32 to vector<16x1xf32>
    %42 = arith.addf %40, %41 : vector<16x1xf32>
    %43 = math.rsqrt %42 : vector<16x1xf32>
    %44 = vector.broadcast %43 : vector<16x1xf32> to vector<16x64xf32>
    %45 = arith.mulf %8, %44 : vector<16x64xf32>
    %46 = vector.broadcast %35 : vector<1x64xf32> to vector<16x64xf32>
    %47 = arith.mulf %45, %46 : vector<16x64xf32>
    %48 = arith.truncf %47 : vector<16x64xf32> to vector<16x64xbf16>
    %c0_23 = arith.constant 0 : index
    %c0_24 = arith.constant 0 : index
    %c0_25 = arith.constant 0 : index
    %49 = vector.load %arg5[%c0_23, %c0_24, %c0_25] : memref<2x64x192xbf16, #tpu.memory_space<vmem>>, vector<1x64x192xbf16>
    %50 = vector.shape_cast %49 : vector<1x64x192xbf16> to vector<64x192xbf16>
    %cst_26 = arith.constant dense<0.000000e+00> : vector<16x192xf32>
    %51 = tpu.matmul %48, %50, %cst_26 {dimension_numbers = #tpu.dot_dimension_numbers<[1], [0], [0], [1], [0, 0, 1, 1], [], []>} : vector<16x64xbf16>, vector<64x192xbf16>, vector<16x192xf32> -> vector<16x192xf32>
    %52 = vector.extract_strided_slice %51 {offsets = [0, 0], sizes = [8, 64], strides = [1, 1]} : vector<16x192xf32> to vector<8x64xf32>
    %53 = vector.extract_strided_slice %51 {offsets = [0, 64], sizes = [8, 64], strides = [1, 1]} : vector<16x192xf32> to vector<8x64xf32>
    %54 = vector.extract_strided_slice %51 {offsets = [0, 128], sizes = [8, 64], strides = [1, 1]} : vector<16x192xf32> to vector<8x64xf32>
    %55 = vector.extract_strided_slice %52 {offsets = [0, 0], sizes = [8, 16], strides = [1, 1]} : vector<8x64xf32> to vector<8x16xf32>
    %56 = vector.extract_strided_slice %55 {offsets = [0, 8], sizes = [8, 8], strides = [1, 1]} : vector<8x16xf32> to vector<8x8xf32>
    %cst_27 = arith.constant 0.000000e+00 : f32
    %57 = vector.broadcast %cst_27 : f32 to vector<8x8xf32>
    %58 = arith.subf %57, %56 : vector<8x8xf32>
    %59 = vector.extract_strided_slice %55 {offsets = [0, 0], sizes = [8, 8], strides = [1, 1]} : vector<8x16xf32> to vector<8x8xf32>
    %60 = tpu.concatenate %58, %59 in 1 : vector<8x8xf32>, vector<8x8xf32> -> vector<8x16xf32>
    %61 = arith.mulf %55, %32 : vector<8x16xf32>
    %62 = arith.mulf %60, %33 : vector<8x16xf32>
    %63 = arith.addf %61, %62 : vector<8x16xf32>
    %64 = vector.extract_strided_slice %53 {offsets = [0, 0], sizes = [8, 16], strides = [1, 1]} : vector<8x64xf32> to vector<8x16xf32>
    %65 = vector.extract_strided_slice %64 {offsets = [0, 8], sizes = [8, 8], strides = [1, 1]} : vector<8x16xf32> to vector<8x8xf32>
    %cst_28 = arith.constant 0.000000e+00 : f32
    %66 = vector.broadcast %cst_28 : f32 to vector<8x8xf32>
    %67 = arith.subf %66, %65 : vector<8x8xf32>
    %68 = vector.extract_strided_slice %64 {offsets = [0, 0], sizes = [8, 8], strides = [1, 1]} : vector<8x16xf32> to vector<8x8xf32>
    %69 = tpu.concatenate %67, %68 in 1 : vector<8x8xf32>, vector<8x8xf32> -> vector<8x16xf32>
    %70 = arith.mulf %64, %32 : vector<8x16xf32>
    %71 = arith.mulf %69, %33 : vector<8x16xf32>
    %72 = arith.addf %70, %71 : vector<8x16xf32>
    %73 = vector.extract_strided_slice %54 {offsets = [0, 0], sizes = [8, 16], strides = [1, 1]} : vector<8x64xf32> to vector<8x16xf32>
    %74 = arith.truncf %63 : vector<8x16xf32> to vector<8x16xbf16>
    %75 = arith.truncf %72 : vector<8x16xf32> to vector<8x16xbf16>
    %cst_29 = arith.constant dense<0.000000e+00> : vector<8x8xf32>
    %76 = tpu.matmul %74, %75, %cst_29 {dimension_numbers = #tpu.dot_dimension_numbers<[1], [1], [0], [0], [0, 0, 1, 0], [], []>} : vector<8x16xbf16>, vector<8x16xbf16>, vector<8x8xf32> -> vector<8x8xf32>
    %cst_30 = arith.constant 2.500000e-01 : f32
    %77 = vector.broadcast %cst_30 : f32 to vector<8x8xf32>
    %78 = arith.mulf %76, %77 : vector<8x8xf32>
    %79 = arith.addf %78, %23 : vector<8x8xf32>
    %cst_31 = arith.constant dense<0xFF800000> : vector<8xf32>
    %80 = vector.multi_reduction <maximumf>, %79, %cst_31 [1] : vector<8x8xf32> to vector<8xf32>
    %81 = vector.shape_cast %80 : vector<8xf32> to vector<8x1xf32>
    %82 = vector.broadcast %81 : vector<8x1xf32> to vector<8x8xf32>
    %83 = arith.subf %79, %82 : vector<8x8xf32>
    %84 = math.exp %83 : vector<8x8xf32>
    %cst_32 = arith.constant dense<0.000000e+00> : vector<8xf32>
    %85 = vector.multi_reduction <add>, %84, %cst_32 [1] : vector<8x8xf32> to vector<8xf32>
    %86 = vector.shape_cast %85 : vector<8xf32> to vector<8x1xf32>
    %87 = vector.broadcast %86 : vector<8x1xf32> to vector<8x8xf32>
    %88 = arith.divf %84, %87 : vector<8x8xf32>
    %89 = arith.truncf %88 : vector<8x8xf32> to vector<8x8xbf16>
    %90 = arith.truncf %73 : vector<8x16xf32> to vector<8x16xbf16>
    %cst_33 = arith.constant dense<0.000000e+00> : vector<8x16xf32>
    %91 = tpu.matmul %89, %90, %cst_33 {dimension_numbers = #tpu.dot_dimension_numbers<[1], [0], [0], [1], [0, 0, 1, 1], [], []>} : vector<8x8xbf16>, vector<8x16xbf16>, vector<8x16xf32> -> vector<8x16xf32>
    %92 = vector.extract_strided_slice %52 {offsets = [0, 16], sizes = [8, 16], strides = [1, 1]} : vector<8x64xf32> to vector<8x16xf32>
    %93 = vector.extract_strided_slice %92 {offsets = [0, 8], sizes = [8, 8], strides = [1, 1]} : vector<8x16xf32> to vector<8x8xf32>
    %cst_34 = arith.constant 0.000000e+00 : f32
    %94 = vector.broadcast %cst_34 : f32 to vector<8x8xf32>
    %95 = arith.subf %94, %93 : vector<8x8xf32>
    %96 = vector.extract_strided_slice %92 {offsets = [0, 0], sizes = [8, 8], strides = [1, 1]} : vector<8x16xf32> to vector<8x8xf32>
    %97 = tpu.concatenate %95, %96 in 1 : vector<8x8xf32>, vector<8x8xf32> -> vector<8x16xf32>
    %98 = arith.mulf %92, %32 : vector<8x16xf32>
    %99 = arith.mulf %97, %33 : vector<8x16xf32>
    %100 = arith.addf %98, %99 : vector<8x16xf32>
    %101 = vector.extract_strided_slice %53 {offsets = [0, 16], sizes = [8, 16], strides = [1, 1]} : vector<8x64xf32> to vector<8x16xf32>
    %102 = vector.extract_strided_slice %101 {offsets = [0, 8], sizes = [8, 8], strides = [1, 1]} : vector<8x16xf32> to vector<8x8xf32>
    %cst_35 = arith.constant 0.000000e+00 : f32
    %103 = vector.broadcast %cst_35 : f32 to vector<8x8xf32>
    %104 = arith.subf %103, %102 : vector<8x8xf32>
    %105 = vector.extract_strided_slice %101 {offsets = [0, 0], sizes = [8, 8], strides = [1, 1]} : vector<8x16xf32> to vector<8x8xf32>
    %106 = tpu.concatenate %104, %105 in 1 : vector<8x8xf32>, vector<8x8xf32> -> vector<8x16xf32>
    %107 = arith.mulf %101, %32 : vector<8x16xf32>
    %108 = arith.mulf %106, %33 : vector<8x16xf32>
    %109 = arith.addf %107, %108 : vector<8x16xf32>
    %110 = vector.extract_strided_slice %54 {offsets = [0, 16], sizes = [8, 16], strides = [1, 1]} : vector<8x64xf32> to vector<8x16xf32>
    %111 = arith.truncf %100 : vector<8x16xf32> to vector<8x16xbf16>
    %112 = arith.truncf %109 : vector<8x16xf32> to vector<8x16xbf16>
    %cst_36 = arith.constant dense<0.000000e+00> : vector<8x8xf32>
    %113 = tpu.matmul %111, %112, %cst_36 {dimension_numbers = #tpu.dot_dimension_numbers<[1], [1], [0], [0], [0, 0, 1, 0], [], []>} : vector<8x16xbf16>, vector<8x16xbf16>, vector<8x8xf32> -> vector<8x8xf32>
    %cst_37 = arith.constant 2.500000e-01 : f32
    %114 = vector.broadcast %cst_37 : f32 to vector<8x8xf32>
    %115 = arith.mulf %113, %114 : vector<8x8xf32>
    %116 = arith.addf %115, %23 : vector<8x8xf32>
    %cst_38 = arith.constant dense<0xFF800000> : vector<8xf32>
    %117 = vector.multi_reduction <maximumf>, %116, %cst_38 [1] : vector<8x8xf32> to vector<8xf32>
    %118 = vector.shape_cast %117 : vector<8xf32> to vector<8x1xf32>
    %119 = vector.broadcast %118 : vector<8x1xf32> to vector<8x8xf32>
    %120 = arith.subf %116, %119 : vector<8x8xf32>
    %121 = math.exp %120 : vector<8x8xf32>
    %cst_39 = arith.constant dense<0.000000e+00> : vector<8xf32>
    %122 = vector.multi_reduction <add>, %121, %cst_39 [1] : vector<8x8xf32> to vector<8xf32>
    %123 = vector.shape_cast %122 : vector<8xf32> to vector<8x1xf32>
    %124 = vector.broadcast %123 : vector<8x1xf32> to vector<8x8xf32>
    %125 = arith.divf %121, %124 : vector<8x8xf32>
    %126 = arith.truncf %125 : vector<8x8xf32> to vector<8x8xbf16>
    %127 = arith.truncf %110 : vector<8x16xf32> to vector<8x16xbf16>
    %cst_40 = arith.constant dense<0.000000e+00> : vector<8x16xf32>
    %128 = tpu.matmul %126, %127, %cst_40 {dimension_numbers = #tpu.dot_dimension_numbers<[1], [0], [0], [1], [0, 0, 1, 1], [], []>} : vector<8x8xbf16>, vector<8x16xbf16>, vector<8x16xf32> -> vector<8x16xf32>
    %129 = vector.extract_strided_slice %52 {offsets = [0, 32], sizes = [8, 16], strides = [1, 1]} : vector<8x64xf32> to vector<8x16xf32>
    %130 = vector.extract_strided_slice %129 {offsets = [0, 8], sizes = [8, 8], strides = [1, 1]} : vector<8x16xf32> to vector<8x8xf32>
    %cst_41 = arith.constant 0.000000e+00 : f32
    %131 = vector.broadcast %cst_41 : f32 to vector<8x8xf32>
    %132 = arith.subf %131, %130 : vector<8x8xf32>
    %133 = vector.extract_strided_slice %129 {offsets = [0, 0], sizes = [8, 8], strides = [1, 1]} : vector<8x16xf32> to vector<8x8xf32>
    %134 = tpu.concatenate %132, %133 in 1 : vector<8x8xf32>, vector<8x8xf32> -> vector<8x16xf32>
    %135 = arith.mulf %129, %32 : vector<8x16xf32>
    %136 = arith.mulf %134, %33 : vector<8x16xf32>
    %137 = arith.addf %135, %136 : vector<8x16xf32>
    %138 = vector.extract_strided_slice %53 {offsets = [0, 32], sizes = [8, 16], strides = [1, 1]} : vector<8x64xf32> to vector<8x16xf32>
    %139 = vector.extract_strided_slice %138 {offsets = [0, 8], sizes = [8, 8], strides = [1, 1]} : vector<8x16xf32> to vector<8x8xf32>
    %cst_42 = arith.constant 0.000000e+00 : f32
    %140 = vector.broadcast %cst_42 : f32 to vector<8x8xf32>
    %141 = arith.subf %140, %139 : vector<8x8xf32>
    %142 = vector.extract_strided_slice %138 {offsets = [0, 0], sizes = [8, 8], strides = [1, 1]} : vector<8x16xf32> to vector<8x8xf32>
    %143 = tpu.concatenate %141, %142 in 1 : vector<8x8xf32>, vector<8x8xf32> -> vector<8x16xf32>
    %144 = arith.mulf %138, %32 : vector<8x16xf32>
    %145 = arith.mulf %143, %33 : vector<8x16xf32>
    %146 = arith.addf %144, %145 : vector<8x16xf32>
    %147 = vector.extract_strided_slice %54 {offsets = [0, 32], sizes = [8, 16], strides = [1, 1]} : vector<8x64xf32> to vector<8x16xf32>
    %148 = arith.truncf %137 : vector<8x16xf32> to vector<8x16xbf16>
    %149 = arith.truncf %146 : vector<8x16xf32> to vector<8x16xbf16>
    %cst_43 = arith.constant dense<0.000000e+00> : vector<8x8xf32>
    %150 = tpu.matmul %148, %149, %cst_43 {dimension_numbers = #tpu.dot_dimension_numbers<[1], [1], [0], [0], [0, 0, 1, 0], [], []>} : vector<8x16xbf16>, vector<8x16xbf16>, vector<8x8xf32> -> vector<8x8xf32>
    %cst_44 = arith.constant 2.500000e-01 : f32
    %151 = vector.broadcast %cst_44 : f32 to vector<8x8xf32>
    %152 = arith.mulf %150, %151 : vector<8x8xf32>
    %153 = arith.addf %152, %23 : vector<8x8xf32>
    %cst_45 = arith.constant dense<0xFF800000> : vector<8xf32>
    %154 = vector.multi_reduction <maximumf>, %153, %cst_45 [1] : vector<8x8xf32> to vector<8xf32>
    %155 = vector.shape_cast %154 : vector<8xf32> to vector<8x1xf32>
    %156 = vector.broadcast %155 : vector<8x1xf32> to vector<8x8xf32>
    %157 = arith.subf %153, %156 : vector<8x8xf32>
    %158 = math.exp %157 : vector<8x8xf32>
    %cst_46 = arith.constant dense<0.000000e+00> : vector<8xf32>
    %159 = vector.multi_reduction <add>, %158, %cst_46 [1] : vector<8x8xf32> to vector<8xf32>
    %160 = vector.shape_cast %159 : vector<8xf32> to vector<8x1xf32>
    %161 = vector.broadcast %160 : vector<8x1xf32> to vector<8x8xf32>
    %162 = arith.divf %158, %161 : vector<8x8xf32>
    %163 = arith.truncf %162 : vector<8x8xf32> to vector<8x8xbf16>
    %164 = arith.truncf %147 : vector<8x16xf32> to vector<8x16xbf16>
    %cst_47 = arith.constant dense<0.000000e+00> : vector<8x16xf32>
    %165 = tpu.matmul %163, %164, %cst_47 {dimension_numbers = #tpu.dot_dimension_numbers<[1], [0], [0], [1], [0, 0, 1, 1], [], []>} : vector<8x8xbf16>, vector<8x16xbf16>, vector<8x16xf32> -> vector<8x16xf32>
    %166 = vector.extract_strided_slice %52 {offsets = [0, 48], sizes = [8, 16], strides = [1, 1]} : vector<8x64xf32> to vector<8x16xf32>
    %167 = vector.extract_strided_slice %166 {offsets = [0, 8], sizes = [8, 8], strides = [1, 1]} : vector<8x16xf32> to vector<8x8xf32>
    %cst_48 = arith.constant 0.000000e+00 : f32
    %168 = vector.broadcast %cst_48 : f32 to vector<8x8xf32>
    %169 = arith.subf %168, %167 : vector<8x8xf32>
    %170 = vector.extract_strided_slice %166 {offsets = [0, 0], sizes = [8, 8], strides = [1, 1]} : vector<8x16xf32> to vector<8x8xf32>
    %171 = tpu.concatenate %169, %170 in 1 : vector<8x8xf32>, vector<8x8xf32> -> vector<8x16xf32>
    %172 = arith.mulf %166, %32 : vector<8x16xf32>
    %173 = arith.mulf %171, %33 : vector<8x16xf32>
    %174 = arith.addf %172, %173 : vector<8x16xf32>
    %175 = vector.extract_strided_slice %53 {offsets = [0, 48], sizes = [8, 16], strides = [1, 1]} : vector<8x64xf32> to vector<8x16xf32>
    %176 = vector.extract_strided_slice %175 {offsets = [0, 8], sizes = [8, 8], strides = [1, 1]} : vector<8x16xf32> to vector<8x8xf32>
    %cst_49 = arith.constant 0.000000e+00 : f32
    %177 = vector.broadcast %cst_49 : f32 to vector<8x8xf32>
    %178 = arith.subf %177, %176 : vector<8x8xf32>
    %179 = vector.extract_strided_slice %175 {offsets = [0, 0], sizes = [8, 8], strides = [1, 1]} : vector<8x16xf32> to vector<8x8xf32>
    %180 = tpu.concatenate %178, %179 in 1 : vector<8x8xf32>, vector<8x8xf32> -> vector<8x16xf32>
    %181 = arith.mulf %175, %32 : vector<8x16xf32>
    %182 = arith.mulf %180, %33 : vector<8x16xf32>
    %183 = arith.addf %181, %182 : vector<8x16xf32>
    %184 = vector.extract_strided_slice %54 {offsets = [0, 48], sizes = [8, 16], strides = [1, 1]} : vector<8x64xf32> to vector<8x16xf32>
    %185 = arith.truncf %174 : vector<8x16xf32> to vector<8x16xbf16>
    %186 = arith.truncf %183 : vector<8x16xf32> to vector<8x16xbf16>
    %cst_50 = arith.constant dense<0.000000e+00> : vector<8x8xf32>
    %187 = tpu.matmul %185, %186, %cst_50 {dimension_numbers = #tpu.dot_dimension_numbers<[1], [1], [0], [0], [0, 0, 1, 0], [], []>} : vector<8x16xbf16>, vector<8x16xbf16>, vector<8x8xf32> -> vector<8x8xf32>
    %cst_51 = arith.constant 2.500000e-01 : f32
    %188 = vector.broadcast %cst_51 : f32 to vector<8x8xf32>
    %189 = arith.mulf %187, %188 : vector<8x8xf32>
    %190 = arith.addf %189, %23 : vector<8x8xf32>
    %cst_52 = arith.constant dense<0xFF800000> : vector<8xf32>
    %191 = vector.multi_reduction <maximumf>, %190, %cst_52 [1] : vector<8x8xf32> to vector<8xf32>
    %192 = vector.shape_cast %191 : vector<8xf32> to vector<8x1xf32>
    %193 = vector.broadcast %192 : vector<8x1xf32> to vector<8x8xf32>
    %194 = arith.subf %190, %193 : vector<8x8xf32>
    %195 = math.exp %194 : vector<8x8xf32>
    %cst_53 = arith.constant dense<0.000000e+00> : vector<8xf32>
    %196 = vector.multi_reduction <add>, %195, %cst_53 [1] : vector<8x8xf32> to vector<8xf32>
    %197 = vector.shape_cast %196 : vector<8xf32> to vector<8x1xf32>
    %198 = vector.broadcast %197 : vector<8x1xf32> to vector<8x8xf32>
    %199 = arith.divf %195, %198 : vector<8x8xf32>
    %200 = arith.truncf %199 : vector<8x8xf32> to vector<8x8xbf16>
    %201 = arith.truncf %184 : vector<8x16xf32> to vector<8x16xbf16>
    %cst_54 = arith.constant dense<0.000000e+00> : vector<8x16xf32>
    %202 = tpu.matmul %200, %201, %cst_54 {dimension_numbers = #tpu.dot_dimension_numbers<[1], [0], [0], [1], [0, 0, 1, 1], [], []>} : vector<8x8xbf16>, vector<8x16xbf16>, vector<8x16xf32> -> vector<8x16xf32>
    %203 = tpu.concatenate %91, %128, %165, %202 in 1 : vector<8x16xf32>, vector<8x16xf32>, vector<8x16xf32>, vector<8x16xf32> -> vector<8x64xf32>
    %204 = vector.extract_strided_slice %51 {offsets = [8, 0], sizes = [8, 64], strides = [1, 1]} : vector<16x192xf32> to vector<8x64xf32>
    %205 = vector.extract_strided_slice %51 {offsets = [8, 64], sizes = [8, 64], strides = [1, 1]} : vector<16x192xf32> to vector<8x64xf32>
    %206 = vector.extract_strided_slice %51 {offsets = [8, 128], sizes = [8, 64], strides = [1, 1]} : vector<16x192xf32> to vector<8x64xf32>
    %207 = vector.extract_strided_slice %204 {offsets = [0, 0], sizes = [8, 16], strides = [1, 1]} : vector<8x64xf32> to vector<8x16xf32>
    %208 = vector.extract_strided_slice %207 {offsets = [0, 8], sizes = [8, 8], strides = [1, 1]} : vector<8x16xf32> to vector<8x8xf32>
    %cst_55 = arith.constant 0.000000e+00 : f32
    %209 = vector.broadcast %cst_55 : f32 to vector<8x8xf32>
    %210 = arith.subf %209, %208 : vector<8x8xf32>
    %211 = vector.extract_strided_slice %207 {offsets = [0, 0], sizes = [8, 8], strides = [1, 1]} : vector<8x16xf32> to vector<8x8xf32>
    %212 = tpu.concatenate %210, %211 in 1 : vector<8x8xf32>, vector<8x8xf32> -> vector<8x16xf32>
    %213 = arith.mulf %207, %32 : vector<8x16xf32>
    %214 = arith.mulf %212, %33 : vector<8x16xf32>
    %215 = arith.addf %213, %214 : vector<8x16xf32>
    %216 = vector.extract_strided_slice %205 {offsets = [0, 0], sizes = [8, 16], strides = [1, 1]} : vector<8x64xf32> to vector<8x16xf32>
    %217 = vector.extract_strided_slice %216 {offsets = [0, 8], sizes = [8, 8], strides = [1, 1]} : vector<8x16xf32> to vector<8x8xf32>
    %cst_56 = arith.constant 0.000000e+00 : f32
    %218 = vector.broadcast %cst_56 : f32 to vector<8x8xf32>
    %219 = arith.subf %218, %217 : vector<8x8xf32>
    %220 = vector.extract_strided_slice %216 {offsets = [0, 0], sizes = [8, 8], strides = [1, 1]} : vector<8x16xf32> to vector<8x8xf32>
    %221 = tpu.concatenate %219, %220 in 1 : vector<8x8xf32>, vector<8x8xf32> -> vector<8x16xf32>
    %222 = arith.mulf %216, %32 : vector<8x16xf32>
    %223 = arith.mulf %221, %33 : vector<8x16xf32>
    %224 = arith.addf %222, %223 : vector<8x16xf32>
    %225 = vector.extract_strided_slice %206 {offsets = [0, 0], sizes = [8, 16], strides = [1, 1]} : vector<8x64xf32> to vector<8x16xf32>
    %226 = arith.truncf %215 : vector<8x16xf32> to vector<8x16xbf16>
    %227 = arith.truncf %224 : vector<8x16xf32> to vector<8x16xbf16>
    %cst_57 = arith.constant dense<0.000000e+00> : vector<8x8xf32>
    %228 = tpu.matmul %226, %227, %cst_57 {dimension_numbers = #tpu.dot_dimension_numbers<[1], [1], [0], [0], [0, 0, 1, 0], [], []>} : vector<8x16xbf16>, vector<8x16xbf16>, vector<8x8xf32> -> vector<8x8xf32>
    %cst_58 = arith.constant 2.500000e-01 : f32
    %229 = vector.broadcast %cst_58 : f32 to vector<8x8xf32>
    %230 = arith.mulf %228, %229 : vector<8x8xf32>
    %231 = arith.addf %230, %31 : vector<8x8xf32>
    %cst_59 = arith.constant dense<0xFF800000> : vector<8xf32>
    %232 = vector.multi_reduction <maximumf>, %231, %cst_59 [1] : vector<8x8xf32> to vector<8xf32>
    %233 = vector.shape_cast %232 : vector<8xf32> to vector<8x1xf32>
    %234 = vector.broadcast %233 : vector<8x1xf32> to vector<8x8xf32>
    %235 = arith.subf %231, %234 : vector<8x8xf32>
    %236 = math.exp %235 : vector<8x8xf32>
    %cst_60 = arith.constant dense<0.000000e+00> : vector<8xf32>
    %237 = vector.multi_reduction <add>, %236, %cst_60 [1] : vector<8x8xf32> to vector<8xf32>
    %238 = vector.shape_cast %237 : vector<8xf32> to vector<8x1xf32>
    %239 = vector.broadcast %238 : vector<8x1xf32> to vector<8x8xf32>
    %240 = arith.divf %236, %239 : vector<8x8xf32>
    %241 = arith.truncf %240 : vector<8x8xf32> to vector<8x8xbf16>
    %242 = arith.truncf %225 : vector<8x16xf32> to vector<8x16xbf16>
    %cst_61 = arith.constant dense<0.000000e+00> : vector<8x16xf32>
    %243 = tpu.matmul %241, %242, %cst_61 {dimension_numbers = #tpu.dot_dimension_numbers<[1], [0], [0], [1], [0, 0, 1, 1], [], []>} : vector<8x8xbf16>, vector<8x16xbf16>, vector<8x16xf32> -> vector<8x16xf32>
    %244 = vector.extract_strided_slice %204 {offsets = [0, 16], sizes = [8, 16], strides = [1, 1]} : vector<8x64xf32> to vector<8x16xf32>
    %245 = vector.extract_strided_slice %244 {offsets = [0, 8], sizes = [8, 8], strides = [1, 1]} : vector<8x16xf32> to vector<8x8xf32>
    %cst_62 = arith.constant 0.000000e+00 : f32
    %246 = vector.broadcast %cst_62 : f32 to vector<8x8xf32>
    %247 = arith.subf %246, %245 : vector<8x8xf32>
    %248 = vector.extract_strided_slice %244 {offsets = [0, 0], sizes = [8, 8], strides = [1, 1]} : vector<8x16xf32> to vector<8x8xf32>
    %249 = tpu.concatenate %247, %248 in 1 : vector<8x8xf32>, vector<8x8xf32> -> vector<8x16xf32>
    %250 = arith.mulf %244, %32 : vector<8x16xf32>
    %251 = arith.mulf %249, %33 : vector<8x16xf32>
    %252 = arith.addf %250, %251 : vector<8x16xf32>
    %253 = vector.extract_strided_slice %205 {offsets = [0, 16], sizes = [8, 16], strides = [1, 1]} : vector<8x64xf32> to vector<8x16xf32>
    %254 = vector.extract_strided_slice %253 {offsets = [0, 8], sizes = [8, 8], strides = [1, 1]} : vector<8x16xf32> to vector<8x8xf32>
    %cst_63 = arith.constant 0.000000e+00 : f32
    %255 = vector.broadcast %cst_63 : f32 to vector<8x8xf32>
    %256 = arith.subf %255, %254 : vector<8x8xf32>
    %257 = vector.extract_strided_slice %253 {offsets = [0, 0], sizes = [8, 8], strides = [1, 1]} : vector<8x16xf32> to vector<8x8xf32>
    %258 = tpu.concatenate %256, %257 in 1 : vector<8x8xf32>, vector<8x8xf32> -> vector<8x16xf32>
    %259 = arith.mulf %253, %32 : vector<8x16xf32>
    %260 = arith.mulf %258, %33 : vector<8x16xf32>
    %261 = arith.addf %259, %260 : vector<8x16xf32>
    %262 = vector.extract_strided_slice %206 {offsets = [0, 16], sizes = [8, 16], strides = [1, 1]} : vector<8x64xf32> to vector<8x16xf32>
    %263 = arith.truncf %252 : vector<8x16xf32> to vector<8x16xbf16>
    %264 = arith.truncf %261 : vector<8x16xf32> to vector<8x16xbf16>
    %cst_64 = arith.constant dense<0.000000e+00> : vector<8x8xf32>
    %265 = tpu.matmul %263, %264, %cst_64 {dimension_numbers = #tpu.dot_dimension_numbers<[1], [1], [0], [0], [0, 0, 1, 0], [], []>} : vector<8x16xbf16>, vector<8x16xbf16>, vector<8x8xf32> -> vector<8x8xf32>
    %cst_65 = arith.constant 2.500000e-01 : f32
    %266 = vector.broadcast %cst_65 : f32 to vector<8x8xf32>
    %267 = arith.mulf %265, %266 : vector<8x8xf32>
    %268 = arith.addf %267, %31 : vector<8x8xf32>
    %cst_66 = arith.constant dense<0xFF800000> : vector<8xf32>
    %269 = vector.multi_reduction <maximumf>, %268, %cst_66 [1] : vector<8x8xf32> to vector<8xf32>
    %270 = vector.shape_cast %269 : vector<8xf32> to vector<8x1xf32>
    %271 = vector.broadcast %270 : vector<8x1xf32> to vector<8x8xf32>
    %272 = arith.subf %268, %271 : vector<8x8xf32>
    %273 = math.exp %272 : vector<8x8xf32>
    %cst_67 = arith.constant dense<0.000000e+00> : vector<8xf32>
    %274 = vector.multi_reduction <add>, %273, %cst_67 [1] : vector<8x8xf32> to vector<8xf32>
    %275 = vector.shape_cast %274 : vector<8xf32> to vector<8x1xf32>
    %276 = vector.broadcast %275 : vector<8x1xf32> to vector<8x8xf32>
    %277 = arith.divf %273, %276 : vector<8x8xf32>
    %278 = arith.truncf %277 : vector<8x8xf32> to vector<8x8xbf16>
    %279 = arith.truncf %262 : vector<8x16xf32> to vector<8x16xbf16>
    %cst_68 = arith.constant dense<0.000000e+00> : vector<8x16xf32>
    %280 = tpu.matmul %278, %279, %cst_68 {dimension_numbers = #tpu.dot_dimension_numbers<[1], [0], [0], [1], [0, 0, 1, 1], [], []>} : vector<8x8xbf16>, vector<8x16xbf16>, vector<8x16xf32> -> vector<8x16xf32>
    %281 = vector.extract_strided_slice %204 {offsets = [0, 32], sizes = [8, 16], strides = [1, 1]} : vector<8x64xf32> to vector<8x16xf32>
    %282 = vector.extract_strided_slice %281 {offsets = [0, 8], sizes = [8, 8], strides = [1, 1]} : vector<8x16xf32> to vector<8x8xf32>
    %cst_69 = arith.constant 0.000000e+00 : f32
    %283 = vector.broadcast %cst_69 : f32 to vector<8x8xf32>
    %284 = arith.subf %283, %282 : vector<8x8xf32>
    %285 = vector.extract_strided_slice %281 {offsets = [0, 0], sizes = [8, 8], strides = [1, 1]} : vector<8x16xf32> to vector<8x8xf32>
    %286 = tpu.concatenate %284, %285 in 1 : vector<8x8xf32>, vector<8x8xf32> -> vector<8x16xf32>
    %287 = arith.mulf %281, %32 : vector<8x16xf32>
    %288 = arith.mulf %286, %33 : vector<8x16xf32>
    %289 = arith.addf %287, %288 : vector<8x16xf32>
    %290 = vector.extract_strided_slice %205 {offsets = [0, 32], sizes = [8, 16], strides = [1, 1]} : vector<8x64xf32> to vector<8x16xf32>
    %291 = vector.extract_strided_slice %290 {offsets = [0, 8], sizes = [8, 8], strides = [1, 1]} : vector<8x16xf32> to vector<8x8xf32>
    %cst_70 = arith.constant 0.000000e+00 : f32
    %292 = vector.broadcast %cst_70 : f32 to vector<8x8xf32>
    %293 = arith.subf %292, %291 : vector<8x8xf32>
    %294 = vector.extract_strided_slice %290 {offsets = [0, 0], sizes = [8, 8], strides = [1, 1]} : vector<8x16xf32> to vector<8x8xf32>
    %295 = tpu.concatenate %293, %294 in 1 : vector<8x8xf32>, vector<8x8xf32> -> vector<8x16xf32>
    %296 = arith.mulf %290, %32 : vector<8x16xf32>
    %297 = arith.mulf %295, %33 : vector<8x16xf32>
    %298 = arith.addf %296, %297 : vector<8x16xf32>
    %299 = vector.extract_strided_slice %206 {offsets = [0, 32], sizes = [8, 16], strides = [1, 1]} : vector<8x64xf32> to vector<8x16xf32>
    %300 = arith.truncf %289 : vector<8x16xf32> to vector<8x16xbf16>
    %301 = arith.truncf %298 : vector<8x16xf32> to vector<8x16xbf16>
    %cst_71 = arith.constant dense<0.000000e+00> : vector<8x8xf32>
    %302 = tpu.matmul %300, %301, %cst_71 {dimension_numbers = #tpu.dot_dimension_numbers<[1], [1], [0], [0], [0, 0, 1, 0], [], []>} : vector<8x16xbf16>, vector<8x16xbf16>, vector<8x8xf32> -> vector<8x8xf32>
    %cst_72 = arith.constant 2.500000e-01 : f32
    %303 = vector.broadcast %cst_72 : f32 to vector<8x8xf32>
    %304 = arith.mulf %302, %303 : vector<8x8xf32>
    %305 = arith.addf %304, %31 : vector<8x8xf32>
    %cst_73 = arith.constant dense<0xFF800000> : vector<8xf32>
    %306 = vector.multi_reduction <maximumf>, %305, %cst_73 [1] : vector<8x8xf32> to vector<8xf32>
    %307 = vector.shape_cast %306 : vector<8xf32> to vector<8x1xf32>
    %308 = vector.broadcast %307 : vector<8x1xf32> to vector<8x8xf32>
    %309 = arith.subf %305, %308 : vector<8x8xf32>
    %310 = math.exp %309 : vector<8x8xf32>
    %cst_74 = arith.constant dense<0.000000e+00> : vector<8xf32>
    %311 = vector.multi_reduction <add>, %310, %cst_74 [1] : vector<8x8xf32> to vector<8xf32>
    %312 = vector.shape_cast %311 : vector<8xf32> to vector<8x1xf32>
    %313 = vector.broadcast %312 : vector<8x1xf32> to vector<8x8xf32>
    %314 = arith.divf %310, %313 : vector<8x8xf32>
    %315 = arith.truncf %314 : vector<8x8xf32> to vector<8x8xbf16>
    %316 = arith.truncf %299 : vector<8x16xf32> to vector<8x16xbf16>
    %cst_75 = arith.constant dense<0.000000e+00> : vector<8x16xf32>
    %317 = tpu.matmul %315, %316, %cst_75 {dimension_numbers = #tpu.dot_dimension_numbers<[1], [0], [0], [1], [0, 0, 1, 1], [], []>} : vector<8x8xbf16>, vector<8x16xbf16>, vector<8x16xf32> -> vector<8x16xf32>
    %318 = vector.extract_strided_slice %204 {offsets = [0, 48], sizes = [8, 16], strides = [1, 1]} : vector<8x64xf32> to vector<8x16xf32>
    %319 = vector.extract_strided_slice %318 {offsets = [0, 8], sizes = [8, 8], strides = [1, 1]} : vector<8x16xf32> to vector<8x8xf32>
    %cst_76 = arith.constant 0.000000e+00 : f32
    %320 = vector.broadcast %cst_76 : f32 to vector<8x8xf32>
    %321 = arith.subf %320, %319 : vector<8x8xf32>
    %322 = vector.extract_strided_slice %318 {offsets = [0, 0], sizes = [8, 8], strides = [1, 1]} : vector<8x16xf32> to vector<8x8xf32>
    %323 = tpu.concatenate %321, %322 in 1 : vector<8x8xf32>, vector<8x8xf32> -> vector<8x16xf32>
    %324 = arith.mulf %318, %32 : vector<8x16xf32>
    %325 = arith.mulf %323, %33 : vector<8x16xf32>
    %326 = arith.addf %324, %325 : vector<8x16xf32>
    %327 = vector.extract_strided_slice %205 {offsets = [0, 48], sizes = [8, 16], strides = [1, 1]} : vector<8x64xf32> to vector<8x16xf32>
    %328 = vector.extract_strided_slice %327 {offsets = [0, 8], sizes = [8, 8], strides = [1, 1]} : vector<8x16xf32> to vector<8x8xf32>
    %cst_77 = arith.constant 0.000000e+00 : f32
    %329 = vector.broadcast %cst_77 : f32 to vector<8x8xf32>
    %330 = arith.subf %329, %328 : vector<8x8xf32>
    %331 = vector.extract_strided_slice %327 {offsets = [0, 0], sizes = [8, 8], strides = [1, 1]} : vector<8x16xf32> to vector<8x8xf32>
    %332 = tpu.concatenate %330, %331 in 1 : vector<8x8xf32>, vector<8x8xf32> -> vector<8x16xf32>
    %333 = arith.mulf %327, %32 : vector<8x16xf32>
    %334 = arith.mulf %332, %33 : vector<8x16xf32>
    %335 = arith.addf %333, %334 : vector<8x16xf32>
    %336 = vector.extract_strided_slice %206 {offsets = [0, 48], sizes = [8, 16], strides = [1, 1]} : vector<8x64xf32> to vector<8x16xf32>
    %337 = arith.truncf %326 : vector<8x16xf32> to vector<8x16xbf16>
    %338 = arith.truncf %335 : vector<8x16xf32> to vector<8x16xbf16>
    %cst_78 = arith.constant dense<0.000000e+00> : vector<8x8xf32>
    %339 = tpu.matmul %337, %338, %cst_78 {dimension_numbers = #tpu.dot_dimension_numbers<[1], [1], [0], [0], [0, 0, 1, 0], [], []>} : vector<8x16xbf16>, vector<8x16xbf16>, vector<8x8xf32> -> vector<8x8xf32>
    %cst_79 = arith.constant 2.500000e-01 : f32
    %340 = vector.broadcast %cst_79 : f32 to vector<8x8xf32>
    %341 = arith.mulf %339, %340 : vector<8x8xf32>
    %342 = arith.addf %341, %31 : vector<8x8xf32>
    %cst_80 = arith.constant dense<0xFF800000> : vector<8xf32>
    %343 = vector.multi_reduction <maximumf>, %342, %cst_80 [1] : vector<8x8xf32> to vector<8xf32>
    %344 = vector.shape_cast %343 : vector<8xf32> to vector<8x1xf32>
    %345 = vector.broadcast %344 : vector<8x1xf32> to vector<8x8xf32>
    %346 = arith.subf %342, %345 : vector<8x8xf32>
    %347 = math.exp %346 : vector<8x8xf32>
    %cst_81 = arith.constant dense<0.000000e+00> : vector<8xf32>
    %348 = vector.multi_reduction <add>, %347, %cst_81 [1] : vector<8x8xf32> to vector<8xf32>
    %349 = vector.shape_cast %348 : vector<8xf32> to vector<8x1xf32>
    %350 = vector.broadcast %349 : vector<8x1xf32> to vector<8x8xf32>
    %351 = arith.divf %347, %350 : vector<8x8xf32>
    %352 = arith.truncf %351 : vector<8x8xf32> to vector<8x8xbf16>
    %353 = arith.truncf %336 : vector<8x16xf32> to vector<8x16xbf16>
    %cst_82 = arith.constant dense<0.000000e+00> : vector<8x16xf32>
    %354 = tpu.matmul %352, %353, %cst_82 {dimension_numbers = #tpu.dot_dimension_numbers<[1], [0], [0], [1], [0, 0, 1, 1], [], []>} : vector<8x8xbf16>, vector<8x16xbf16>, vector<8x16xf32> -> vector<8x16xf32>
    %355 = tpu.concatenate %243, %280, %317, %354 in 1 : vector<8x16xf32>, vector<8x16xf32>, vector<8x16xf32>, vector<8x16xf32> -> vector<8x64xf32>
    %356 = tpu.concatenate %203, %355 in 0 : vector<8x64xf32>, vector<8x64xf32> -> vector<16x64xf32>
    %357 = arith.truncf %356 : vector<16x64xf32> to vector<16x64xbf16>
    %c0_83 = arith.constant 0 : index
    %c0_84 = arith.constant 0 : index
    %c0_85 = arith.constant 0 : index
    %358 = vector.load %arg6[%c0_83, %c0_84, %c0_85] : memref<2x64x64xbf16, #tpu.memory_space<vmem>>, vector<1x64x64xbf16>
    %359 = vector.shape_cast %358 : vector<1x64x64xbf16> to vector<64x64xbf16>
    %cst_86 = arith.constant dense<0.000000e+00> : vector<16x64xf32>
    %360 = tpu.matmul %357, %359, %cst_86 {dimension_numbers = #tpu.dot_dimension_numbers<[1], [0], [0], [1], [0, 0, 1, 1], [], []>} : vector<16x64xbf16>, vector<64x64xbf16>, vector<16x64xf32> -> vector<16x64xf32>
    %361 = arith.addf %8, %360 : vector<16x64xf32>
    %c0_87 = arith.constant 0 : index
    %c0_88 = arith.constant 0 : index
    %c0_89 = arith.constant 0 : index
    %362 = vector.load %arg4[%c0_87, %c0_88, %c0_89] : memref<2x1x64xf32, #tpu.memory_space<vmem>>, vector<1x1x64xf32>
    %363 = vector.shape_cast %362 : vector<1x1x64xf32> to vector<1x64xf32>
    %364 = arith.mulf %361, %361 : vector<16x64xf32>
    %cst_90 = arith.constant dense<0.000000e+00> : vector<16xf32>
    %365 = vector.multi_reduction <add>, %364, %cst_90 [1] : vector<16x64xf32> to vector<16xf32>
    %366 = vector.shape_cast %365 : vector<16xf32> to vector<16x1xf32>
    %cst_91 = arith.constant 6.400000e+01 : f32
    %367 = vector.broadcast %cst_91 : f32 to vector<16x1xf32>
    %368 = arith.divf %366, %367 : vector<16x1xf32>
    %cst_92 = arith.constant 9.99999974E-6 : f32
    %369 = vector.broadcast %cst_92 : f32 to vector<16x1xf32>
    %370 = arith.addf %368, %369 : vector<16x1xf32>
    %371 = math.rsqrt %370 : vector<16x1xf32>
    %372 = vector.broadcast %371 : vector<16x1xf32> to vector<16x64xf32>
    %373 = arith.mulf %361, %372 : vector<16x64xf32>
    %374 = vector.broadcast %363 : vector<1x64xf32> to vector<16x64xf32>
    %375 = arith.mulf %373, %374 : vector<16x64xf32>
    %376 = arith.truncf %375 : vector<16x64xf32> to vector<16x64xbf16>
    %c0_93 = arith.constant 0 : index
    %c0_94 = arith.constant 0 : index
    %c0_95 = arith.constant 0 : index
    %377 = vector.load %arg7[%c0_93, %c0_94, %c0_95] : memref<2x64x256xbf16, #tpu.memory_space<vmem>>, vector<1x64x256xbf16>
    %378 = vector.shape_cast %377 : vector<1x64x256xbf16> to vector<64x256xbf16>
    %cst_96 = arith.constant dense<0.000000e+00> : vector<16x256xf32>
    %379 = tpu.matmul %376, %378, %cst_96 {dimension_numbers = #tpu.dot_dimension_numbers<[1], [0], [0], [1], [0, 0, 1, 1], [], []>} : vector<16x64xbf16>, vector<64x256xbf16>, vector<16x256xf32> -> vector<16x256xf32>
    %380 = vector.extract_strided_slice %379 {offsets = [0, 0], sizes = [16, 128], strides = [1, 1]} : vector<16x256xf32> to vector<16x128xf32>
    %381 = vector.extract_strided_slice %379 {offsets = [0, 128], sizes = [16, 128], strides = [1, 1]} : vector<16x256xf32> to vector<16x128xf32>
    %382 = arith.negf %380 : vector<16x128xf32>
    %383 = math.exp %382 : vector<16x128xf32>
    %cst_97 = arith.constant 1.000000e+00 : f32
    %384 = vector.broadcast %cst_97 : f32 to vector<16x128xf32>
    %385 = arith.addf %384, %383 : vector<16x128xf32>
    %386 = arith.divf %384, %385 : vector<16x128xf32>
    %387 = arith.mulf %380, %386 : vector<16x128xf32>
    %388 = arith.mulf %387, %381 : vector<16x128xf32>
    %389 = arith.truncf %388 : vector<16x128xf32> to vector<16x128xbf16>
    %c0_98 = arith.constant 0 : index
    %c0_99 = arith.constant 0 : index
    %c0_100 = arith.constant 0 : index
    %390 = vector.load %arg8[%c0_98, %c0_99, %c0_100] : memref<2x128x64xbf16, #tpu.memory_space<vmem>>, vector<1x128x64xbf16>
    %391 = vector.shape_cast %390 : vector<1x128x64xbf16> to vector<128x64xbf16>
    %cst_101 = arith.constant dense<0.000000e+00> : vector<16x64xf32>
    %392 = tpu.matmul %389, %391, %cst_101 {dimension_numbers = #tpu.dot_dimension_numbers<[1], [0], [0], [1], [0, 0, 1, 1], [], []>} : vector<16x128xbf16>, vector<128x64xbf16>, vector<16x64xf32> -> vector<16x64xf32>
    %393 = arith.addf %361, %392 : vector<16x64xf32>
    %c1 = arith.constant 1 : index
    %c0_102 = arith.constant 0 : index
    %c0_103 = arith.constant 0 : index
    %394 = vector.load %arg3[%c1, %c0_102, %c0_103] : memref<2x1x64xf32, #tpu.memory_space<vmem>>, vector<1x1x64xf32>
    %395 = vector.shape_cast %394 : vector<1x1x64xf32> to vector<1x64xf32>
    %396 = arith.mulf %393, %393 : vector<16x64xf32>
    %cst_104 = arith.constant dense<0.000000e+00> : vector<16xf32>
    %397 = vector.multi_reduction <add>, %396, %cst_104 [1] : vector<16x64xf32> to vector<16xf32>
    %398 = vector.shape_cast %397 : vector<16xf32> to vector<16x1xf32>
    %cst_105 = arith.constant 6.400000e+01 : f32
    %399 = vector.broadcast %cst_105 : f32 to vector<16x1xf32>
    %400 = arith.divf %398, %399 : vector<16x1xf32>
    %cst_106 = arith.constant 9.99999974E-6 : f32
    %401 = vector.broadcast %cst_106 : f32 to vector<16x1xf32>
    %402 = arith.addf %400, %401 : vector<16x1xf32>
    %403 = math.rsqrt %402 : vector<16x1xf32>
    %404 = vector.broadcast %403 : vector<16x1xf32> to vector<16x64xf32>
    %405 = arith.mulf %393, %404 : vector<16x64xf32>
    %406 = vector.broadcast %395 : vector<1x64xf32> to vector<16x64xf32>
    %407 = arith.mulf %405, %406 : vector<16x64xf32>
    %408 = arith.truncf %407 : vector<16x64xf32> to vector<16x64xbf16>
    %c1_107 = arith.constant 1 : index
    %c0_108 = arith.constant 0 : index
    %c0_109 = arith.constant 0 : index
    %409 = vector.load %arg5[%c1_107, %c0_108, %c0_109] : memref<2x64x192xbf16, #tpu.memory_space<vmem>>, vector<1x64x192xbf16>
    %410 = vector.shape_cast %409 : vector<1x64x192xbf16> to vector<64x192xbf16>
    %cst_110 = arith.constant dense<0.000000e+00> : vector<16x192xf32>
    %411 = tpu.matmul %408, %410, %cst_110 {dimension_numbers = #tpu.dot_dimension_numbers<[1], [0], [0], [1], [0, 0, 1, 1], [], []>} : vector<16x64xbf16>, vector<64x192xbf16>, vector<16x192xf32> -> vector<16x192xf32>
    %412 = vector.extract_strided_slice %411 {offsets = [0, 0], sizes = [8, 64], strides = [1, 1]} : vector<16x192xf32> to vector<8x64xf32>
    %413 = vector.extract_strided_slice %411 {offsets = [0, 64], sizes = [8, 64], strides = [1, 1]} : vector<16x192xf32> to vector<8x64xf32>
    %414 = vector.extract_strided_slice %411 {offsets = [0, 128], sizes = [8, 64], strides = [1, 1]} : vector<16x192xf32> to vector<8x64xf32>
    %415 = vector.extract_strided_slice %412 {offsets = [0, 0], sizes = [8, 16], strides = [1, 1]} : vector<8x64xf32> to vector<8x16xf32>
    %416 = vector.extract_strided_slice %415 {offsets = [0, 8], sizes = [8, 8], strides = [1, 1]} : vector<8x16xf32> to vector<8x8xf32>
    %cst_111 = arith.constant 0.000000e+00 : f32
    %417 = vector.broadcast %cst_111 : f32 to vector<8x8xf32>
    %418 = arith.subf %417, %416 : vector<8x8xf32>
    %419 = vector.extract_strided_slice %415 {offsets = [0, 0], sizes = [8, 8], strides = [1, 1]} : vector<8x16xf32> to vector<8x8xf32>
    %420 = tpu.concatenate %418, %419 in 1 : vector<8x8xf32>, vector<8x8xf32> -> vector<8x16xf32>
    %421 = arith.mulf %415, %32 : vector<8x16xf32>
    %422 = arith.mulf %420, %33 : vector<8x16xf32>
    %423 = arith.addf %421, %422 : vector<8x16xf32>
    %424 = vector.extract_strided_slice %413 {offsets = [0, 0], sizes = [8, 16], strides = [1, 1]} : vector<8x64xf32> to vector<8x16xf32>
    %425 = vector.extract_strided_slice %424 {offsets = [0, 8], sizes = [8, 8], strides = [1, 1]} : vector<8x16xf32> to vector<8x8xf32>
    %cst_112 = arith.constant 0.000000e+00 : f32
    %426 = vector.broadcast %cst_112 : f32 to vector<8x8xf32>
    %427 = arith.subf %426, %425 : vector<8x8xf32>
    %428 = vector.extract_strided_slice %424 {offsets = [0, 0], sizes = [8, 8], strides = [1, 1]} : vector<8x16xf32> to vector<8x8xf32>
    %429 = tpu.concatenate %427, %428 in 1 : vector<8x8xf32>, vector<8x8xf32> -> vector<8x16xf32>
    %430 = arith.mulf %424, %32 : vector<8x16xf32>
    %431 = arith.mulf %429, %33 : vector<8x16xf32>
    %432 = arith.addf %430, %431 : vector<8x16xf32>
    %433 = vector.extract_strided_slice %414 {offsets = [0, 0], sizes = [8, 16], strides = [1, 1]} : vector<8x64xf32> to vector<8x16xf32>
    %434 = arith.truncf %423 : vector<8x16xf32> to vector<8x16xbf16>
    %435 = arith.truncf %432 : vector<8x16xf32> to vector<8x16xbf16>
    %cst_113 = arith.constant dense<0.000000e+00> : vector<8x8xf32>
    %436 = tpu.matmul %434, %435, %cst_113 {dimension_numbers = #tpu.dot_dimension_numbers<[1], [1], [0], [0], [0, 0, 1, 0], [], []>} : vector<8x16xbf16>, vector<8x16xbf16>, vector<8x8xf32> -> vector<8x8xf32>
    %cst_114 = arith.constant 2.500000e-01 : f32
    %437 = vector.broadcast %cst_114 : f32 to vector<8x8xf32>
    %438 = arith.mulf %436, %437 : vector<8x8xf32>
    %439 = arith.addf %438, %23 : vector<8x8xf32>
    %cst_115 = arith.constant dense<0xFF800000> : vector<8xf32>
    %440 = vector.multi_reduction <maximumf>, %439, %cst_115 [1] : vector<8x8xf32> to vector<8xf32>
    %441 = vector.shape_cast %440 : vector<8xf32> to vector<8x1xf32>
    %442 = vector.broadcast %441 : vector<8x1xf32> to vector<8x8xf32>
    %443 = arith.subf %439, %442 : vector<8x8xf32>
    %444 = math.exp %443 : vector<8x8xf32>
    %cst_116 = arith.constant dense<0.000000e+00> : vector<8xf32>
    %445 = vector.multi_reduction <add>, %444, %cst_116 [1] : vector<8x8xf32> to vector<8xf32>
    %446 = vector.shape_cast %445 : vector<8xf32> to vector<8x1xf32>
    %447 = vector.broadcast %446 : vector<8x1xf32> to vector<8x8xf32>
    %448 = arith.divf %444, %447 : vector<8x8xf32>
    %449 = arith.truncf %448 : vector<8x8xf32> to vector<8x8xbf16>
    %450 = arith.truncf %433 : vector<8x16xf32> to vector<8x16xbf16>
    %cst_117 = arith.constant dense<0.000000e+00> : vector<8x16xf32>
    %451 = tpu.matmul %449, %450, %cst_117 {dimension_numbers = #tpu.dot_dimension_numbers<[1], [0], [0], [1], [0, 0, 1, 1], [], []>} : vector<8x8xbf16>, vector<8x16xbf16>, vector<8x16xf32> -> vector<8x16xf32>
    %452 = vector.extract_strided_slice %412 {offsets = [0, 16], sizes = [8, 16], strides = [1, 1]} : vector<8x64xf32> to vector<8x16xf32>
    %453 = vector.extract_strided_slice %452 {offsets = [0, 8], sizes = [8, 8], strides = [1, 1]} : vector<8x16xf32> to vector<8x8xf32>
    %cst_118 = arith.constant 0.000000e+00 : f32
    %454 = vector.broadcast %cst_118 : f32 to vector<8x8xf32>
    %455 = arith.subf %454, %453 : vector<8x8xf32>
    %456 = vector.extract_strided_slice %452 {offsets = [0, 0], sizes = [8, 8], strides = [1, 1]} : vector<8x16xf32> to vector<8x8xf32>
    %457 = tpu.concatenate %455, %456 in 1 : vector<8x8xf32>, vector<8x8xf32> -> vector<8x16xf32>
    %458 = arith.mulf %452, %32 : vector<8x16xf32>
    %459 = arith.mulf %457, %33 : vector<8x16xf32>
    %460 = arith.addf %458, %459 : vector<8x16xf32>
    %461 = vector.extract_strided_slice %413 {offsets = [0, 16], sizes = [8, 16], strides = [1, 1]} : vector<8x64xf32> to vector<8x16xf32>
    %462 = vector.extract_strided_slice %461 {offsets = [0, 8], sizes = [8, 8], strides = [1, 1]} : vector<8x16xf32> to vector<8x8xf32>
    %cst_119 = arith.constant 0.000000e+00 : f32
    %463 = vector.broadcast %cst_119 : f32 to vector<8x8xf32>
    %464 = arith.subf %463, %462 : vector<8x8xf32>
    %465 = vector.extract_strided_slice %461 {offsets = [0, 0], sizes = [8, 8], strides = [1, 1]} : vector<8x16xf32> to vector<8x8xf32>
    %466 = tpu.concatenate %464, %465 in 1 : vector<8x8xf32>, vector<8x8xf32> -> vector<8x16xf32>
    %467 = arith.mulf %461, %32 : vector<8x16xf32>
    %468 = arith.mulf %466, %33 : vector<8x16xf32>
    %469 = arith.addf %467, %468 : vector<8x16xf32>
    %470 = vector.extract_strided_slice %414 {offsets = [0, 16], sizes = [8, 16], strides = [1, 1]} : vector<8x64xf32> to vector<8x16xf32>
    %471 = arith.truncf %460 : vector<8x16xf32> to vector<8x16xbf16>
    %472 = arith.truncf %469 : vector<8x16xf32> to vector<8x16xbf16>
    %cst_120 = arith.constant dense<0.000000e+00> : vector<8x8xf32>
    %473 = tpu.matmul %471, %472, %cst_120 {dimension_numbers = #tpu.dot_dimension_numbers<[1], [1], [0], [0], [0, 0, 1, 0], [], []>} : vector<8x16xbf16>, vector<8x16xbf16>, vector<8x8xf32> -> vector<8x8xf32>
    %cst_121 = arith.constant 2.500000e-01 : f32
    %474 = vector.broadcast %cst_121 : f32 to vector<8x8xf32>
    %475 = arith.mulf %473, %474 : vector<8x8xf32>
    %476 = arith.addf %475, %23 : vector<8x8xf32>
    %cst_122 = arith.constant dense<0xFF800000> : vector<8xf32>
    %477 = vector.multi_reduction <maximumf>, %476, %cst_122 [1] : vector<8x8xf32> to vector<8xf32>
    %478 = vector.shape_cast %477 : vector<8xf32> to vector<8x1xf32>
    %479 = vector.broadcast %478 : vector<8x1xf32> to vector<8x8xf32>
    %480 = arith.subf %476, %479 : vector<8x8xf32>
    %481 = math.exp %480 : vector<8x8xf32>
    %cst_123 = arith.constant dense<0.000000e+00> : vector<8xf32>
    %482 = vector.multi_reduction <add>, %481, %cst_123 [1] : vector<8x8xf32> to vector<8xf32>
    %483 = vector.shape_cast %482 : vector<8xf32> to vector<8x1xf32>
    %484 = vector.broadcast %483 : vector<8x1xf32> to vector<8x8xf32>
    %485 = arith.divf %481, %484 : vector<8x8xf32>
    %486 = arith.truncf %485 : vector<8x8xf32> to vector<8x8xbf16>
    %487 = arith.truncf %470 : vector<8x16xf32> to vector<8x16xbf16>
    %cst_124 = arith.constant dense<0.000000e+00> : vector<8x16xf32>
    %488 = tpu.matmul %486, %487, %cst_124 {dimension_numbers = #tpu.dot_dimension_numbers<[1], [0], [0], [1], [0, 0, 1, 1], [], []>} : vector<8x8xbf16>, vector<8x16xbf16>, vector<8x16xf32> -> vector<8x16xf32>
    %489 = vector.extract_strided_slice %412 {offsets = [0, 32], sizes = [8, 16], strides = [1, 1]} : vector<8x64xf32> to vector<8x16xf32>
    %490 = vector.extract_strided_slice %489 {offsets = [0, 8], sizes = [8, 8], strides = [1, 1]} : vector<8x16xf32> to vector<8x8xf32>
    %cst_125 = arith.constant 0.000000e+00 : f32
    %491 = vector.broadcast %cst_125 : f32 to vector<8x8xf32>
    %492 = arith.subf %491, %490 : vector<8x8xf32>
    %493 = vector.extract_strided_slice %489 {offsets = [0, 0], sizes = [8, 8], strides = [1, 1]} : vector<8x16xf32> to vector<8x8xf32>
    %494 = tpu.concatenate %492, %493 in 1 : vector<8x8xf32>, vector<8x8xf32> -> vector<8x16xf32>
    %495 = arith.mulf %489, %32 : vector<8x16xf32>
    %496 = arith.mulf %494, %33 : vector<8x16xf32>
    %497 = arith.addf %495, %496 : vector<8x16xf32>
    %498 = vector.extract_strided_slice %413 {offsets = [0, 32], sizes = [8, 16], strides = [1, 1]} : vector<8x64xf32> to vector<8x16xf32>
    %499 = vector.extract_strided_slice %498 {offsets = [0, 8], sizes = [8, 8], strides = [1, 1]} : vector<8x16xf32> to vector<8x8xf32>
    %cst_126 = arith.constant 0.000000e+00 : f32
    %500 = vector.broadcast %cst_126 : f32 to vector<8x8xf32>
    %501 = arith.subf %500, %499 : vector<8x8xf32>
    %502 = vector.extract_strided_slice %498 {offsets = [0, 0], sizes = [8, 8], strides = [1, 1]} : vector<8x16xf32> to vector<8x8xf32>
    %503 = tpu.concatenate %501, %502 in 1 : vector<8x8xf32>, vector<8x8xf32> -> vector<8x16xf32>
    %504 = arith.mulf %498, %32 : vector<8x16xf32>
    %505 = arith.mulf %503, %33 : vector<8x16xf32>
    %506 = arith.addf %504, %505 : vector<8x16xf32>
    %507 = vector.extract_strided_slice %414 {offsets = [0, 32], sizes = [8, 16], strides = [1, 1]} : vector<8x64xf32> to vector<8x16xf32>
    %508 = arith.truncf %497 : vector<8x16xf32> to vector<8x16xbf16>
    %509 = arith.truncf %506 : vector<8x16xf32> to vector<8x16xbf16>
    %cst_127 = arith.constant dense<0.000000e+00> : vector<8x8xf32>
    %510 = tpu.matmul %508, %509, %cst_127 {dimension_numbers = #tpu.dot_dimension_numbers<[1], [1], [0], [0], [0, 0, 1, 0], [], []>} : vector<8x16xbf16>, vector<8x16xbf16>, vector<8x8xf32> -> vector<8x8xf32>
    %cst_128 = arith.constant 2.500000e-01 : f32
    %511 = vector.broadcast %cst_128 : f32 to vector<8x8xf32>
    %512 = arith.mulf %510, %511 : vector<8x8xf32>
    %513 = arith.addf %512, %23 : vector<8x8xf32>
    %cst_129 = arith.constant dense<0xFF800000> : vector<8xf32>
    %514 = vector.multi_reduction <maximumf>, %513, %cst_129 [1] : vector<8x8xf32> to vector<8xf32>
    %515 = vector.shape_cast %514 : vector<8xf32> to vector<8x1xf32>
    %516 = vector.broadcast %515 : vector<8x1xf32> to vector<8x8xf32>
    %517 = arith.subf %513, %516 : vector<8x8xf32>
    %518 = math.exp %517 : vector<8x8xf32>
    %cst_130 = arith.constant dense<0.000000e+00> : vector<8xf32>
    %519 = vector.multi_reduction <add>, %518, %cst_130 [1] : vector<8x8xf32> to vector<8xf32>
    %520 = vector.shape_cast %519 : vector<8xf32> to vector<8x1xf32>
    %521 = vector.broadcast %520 : vector<8x1xf32> to vector<8x8xf32>
    %522 = arith.divf %518, %521 : vector<8x8xf32>
    %523 = arith.truncf %522 : vector<8x8xf32> to vector<8x8xbf16>
    %524 = arith.truncf %507 : vector<8x16xf32> to vector<8x16xbf16>
    %cst_131 = arith.constant dense<0.000000e+00> : vector<8x16xf32>
    %525 = tpu.matmul %523, %524, %cst_131 {dimension_numbers = #tpu.dot_dimension_numbers<[1], [0], [0], [1], [0, 0, 1, 1], [], []>} : vector<8x8xbf16>, vector<8x16xbf16>, vector<8x16xf32> -> vector<8x16xf32>
    %526 = vector.extract_strided_slice %412 {offsets = [0, 48], sizes = [8, 16], strides = [1, 1]} : vector<8x64xf32> to vector<8x16xf32>
    %527 = vector.extract_strided_slice %526 {offsets = [0, 8], sizes = [8, 8], strides = [1, 1]} : vector<8x16xf32> to vector<8x8xf32>
    %cst_132 = arith.constant 0.000000e+00 : f32
    %528 = vector.broadcast %cst_132 : f32 to vector<8x8xf32>
    %529 = arith.subf %528, %527 : vector<8x8xf32>
    %530 = vector.extract_strided_slice %526 {offsets = [0, 0], sizes = [8, 8], strides = [1, 1]} : vector<8x16xf32> to vector<8x8xf32>
    %531 = tpu.concatenate %529, %530 in 1 : vector<8x8xf32>, vector<8x8xf32> -> vector<8x16xf32>
    %532 = arith.mulf %526, %32 : vector<8x16xf32>
    %533 = arith.mulf %531, %33 : vector<8x16xf32>
    %534 = arith.addf %532, %533 : vector<8x16xf32>
    %535 = vector.extract_strided_slice %413 {offsets = [0, 48], sizes = [8, 16], strides = [1, 1]} : vector<8x64xf32> to vector<8x16xf32>
    %536 = vector.extract_strided_slice %535 {offsets = [0, 8], sizes = [8, 8], strides = [1, 1]} : vector<8x16xf32> to vector<8x8xf32>
    %cst_133 = arith.constant 0.000000e+00 : f32
    %537 = vector.broadcast %cst_133 : f32 to vector<8x8xf32>
    %538 = arith.subf %537, %536 : vector<8x8xf32>
    %539 = vector.extract_strided_slice %535 {offsets = [0, 0], sizes = [8, 8], strides = [1, 1]} : vector<8x16xf32> to vector<8x8xf32>
    %540 = tpu.concatenate %538, %539 in 1 : vector<8x8xf32>, vector<8x8xf32> -> vector<8x16xf32>
    %541 = arith.mulf %535, %32 : vector<8x16xf32>
    %542 = arith.mulf %540, %33 : vector<8x16xf32>
    %543 = arith.addf %541, %542 : vector<8x16xf32>
    %544 = vector.extract_strided_slice %414 {offsets = [0, 48], sizes = [8, 16], strides = [1, 1]} : vector<8x64xf32> to vector<8x16xf32>
    %545 = arith.truncf %534 : vector<8x16xf32> to vector<8x16xbf16>
    %546 = arith.truncf %543 : vector<8x16xf32> to vector<8x16xbf16>
    %cst_134 = arith.constant dense<0.000000e+00> : vector<8x8xf32>
    %547 = tpu.matmul %545, %546, %cst_134 {dimension_numbers = #tpu.dot_dimension_numbers<[1], [1], [0], [0], [0, 0, 1, 0], [], []>} : vector<8x16xbf16>, vector<8x16xbf16>, vector<8x8xf32> -> vector<8x8xf32>
    %cst_135 = arith.constant 2.500000e-01 : f32
    %548 = vector.broadcast %cst_135 : f32 to vector<8x8xf32>
    %549 = arith.mulf %547, %548 : vector<8x8xf32>
    %550 = arith.addf %549, %23 : vector<8x8xf32>
    %cst_136 = arith.constant dense<0xFF800000> : vector<8xf32>
    %551 = vector.multi_reduction <maximumf>, %550, %cst_136 [1] : vector<8x8xf32> to vector<8xf32>
    %552 = vector.shape_cast %551 : vector<8xf32> to vector<8x1xf32>
    %553 = vector.broadcast %552 : vector<8x1xf32> to vector<8x8xf32>
    %554 = arith.subf %550, %553 : vector<8x8xf32>
    %555 = math.exp %554 : vector<8x8xf32>
    %cst_137 = arith.constant dense<0.000000e+00> : vector<8xf32>
    %556 = vector.multi_reduction <add>, %555, %cst_137 [1] : vector<8x8xf32> to vector<8xf32>
    %557 = vector.shape_cast %556 : vector<8xf32> to vector<8x1xf32>
    %558 = vector.broadcast %557 : vector<8x1xf32> to vector<8x8xf32>
    %559 = arith.divf %555, %558 : vector<8x8xf32>
    %560 = arith.truncf %559 : vector<8x8xf32> to vector<8x8xbf16>
    %561 = arith.truncf %544 : vector<8x16xf32> to vector<8x16xbf16>
    %cst_138 = arith.constant dense<0.000000e+00> : vector<8x16xf32>
    %562 = tpu.matmul %560, %561, %cst_138 {dimension_numbers = #tpu.dot_dimension_numbers<[1], [0], [0], [1], [0, 0, 1, 1], [], []>} : vector<8x8xbf16>, vector<8x16xbf16>, vector<8x16xf32> -> vector<8x16xf32>
    %563 = tpu.concatenate %451, %488, %525, %562 in 1 : vector<8x16xf32>, vector<8x16xf32>, vector<8x16xf32>, vector<8x16xf32> -> vector<8x64xf32>
    %564 = vector.extract_strided_slice %411 {offsets = [8, 0], sizes = [8, 64], strides = [1, 1]} : vector<16x192xf32> to vector<8x64xf32>
    %565 = vector.extract_strided_slice %411 {offsets = [8, 64], sizes = [8, 64], strides = [1, 1]} : vector<16x192xf32> to vector<8x64xf32>
    %566 = vector.extract_strided_slice %411 {offsets = [8, 128], sizes = [8, 64], strides = [1, 1]} : vector<16x192xf32> to vector<8x64xf32>
    %567 = vector.extract_strided_slice %564 {offsets = [0, 0], sizes = [8, 16], strides = [1, 1]} : vector<8x64xf32> to vector<8x16xf32>
    %568 = vector.extract_strided_slice %567 {offsets = [0, 8], sizes = [8, 8], strides = [1, 1]} : vector<8x16xf32> to vector<8x8xf32>
    %cst_139 = arith.constant 0.000000e+00 : f32
    %569 = vector.broadcast %cst_139 : f32 to vector<8x8xf32>
    %570 = arith.subf %569, %568 : vector<8x8xf32>
    %571 = vector.extract_strided_slice %567 {offsets = [0, 0], sizes = [8, 8], strides = [1, 1]} : vector<8x16xf32> to vector<8x8xf32>
    %572 = tpu.concatenate %570, %571 in 1 : vector<8x8xf32>, vector<8x8xf32> -> vector<8x16xf32>
    %573 = arith.mulf %567, %32 : vector<8x16xf32>
    %574 = arith.mulf %572, %33 : vector<8x16xf32>
    %575 = arith.addf %573, %574 : vector<8x16xf32>
    %576 = vector.extract_strided_slice %565 {offsets = [0, 0], sizes = [8, 16], strides = [1, 1]} : vector<8x64xf32> to vector<8x16xf32>
    %577 = vector.extract_strided_slice %576 {offsets = [0, 8], sizes = [8, 8], strides = [1, 1]} : vector<8x16xf32> to vector<8x8xf32>
    %cst_140 = arith.constant 0.000000e+00 : f32
    %578 = vector.broadcast %cst_140 : f32 to vector<8x8xf32>
    %579 = arith.subf %578, %577 : vector<8x8xf32>
    %580 = vector.extract_strided_slice %576 {offsets = [0, 0], sizes = [8, 8], strides = [1, 1]} : vector<8x16xf32> to vector<8x8xf32>
    %581 = tpu.concatenate %579, %580 in 1 : vector<8x8xf32>, vector<8x8xf32> -> vector<8x16xf32>
    %582 = arith.mulf %576, %32 : vector<8x16xf32>
    %583 = arith.mulf %581, %33 : vector<8x16xf32>
    %584 = arith.addf %582, %583 : vector<8x16xf32>
    %585 = vector.extract_strided_slice %566 {offsets = [0, 0], sizes = [8, 16], strides = [1, 1]} : vector<8x64xf32> to vector<8x16xf32>
    %586 = arith.truncf %575 : vector<8x16xf32> to vector<8x16xbf16>
    %587 = arith.truncf %584 : vector<8x16xf32> to vector<8x16xbf16>
    %cst_141 = arith.constant dense<0.000000e+00> : vector<8x8xf32>
    %588 = tpu.matmul %586, %587, %cst_141 {dimension_numbers = #tpu.dot_dimension_numbers<[1], [1], [0], [0], [0, 0, 1, 0], [], []>} : vector<8x16xbf16>, vector<8x16xbf16>, vector<8x8xf32> -> vector<8x8xf32>
    %cst_142 = arith.constant 2.500000e-01 : f32
    %589 = vector.broadcast %cst_142 : f32 to vector<8x8xf32>
    %590 = arith.mulf %588, %589 : vector<8x8xf32>
    %591 = arith.addf %590, %31 : vector<8x8xf32>
    %cst_143 = arith.constant dense<0xFF800000> : vector<8xf32>
    %592 = vector.multi_reduction <maximumf>, %591, %cst_143 [1] : vector<8x8xf32> to vector<8xf32>
    %593 = vector.shape_cast %592 : vector<8xf32> to vector<8x1xf32>
    %594 = vector.broadcast %593 : vector<8x1xf32> to vector<8x8xf32>
    %595 = arith.subf %591, %594 : vector<8x8xf32>
    %596 = math.exp %595 : vector<8x8xf32>
    %cst_144 = arith.constant dense<0.000000e+00> : vector<8xf32>
    %597 = vector.multi_reduction <add>, %596, %cst_144 [1] : vector<8x8xf32> to vector<8xf32>
    %598 = vector.shape_cast %597 : vector<8xf32> to vector<8x1xf32>
    %599 = vector.broadcast %598 : vector<8x1xf32> to vector<8x8xf32>
    %600 = arith.divf %596, %599 : vector<8x8xf32>
    %601 = arith.truncf %600 : vector<8x8xf32> to vector<8x8xbf16>
    %602 = arith.truncf %585 : vector<8x16xf32> to vector<8x16xbf16>
    %cst_145 = arith.constant dense<0.000000e+00> : vector<8x16xf32>
    %603 = tpu.matmul %601, %602, %cst_145 {dimension_numbers = #tpu.dot_dimension_numbers<[1], [0], [0], [1], [0, 0, 1, 1], [], []>} : vector<8x8xbf16>, vector<8x16xbf16>, vector<8x16xf32> -> vector<8x16xf32>
    %604 = vector.extract_strided_slice %564 {offsets = [0, 16], sizes = [8, 16], strides = [1, 1]} : vector<8x64xf32> to vector<8x16xf32>
    %605 = vector.extract_strided_slice %604 {offsets = [0, 8], sizes = [8, 8], strides = [1, 1]} : vector<8x16xf32> to vector<8x8xf32>
    %cst_146 = arith.constant 0.000000e+00 : f32
    %606 = vector.broadcast %cst_146 : f32 to vector<8x8xf32>
    %607 = arith.subf %606, %605 : vector<8x8xf32>
    %608 = vector.extract_strided_slice %604 {offsets = [0, 0], sizes = [8, 8], strides = [1, 1]} : vector<8x16xf32> to vector<8x8xf32>
    %609 = tpu.concatenate %607, %608 in 1 : vector<8x8xf32>, vector<8x8xf32> -> vector<8x16xf32>
    %610 = arith.mulf %604, %32 : vector<8x16xf32>
    %611 = arith.mulf %609, %33 : vector<8x16xf32>
    %612 = arith.addf %610, %611 : vector<8x16xf32>
    %613 = vector.extract_strided_slice %565 {offsets = [0, 16], sizes = [8, 16], strides = [1, 1]} : vector<8x64xf32> to vector<8x16xf32>
    %614 = vector.extract_strided_slice %613 {offsets = [0, 8], sizes = [8, 8], strides = [1, 1]} : vector<8x16xf32> to vector<8x8xf32>
    %cst_147 = arith.constant 0.000000e+00 : f32
    %615 = vector.broadcast %cst_147 : f32 to vector<8x8xf32>
    %616 = arith.subf %615, %614 : vector<8x8xf32>
    %617 = vector.extract_strided_slice %613 {offsets = [0, 0], sizes = [8, 8], strides = [1, 1]} : vector<8x16xf32> to vector<8x8xf32>
    %618 = tpu.concatenate %616, %617 in 1 : vector<8x8xf32>, vector<8x8xf32> -> vector<8x16xf32>
    %619 = arith.mulf %613, %32 : vector<8x16xf32>
    %620 = arith.mulf %618, %33 : vector<8x16xf32>
    %621 = arith.addf %619, %620 : vector<8x16xf32>
    %622 = vector.extract_strided_slice %566 {offsets = [0, 16], sizes = [8, 16], strides = [1, 1]} : vector<8x64xf32> to vector<8x16xf32>
    %623 = arith.truncf %612 : vector<8x16xf32> to vector<8x16xbf16>
    %624 = arith.truncf %621 : vector<8x16xf32> to vector<8x16xbf16>
    %cst_148 = arith.constant dense<0.000000e+00> : vector<8x8xf32>
    %625 = tpu.matmul %623, %624, %cst_148 {dimension_numbers = #tpu.dot_dimension_numbers<[1], [1], [0], [0], [0, 0, 1, 0], [], []>} : vector<8x16xbf16>, vector<8x16xbf16>, vector<8x8xf32> -> vector<8x8xf32>
    %cst_149 = arith.constant 2.500000e-01 : f32
    %626 = vector.broadcast %cst_149 : f32 to vector<8x8xf32>
    %627 = arith.mulf %625, %626 : vector<8x8xf32>
    %628 = arith.addf %627, %31 : vector<8x8xf32>
    %cst_150 = arith.constant dense<0xFF800000> : vector<8xf32>
    %629 = vector.multi_reduction <maximumf>, %628, %cst_150 [1] : vector<8x8xf32> to vector<8xf32>
    %630 = vector.shape_cast %629 : vector<8xf32> to vector<8x1xf32>
    %631 = vector.broadcast %630 : vector<8x1xf32> to vector<8x8xf32>
    %632 = arith.subf %628, %631 : vector<8x8xf32>
    %633 = math.exp %632 : vector<8x8xf32>
    %cst_151 = arith.constant dense<0.000000e+00> : vector<8xf32>
    %634 = vector.multi_reduction <add>, %633, %cst_151 [1] : vector<8x8xf32> to vector<8xf32>
    %635 = vector.shape_cast %634 : vector<8xf32> to vector<8x1xf32>
    %636 = vector.broadcast %635 : vector<8x1xf32> to vector<8x8xf32>
    %637 = arith.divf %633, %636 : vector<8x8xf32>
    %638 = arith.truncf %637 : vector<8x8xf32> to vector<8x8xbf16>
    %639 = arith.truncf %622 : vector<8x16xf32> to vector<8x16xbf16>
    %cst_152 = arith.constant dense<0.000000e+00> : vector<8x16xf32>
    %640 = tpu.matmul %638, %639, %cst_152 {dimension_numbers = #tpu.dot_dimension_numbers<[1], [0], [0], [1], [0, 0, 1, 1], [], []>} : vector<8x8xbf16>, vector<8x16xbf16>, vector<8x16xf32> -> vector<8x16xf32>
    %641 = vector.extract_strided_slice %564 {offsets = [0, 32], sizes = [8, 16], strides = [1, 1]} : vector<8x64xf32> to vector<8x16xf32>
    %642 = vector.extract_strided_slice %641 {offsets = [0, 8], sizes = [8, 8], strides = [1, 1]} : vector<8x16xf32> to vector<8x8xf32>
    %cst_153 = arith.constant 0.000000e+00 : f32
    %643 = vector.broadcast %cst_153 : f32 to vector<8x8xf32>
    %644 = arith.subf %643, %642 : vector<8x8xf32>
    %645 = vector.extract_strided_slice %641 {offsets = [0, 0], sizes = [8, 8], strides = [1, 1]} : vector<8x16xf32> to vector<8x8xf32>
    %646 = tpu.concatenate %644, %645 in 1 : vector<8x8xf32>, vector<8x8xf32> -> vector<8x16xf32>
    %647 = arith.mulf %641, %32 : vector<8x16xf32>
    %648 = arith.mulf %646, %33 : vector<8x16xf32>
    %649 = arith.addf %647, %648 : vector<8x16xf32>
    %650 = vector.extract_strided_slice %565 {offsets = [0, 32], sizes = [8, 16], strides = [1, 1]} : vector<8x64xf32> to vector<8x16xf32>
    %651 = vector.extract_strided_slice %650 {offsets = [0, 8], sizes = [8, 8], strides = [1, 1]} : vector<8x16xf32> to vector<8x8xf32>
    %cst_154 = arith.constant 0.000000e+00 : f32
    %652 = vector.broadcast %cst_154 : f32 to vector<8x8xf32>
    %653 = arith.subf %652, %651 : vector<8x8xf32>
    %654 = vector.extract_strided_slice %650 {offsets = [0, 0], sizes = [8, 8], strides = [1, 1]} : vector<8x16xf32> to vector<8x8xf32>
    %655 = tpu.concatenate %653, %654 in 1 : vector<8x8xf32>, vector<8x8xf32> -> vector<8x16xf32>
    %656 = arith.mulf %650, %32 : vector<8x16xf32>
    %657 = arith.mulf %655, %33 : vector<8x16xf32>
    %658 = arith.addf %656, %657 : vector<8x16xf32>
    %659 = vector.extract_strided_slice %566 {offsets = [0, 32], sizes = [8, 16], strides = [1, 1]} : vector<8x64xf32> to vector<8x16xf32>
    %660 = arith.truncf %649 : vector<8x16xf32> to vector<8x16xbf16>
    %661 = arith.truncf %658 : vector<8x16xf32> to vector<8x16xbf16>
    %cst_155 = arith.constant dense<0.000000e+00> : vector<8x8xf32>
    %662 = tpu.matmul %660, %661, %cst_155 {dimension_numbers = #tpu.dot_dimension_numbers<[1], [1], [0], [0], [0, 0, 1, 0], [], []>} : vector<8x16xbf16>, vector<8x16xbf16>, vector<8x8xf32> -> vector<8x8xf32>
    %cst_156 = arith.constant 2.500000e-01 : f32
    %663 = vector.broadcast %cst_156 : f32 to vector<8x8xf32>
    %664 = arith.mulf %662, %663 : vector<8x8xf32>
    %665 = arith.addf %664, %31 : vector<8x8xf32>
    %cst_157 = arith.constant dense<0xFF800000> : vector<8xf32>
    %666 = vector.multi_reduction <maximumf>, %665, %cst_157 [1] : vector<8x8xf32> to vector<8xf32>
    %667 = vector.shape_cast %666 : vector<8xf32> to vector<8x1xf32>
    %668 = vector.broadcast %667 : vector<8x1xf32> to vector<8x8xf32>
    %669 = arith.subf %665, %668 : vector<8x8xf32>
    %670 = math.exp %669 : vector<8x8xf32>
    %cst_158 = arith.constant dense<0.000000e+00> : vector<8xf32>
    %671 = vector.multi_reduction <add>, %670, %cst_158 [1] : vector<8x8xf32> to vector<8xf32>
    %672 = vector.shape_cast %671 : vector<8xf32> to vector<8x1xf32>
    %673 = vector.broadcast %672 : vector<8x1xf32> to vector<8x8xf32>
    %674 = arith.divf %670, %673 : vector<8x8xf32>
    %675 = arith.truncf %674 : vector<8x8xf32> to vector<8x8xbf16>
    %676 = arith.truncf %659 : vector<8x16xf32> to vector<8x16xbf16>
    %cst_159 = arith.constant dense<0.000000e+00> : vector<8x16xf32>
    %677 = tpu.matmul %675, %676, %cst_159 {dimension_numbers = #tpu.dot_dimension_numbers<[1], [0], [0], [1], [0, 0, 1, 1], [], []>} : vector<8x8xbf16>, vector<8x16xbf16>, vector<8x16xf32> -> vector<8x16xf32>
    %678 = vector.extract_strided_slice %564 {offsets = [0, 48], sizes = [8, 16], strides = [1, 1]} : vector<8x64xf32> to vector<8x16xf32>
    %679 = vector.extract_strided_slice %678 {offsets = [0, 8], sizes = [8, 8], strides = [1, 1]} : vector<8x16xf32> to vector<8x8xf32>
    %cst_160 = arith.constant 0.000000e+00 : f32
    %680 = vector.broadcast %cst_160 : f32 to vector<8x8xf32>
    %681 = arith.subf %680, %679 : vector<8x8xf32>
    %682 = vector.extract_strided_slice %678 {offsets = [0, 0], sizes = [8, 8], strides = [1, 1]} : vector<8x16xf32> to vector<8x8xf32>
    %683 = tpu.concatenate %681, %682 in 1 : vector<8x8xf32>, vector<8x8xf32> -> vector<8x16xf32>
    %684 = arith.mulf %678, %32 : vector<8x16xf32>
    %685 = arith.mulf %683, %33 : vector<8x16xf32>
    %686 = arith.addf %684, %685 : vector<8x16xf32>
    %687 = vector.extract_strided_slice %565 {offsets = [0, 48], sizes = [8, 16], strides = [1, 1]} : vector<8x64xf32> to vector<8x16xf32>
    %688 = vector.extract_strided_slice %687 {offsets = [0, 8], sizes = [8, 8], strides = [1, 1]} : vector<8x16xf32> to vector<8x8xf32>
    %cst_161 = arith.constant 0.000000e+00 : f32
    %689 = vector.broadcast %cst_161 : f32 to vector<8x8xf32>
    %690 = arith.subf %689, %688 : vector<8x8xf32>
    %691 = vector.extract_strided_slice %687 {offsets = [0, 0], sizes = [8, 8], strides = [1, 1]} : vector<8x16xf32> to vector<8x8xf32>
    %692 = tpu.concatenate %690, %691 in 1 : vector<8x8xf32>, vector<8x8xf32> -> vector<8x16xf32>
    %693 = arith.mulf %687, %32 : vector<8x16xf32>
    %694 = arith.mulf %692, %33 : vector<8x16xf32>
    %695 = arith.addf %693, %694 : vector<8x16xf32>
    %696 = vector.extract_strided_slice %566 {offsets = [0, 48], sizes = [8, 16], strides = [1, 1]} : vector<8x64xf32> to vector<8x16xf32>
    %697 = arith.truncf %686 : vector<8x16xf32> to vector<8x16xbf16>
    %698 = arith.truncf %695 : vector<8x16xf32> to vector<8x16xbf16>
    %cst_162 = arith.constant dense<0.000000e+00> : vector<8x8xf32>
    %699 = tpu.matmul %697, %698, %cst_162 {dimension_numbers = #tpu.dot_dimension_numbers<[1], [1], [0], [0], [0, 0, 1, 0], [], []>} : vector<8x16xbf16>, vector<8x16xbf16>, vector<8x8xf32> -> vector<8x8xf32>
    %cst_163 = arith.constant 2.500000e-01 : f32
    %700 = vector.broadcast %cst_163 : f32 to vector<8x8xf32>
    %701 = arith.mulf %699, %700 : vector<8x8xf32>
    %702 = arith.addf %701, %31 : vector<8x8xf32>
    %cst_164 = arith.constant dense<0xFF800000> : vector<8xf32>
    %703 = vector.multi_reduction <maximumf>, %702, %cst_164 [1] : vector<8x8xf32> to vector<8xf32>
    %704 = vector.shape_cast %703 : vector<8xf32> to vector<8x1xf32>
    %705 = vector.broadcast %704 : vector<8x1xf32> to vector<8x8xf32>
    %706 = arith.subf %702, %705 : vector<8x8xf32>
    %707 = math.exp %706 : vector<8x8xf32>
    %cst_165 = arith.constant dense<0.000000e+00> : vector<8xf32>
    %708 = vector.multi_reduction <add>, %707, %cst_165 [1] : vector<8x8xf32> to vector<8xf32>
    %709 = vector.shape_cast %708 : vector<8xf32> to vector<8x1xf32>
    %710 = vector.broadcast %709 : vector<8x1xf32> to vector<8x8xf32>
    %711 = arith.divf %707, %710 : vector<8x8xf32>
    %712 = arith.truncf %711 : vector<8x8xf32> to vector<8x8xbf16>
    %713 = arith.truncf %696 : vector<8x16xf32> to vector<8x16xbf16>
    %cst_166 = arith.constant dense<0.000000e+00> : vector<8x16xf32>
    %714 = tpu.matmul %712, %713, %cst_166 {dimension_numbers = #tpu.dot_dimension_numbers<[1], [0], [0], [1], [0, 0, 1, 1], [], []>} : vector<8x8xbf16>, vector<8x16xbf16>, vector<8x16xf32> -> vector<8x16xf32>
    %715 = tpu.concatenate %603, %640, %677, %714 in 1 : vector<8x16xf32>, vector<8x16xf32>, vector<8x16xf32>, vector<8x16xf32> -> vector<8x64xf32>
    %716 = tpu.concatenate %563, %715 in 0 : vector<8x64xf32>, vector<8x64xf32> -> vector<16x64xf32>
    %717 = arith.truncf %716 : vector<16x64xf32> to vector<16x64xbf16>
    %c1_167 = arith.constant 1 : index
    %c0_168 = arith.constant 0 : index
    %c0_169 = arith.constant 0 : index
    %718 = vector.load %arg6[%c1_167, %c0_168, %c0_169] : memref<2x64x64xbf16, #tpu.memory_space<vmem>>, vector<1x64x64xbf16>
    %719 = vector.shape_cast %718 : vector<1x64x64xbf16> to vector<64x64xbf16>
    %cst_170 = arith.constant dense<0.000000e+00> : vector<16x64xf32>
    %720 = tpu.matmul %717, %719, %cst_170 {dimension_numbers = #tpu.dot_dimension_numbers<[1], [0], [0], [1], [0, 0, 1, 1], [], []>} : vector<16x64xbf16>, vector<64x64xbf16>, vector<16x64xf32> -> vector<16x64xf32>
    %721 = arith.addf %393, %720 : vector<16x64xf32>
    %c1_171 = arith.constant 1 : index
    %c0_172 = arith.constant 0 : index
    %c0_173 = arith.constant 0 : index
    %722 = vector.load %arg4[%c1_171, %c0_172, %c0_173] : memref<2x1x64xf32, #tpu.memory_space<vmem>>, vector<1x1x64xf32>
    %723 = vector.shape_cast %722 : vector<1x1x64xf32> to vector<1x64xf32>
    %724 = arith.mulf %721, %721 : vector<16x64xf32>
    %cst_174 = arith.constant dense<0.000000e+00> : vector<16xf32>
    %725 = vector.multi_reduction <add>, %724, %cst_174 [1] : vector<16x64xf32> to vector<16xf32>
    %726 = vector.shape_cast %725 : vector<16xf32> to vector<16x1xf32>
    %cst_175 = arith.constant 6.400000e+01 : f32
    %727 = vector.broadcast %cst_175 : f32 to vector<16x1xf32>
    %728 = arith.divf %726, %727 : vector<16x1xf32>
    %cst_176 = arith.constant 9.99999974E-6 : f32
    %729 = vector.broadcast %cst_176 : f32 to vector<16x1xf32>
    %730 = arith.addf %728, %729 : vector<16x1xf32>
    %731 = math.rsqrt %730 : vector<16x1xf32>
    %732 = vector.broadcast %731 : vector<16x1xf32> to vector<16x64xf32>
    %733 = arith.mulf %721, %732 : vector<16x64xf32>
    %734 = vector.broadcast %723 : vector<1x64xf32> to vector<16x64xf32>
    %735 = arith.mulf %733, %734 : vector<16x64xf32>
    %736 = arith.truncf %735 : vector<16x64xf32> to vector<16x64xbf16>
    %c1_177 = arith.constant 1 : index
    %c0_178 = arith.constant 0 : index
    %c0_179 = arith.constant 0 : index
    %737 = vector.load %arg7[%c1_177, %c0_178, %c0_179] : memref<2x64x256xbf16, #tpu.memory_space<vmem>>, vector<1x64x256xbf16>
    %738 = vector.shape_cast %737 : vector<1x64x256xbf16> to vector<64x256xbf16>
    %cst_180 = arith.constant dense<0.000000e+00> : vector<16x256xf32>
    %739 = tpu.matmul %736, %738, %cst_180 {dimension_numbers = #tpu.dot_dimension_numbers<[1], [0], [0], [1], [0, 0, 1, 1], [], []>} : vector<16x64xbf16>, vector<64x256xbf16>, vector<16x256xf32> -> vector<16x256xf32>
    %740 = vector.extract_strided_slice %739 {offsets = [0, 0], sizes = [16, 128], strides = [1, 1]} : vector<16x256xf32> to vector<16x128xf32>
    %741 = vector.extract_strided_slice %739 {offsets = [0, 128], sizes = [16, 128], strides = [1, 1]} : vector<16x256xf32> to vector<16x128xf32>
    %742 = arith.negf %740 : vector<16x128xf32>
    %743 = math.exp %742 : vector<16x128xf32>
    %cst_181 = arith.constant 1.000000e+00 : f32
    %744 = vector.broadcast %cst_181 : f32 to vector<16x128xf32>
    %745 = arith.addf %744, %743 : vector<16x128xf32>
    %746 = arith.divf %744, %745 : vector<16x128xf32>
    %747 = arith.mulf %740, %746 : vector<16x128xf32>
    %748 = arith.mulf %747, %741 : vector<16x128xf32>
    %749 = arith.truncf %748 : vector<16x128xf32> to vector<16x128xbf16>
    %c1_182 = arith.constant 1 : index
    %c0_183 = arith.constant 0 : index
    %c0_184 = arith.constant 0 : index
    %750 = vector.load %arg8[%c1_182, %c0_183, %c0_184] : memref<2x128x64xbf16, #tpu.memory_space<vmem>>, vector<1x128x64xbf16>
    %751 = vector.shape_cast %750 : vector<1x128x64xbf16> to vector<128x64xbf16>
    %cst_185 = arith.constant dense<0.000000e+00> : vector<16x64xf32>
    %752 = tpu.matmul %749, %751, %cst_185 {dimension_numbers = #tpu.dot_dimension_numbers<[1], [0], [0], [1], [0, 0, 1, 1], [], []>} : vector<16x128xbf16>, vector<128x64xbf16>, vector<16x64xf32> -> vector<16x64xf32>
    %753 = arith.addf %721, %752 : vector<16x64xf32>
    %c0_186 = arith.constant 0 : index
    %c0_187 = arith.constant 0 : index
    %754 = vector.load %arg9[%c0_186, %c0_187] : memref<1x64xf32, #tpu.memory_space<vmem>>, vector<1x64xf32>
    %755 = arith.mulf %753, %753 : vector<16x64xf32>
    %cst_188 = arith.constant dense<0.000000e+00> : vector<16xf32>
    %756 = vector.multi_reduction <add>, %755, %cst_188 [1] : vector<16x64xf32> to vector<16xf32>
    %757 = vector.shape_cast %756 : vector<16xf32> to vector<16x1xf32>
    %cst_189 = arith.constant 6.400000e+01 : f32
    %758 = vector.broadcast %cst_189 : f32 to vector<16x1xf32>
    %759 = arith.divf %757, %758 : vector<16x1xf32>
    %cst_190 = arith.constant 9.99999974E-6 : f32
    %760 = vector.broadcast %cst_190 : f32 to vector<16x1xf32>
    %761 = arith.addf %759, %760 : vector<16x1xf32>
    %762 = math.rsqrt %761 : vector<16x1xf32>
    %763 = vector.broadcast %762 : vector<16x1xf32> to vector<16x64xf32>
    %764 = arith.mulf %753, %763 : vector<16x64xf32>
    %765 = vector.broadcast %754 : vector<1x64xf32> to vector<16x64xf32>
    %766 = arith.mulf %764, %765 : vector<16x64xf32>
    %c0_191 = arith.constant 0 : index
    %c0_192 = arith.constant 0 : index
    %767 = vector.load %arg12[%c0_191, %c0_192] : memref<16x64xf32, #tpu.memory_space<vmem>>, vector<16x64xf32>
    tpu.vector_store %arg12[%c0_191, %c0_192], %766 {strides = array<i32>} : memref<16x64xf32, #tpu.memory_space<vmem>>, vector<16x64xf32>,
    return
  }
}

</mosaic_0001>

<llo_original>
// kernel: smol_model.1
$region0: #{smol_model.1}
  #allocation0 [shape = 'u32[]', space=smem, size = 0x4, offset = 0x4, fixed_abs, tag = 'smem constant byte address 0x4 - core index']
  #allocation1 [shape = 'u32[144,128]{1,0:T(1,128)}', space=vmem, size = 0x12000, scoped, tag = 'internal scratch']
  %s0 = inlined_call_operand.vmem [shape: s32[16,1], index: 0, kind: input, shape index: {}]
  %s1 = inlined_call_operand.vmem [shape: f32[2,8], index: 1, kind: input, shape index: {}]
  %s2 = inlined_call_operand.vmem [shape: bf16[128,64], index: 2, kind: input, shape index: {}]
  %s3 = inlined_call_operand.vmem [shape: f32[2,1,64], index: 3, kind: input, shape index: {}]
  %s4 = inlined_call_operand.vmem [shape: f32[2,1,64], index: 4, kind: input, shape index: {}]
  %s5 = inlined_call_operand.vmem [shape: bf16[2,64,192], index: 5, kind: input, shape index: {}]
  %s6 = inlined_call_operand.vmem [shape: bf16[2,64,64], index: 6, kind: input, shape index: {}]
  %s7 = inlined_call_operand.vmem [shape: bf16[2,64,256], index: 7, kind: input, shape index: {}]
  %s8 = inlined_call_operand.vmem [shape: bf16[2,128,64], index: 8, kind: input, shape index: {}]
  %s9 = inlined_call_operand.vmem [shape: f32[1,64], index: 9, kind: input, shape index: {}]
  %s10 = inlined_call_operand.vmem [shape: f32[8,16], index: 10, kind: input, shape index: {}]
  %s11 = inlined_call_operand.vmem [shape: f32[8,16], index: 11, kind: input, shape index: {}]
  %s12 = inlined_call_operand.hbm [shape: f32[16,64], index: 12, kind: output, shape index: {}]
  %s13 = sld [smem:[#allocation0]]
  $region58: #{smol_model.1} parent=0
    _
  %s15 = ssub.s32 1, %s13
  %s16 = scalar_select 0, %s15, %s13
  $region1: #{smol_model.1} parent=0
    #allocation2 [shape = 'u8[8192]{0}', space=vmem, size = 0x2000, scoped, tag = 'output window, operand 0, single buffered']
    #allocation3 [shape = 's32[1]{0}', space=sflag, size = 0x4, scoped, tag = 'scoped memory for smol_model.1']
    %17 = vsyncpa [#allocation3], 0
    // Predicated region
    $region2: #{smol_model.1} parent=1 // pred_check
      _
    $region3: #{smol_model.1} parent=1 // pred_check_branch
      %19 = sbr.rel (0) target = $region5
    $region4: #{smol_model.1} parent=1 // pred_region
      _
    $region5: #{smol_model.1} parent=1 // pred_fallthru
      _
    // Predicated region
    $region6: #{smol_model.1} parent=1 // pred_check
      _
    $region7: #{smol_model.1} parent=1 // pred_check_branch
      %21 = sbr.rel (0) target = $region9
    $region8: #{smol_model.1} parent=1 // pred_region
      _
    $region9: #{smol_model.1} parent=1 // pred_fallthru
      _
    // Predicated region
    $region10: #{smol_model.1} parent=1 // pred_check
      _
    $region11: #{smol_model.1} parent=1 // pred_check_branch
      %23 = sbr.rel (0) target = $region13
    $region12: #{smol_model.1} parent=1 // pred_region
      _
    $region13: #{smol_model.1} parent=1 // pred_fallthru
      _
    // Predicated region
    $region14: #{smol_model.1} parent=1 // pred_check
      _
    $region15: #{smol_model.1} parent=1 // pred_check_branch
      %25 = sbr.rel (0) target = $region17
    $region16: #{smol_model.1} parent=1 // pred_region
      _
    $region17: #{smol_model.1} parent=1 // pred_fallthru
      _
    // Predicated region
    $region18: #{smol_model.1} parent=1 // pred_check
      _
    $region19: #{smol_model.1} parent=1 // pred_check_branch
      %27 = sbr.rel (0) target = $region21
    $region20: #{smol_model.1} parent=1 // pred_region
      _
    $region21: #{smol_model.1} parent=1 // pred_fallthru
      _
    // Predicated region
    $region22: #{smol_model.1} parent=1 // pred_check
      _
    $region23: #{smol_model.1} parent=1 // pred_check_branch
      %29 = sbr.rel (0) target = $region25
    $region24: #{smol_model.1} parent=1 // pred_region
      _
    $region25: #{smol_model.1} parent=1 // pred_fallthru
      _
    // Predicated region
    $region26: #{smol_model.1} parent=1 // pred_check
      _
    $region27: #{smol_model.1} parent=1 // pred_check_branch
      %31 = sbr.rel (0) target = $region29
    $region28: #{smol_model.1} parent=1 // pred_region
      _
    $region29: #{smol_model.1} parent=1 // pred_fallthru
      _
    // Predicated region
    $region30: #{smol_model.1} parent=1 // pred_check
      _
    $region31: #{smol_model.1} parent=1 // pred_check_branch
      %33 = sbr.rel (0) target = $region33
    $region32: #{smol_model.1} parent=1 // pred_region
      _
    $region33: #{smol_model.1} parent=1 // pred_fallthru
      _
    // Predicated region
    $region34: #{smol_model.1} parent=1 // pred_check
      _
    $region35: #{smol_model.1} parent=1 // pred_check_branch
      %35 = sbr.rel (0) target = $region37
    $region36: #{smol_model.1} parent=1 // pred_region
      _
    $region37: #{smol_model.1} parent=1 // pred_fallthru
      _
    // Predicated region
    $region38: #{smol_model.1} parent=1 // pred_check
      _
    $region39: #{smol_model.1} parent=1 // pred_check_branch
      %37 = sbr.rel (0) target = $region41
    $region40: #{smol_model.1} parent=1 // pred_region
      _
    $region41: #{smol_model.1} parent=1 // pred_fallthru
      _
    // Predicated region
    $region42: #{smol_model.1} parent=1 // pred_check
      _
    $region43: #{smol_model.1} parent=1 // pred_check_branch
      %39 = sbr.rel (0) target = $region45
    $region44: #{smol_model.1} parent=1 // pred_region
      _
    $region45: #{smol_model.1} parent=1 // pred_fallthru
      _
    // Predicated region
    $region46: #{smol_model.1} parent=1 // pred_check
      _
    $region47: #{smol_model.1} parent=1 // pred_check_branch
      %41 = sbr.rel (0) target = $region49
    $region48: #{smol_model.1} parent=1 // pred_region
      _
    $region49: #{smol_model.1} parent=1 // pred_fallthru
      _
    %v43 = vld [vmem:[%s0] sm:$0xff]
    %v44 = vld [vmem:[%s0 + $0x8] sm:$0xff]
    %v45 = vlaneseq
    %v46 = vand.u32 %v45, 127
    %47 = vset.pattern.permute.xlu0 0
    %48 = vperm.xlu0 %47, %v43
    %v49 = vpop.permute.xlu0 %48
    %50 = vset.pattern.permute.xlu0 0
    %51 = vperm.xlu0 %50, %v44
    %v52 = vpop.permute.xlu0 %51
    %vm53 = vcmp.eq.s32.totalorder %v46, %v49
    %vm54 = vcmp.eq.s32.totalorder %v46, %v52
    %v55 = vsel %vm53, 1, 0
    %v56 = vsel %vm54, 1, 0
    %v57 = vcvt.s32.f32 %v55
    %v58 = vcvt.s32.f32 %v56
    %v59 = vpack.c.bf16 %v58, %v57
    %v60 = vld [vmem:[%s2] sm:$0xf]
    %v61 = vld [vmem:[%s2 + $0x4] sm:$0xf]
    %v62 = vld [vmem:[%s2 + $0x8] sm:$0xf]
    %v63 = vld [vmem:[%s2 + $0xc] sm:$0xf]
    %v64 = vld [vmem:[%s2 + $0x10] sm:$0xf]
    %v65 = vld [vmem:[%s2 + $0x14] sm:$0xf]
    %v66 = vld [vmem:[%s2 + $0x18] sm:$0xf]
    %v67 = vld [vmem:[%s2 + $0x1c] sm:$0xf]
    %v68 = vld [vmem:[%s2 + $0x20] sm:$0xf]
    %v69 = vld [vmem:[%s2 + $0x24] sm:$0xf]
    %v70 = vld [vmem:[%s2 + $0x28] sm:$0xf]
    %v71 = vld [vmem:[%s2 + $0x2c] sm:$0xf]
    %v72 = vld [vmem:[%s2 + $0x30] sm:$0xf]
    %v73 = vld [vmem:[%s2 + $0x34] sm:$0xf]
    %v74 = vld [vmem:[%s2 + $0x38] sm:$0xf]
    %v75 = vld [vmem:[%s2 + $0x3c] sm:$0xf]
    %v92 = vunpack.c.l.b16 %v60
    %v93 = vunpack.c.l.b16 %v61
    %v94 = vunpack.c.l.b16 %v62
    %v95 = vunpack.c.l.b16 %v63
    %v96 = vunpack.c.l.b16 %v64
    %v97 = vunpack.c.l.b16 %v65
    %v98 = vunpack.c.l.b16 %v66
    %v99 = vunpack.c.l.b16 %v67
    %v100 = vunpack.c.l.b16 %v68
    %v101 = vunpack.c.l.b16 %v69
    %v102 = vunpack.c.l.b16 %v70
    %v103 = vunpack.c.l.b16 %v71
    %v104 = vunpack.c.l.b16 %v72
    %v105 = vunpack.c.l.b16 %v73
    %v106 = vunpack.c.l.b16 %v74
    %v107 = vunpack.c.l.b16 %v75
    %v108 = vpack.c.b16 %v93, %v92
    %v109 = vpack.c.b16 %v95, %v94
    %v110 = vpack.c.b16 %v97, %v96
    %v111 = vpack.c.b16 %v99, %v98
    %v112 = vpack.c.b16 %v101, %v100
    %v113 = vpack.c.b16 %v103, %v102
    %v114 = vpack.c.b16 %v105, %v104
    %v115 = vpack.c.b16 %v107, %v106
    %124 = vmatprep.subr.bf16.mxu0 0
    %125 = vmatpush1.bf16.msra.mxu0 %v108
    %126 = vmatprep.subr.bf16.mxu0 0
    %127 = vmatpush1.bf16.msra.mxu0 %v109
    %128 = vmatprep.subr.bf16.mxu0 0
    %129 = vmatpush1.bf16.msra.mxu0 %v110
    %130 = vmatprep.subr.bf16.mxu0 0
    %131 = vmatpush1.bf16.msra.mxu0 %v111
    %132 = vmatprep.subr.bf16.mxu0 0
    %133 = vmatpush1.bf16.msra.mxu0 %v112
    %134 = vmatprep.subr.bf16.mxu0 0
    %135 = vmatpush1.bf16.msra.mxu0 %v113
    %136 = vmatprep.subr.bf16.mxu0 0
    %137 = vmatpush1.bf16.msra.mxu0 %v114
    %138 = vmatprep.subr.bf16.mxu0 0
    %139 = vmatpush1.bf16.msra.mxu0 %v115
    %140 = vmatprep.subr.bf16.mxu0 0
    %141 = vmatpush1.bf16.msra.mxu0 0
    %142 = vmatprep.subr.bf16.mxu0 0
    %143 = vmatpush1.bf16.msra.mxu0 0
    %144 = vmatprep.subr.bf16.mxu0 0
    %145 = vmatpush1.bf16.msra.mxu0 0
    %146 = vmatprep.subr.bf16.mxu0 0
    %147 = vmatpush1.bf16.msra.mxu0 0
    %148 = vmatprep.subr.bf16.mxu0 0
    %149 = vmatpush1.bf16.msra.mxu0 0
    %150 = vmatprep.subr.bf16.mxu0 0
    %151 = vmatpush1.bf16.msra.mxu0 0
    %152 = vmatprep.subr.bf16.mxu0 0
    %153 = vmatpush1.bf16.msra.mxu0 0
    %154 = vmatprep.subr.bf16.mxu0 0
    %155 = vmatpush1.bf16.msra.mxu0 0
    %156 = vmatprep.mubr.bf16.mxu0 0
    %157 = vmatmul.mubr.bf16.gmra.mrb[0].mxu0 %v59
    %v158 = vpop.f32.mrb[0].mxu0
    %v159 = vadd.f32 0.0, %v158
    %v160 = vpop.f32.mrb[0].mxu0
    %v161 = vpop.f32.mrb[0].mxu0
    %v162 = vadd.f32 0.0, %v161
    %v163 = vpop.f32.mrb[0].mxu0
    %164 = vdwg.mxu0
    %v165 = vlaneseq
    %v166 = vshrl.u32 %v165, 7
    %vm167 = vcmp.ge.s32.totalorder %v166, %v46
    %v168 = vsel %vm167, 0.0, -1e+09
    %v169 = vld [vmem:[%s1] sm:$0x3]
    %vm170 = vcmp.gt.f32.partialorder %v169, 0.5
    %v171 = vsel %vm170, 0.0, -1e+09
    %v172 = vlaneseq
    %v173 = vshrl.u32 %v172, 7
    %v174 = vsub.s32 0, %v173
    %v175 = vrot.slane %v171, %v174
    %v176 = vadd.f32 %v168, %v175
    %v177 = vlaneseq
    %v178 = vshrl.u32 %v177, 7
    %v179 = vsub.s32 1, %v178
    %v180 = vrot.slane %v171, %v179
    %v181 = vadd.f32 %v168, %v180
    %v182 = vld [vmem:[%s10] sm:$0xff]
    %v183 = vld [vmem:[%s11] sm:$0xff]
    %v184 = vld [vmem:[%s3] sm:$0x1]
    %v185 = vmul.f32 %v159, %v159
    %v186 = vmul.f32 %v162, %v162
    %vm187 = vcmask 523264
    %v188 = vsel %vm187, %v185, 0.0
    %189 = vadd.xlane.f32.xlu0 %v188
    %v190 = vpop.xlane.xlu0 %189
    %v191 = vsel %vm187, %v186, 0.0
    %192 = vadd.xlane.f32.xlu0 %v191
    %v193 = vpop.xlane.xlu0 %192
    %v194 = vrcp.pop 64.0
    %v195 = vmul.f32 %v190, %v194
    %v196 = vmul.f32 %v193, %v194
    %v197 = vadd.f32 %v195, 1e-05
    %v198 = vadd.f32 %v196, 1e-05
    %v199 = vrsqrt.pop %v197
    %v200 = vrsqrt.pop %v198
    %v201 = vmul.f32 %v159, %v199
    %v202 = vmul.f32 %v162, %v200
    %v204 = vlaneseq
    %v205 = vshrl.u32 %v204, 7
    %v206 = vsub.s32 0, %v205
    %v207 = vrot.slane %v184, %v206
    %v209 = vmul.f32 %v201, %v207
    %v210 = vmul.f32 %v202, %v207
    %v211 = vpack.c.bf16 %v210, %v209
    %v212 = vld [vmem:[%s5] sm:$0xff]
    %v213 = vld [vmem:[%s5 + $0x8] sm:$0xff]
    %v214 = vld [vmem:[%s5 + $0x10] sm:$0xff]
    %v215 = vld [vmem:[%s5 + $0x18] sm:$0xff]
    %v216 = vld [vmem:[%s5 + $0x20] sm:$0xff]
    %v217 = vld [vmem:[%s5 + $0x28] sm:$0xff]
    %v218 = vld [vmem:[%s5 + $0x30] sm:$0xff]
    %v219 = vld [vmem:[%s5 + $0x38] sm:$0xff]
    %v228 = vunpack.c.l.b16 %v212
    %v229 = vunpack.c.h.b16 %v212
    %v230 = vunpack.c.l.b16 %v213
    %v231 = vunpack.c.h.b16 %v213
    %v232 = vunpack.c.l.b16 %v214
    %v233 = vunpack.c.h.b16 %v214
    %v234 = vunpack.c.l.b16 %v215
    %v235 = vunpack.c.h.b16 %v215
    %v236 = vunpack.c.l.b16 %v216
    %v237 = vunpack.c.h.b16 %v216
    %v238 = vunpack.c.l.b16 %v217
    %v239 = vunpack.c.h.b16 %v217
    %v240 = vunpack.c.l.b16 %v218
    %v241 = vunpack.c.h.b16 %v218
    %v242 = vunpack.c.l.b16 %v219
    %v243 = vunpack.c.h.b16 %v219
    %v244 = vpack.c.b16 %v230, %v228
    %v245 = vpack.c.b16 %v231, %v229
    %v246 = vpack.c.b16 %v234, %v232
    %v247 = vpack.c.b16 %v235, %v233
    %v248 = vpack.c.b16 %v238, %v236
    %v249 = vpack.c.b16 %v239, %v237
    %v250 = vpack.c.b16 %v242, %v240
    %v251 = vpack.c.b16 %v243, %v241
    %v261 = vsel %vm187, %v211, 0
    %263 = vmatprep.subr.bf16.mxu0 %v245
    %264 = vmatpush1.bf16.msra.mxu0 %v244
    %265 = vmatprep.subr.bf16.mxu0 %v247
    %266 = vmatpush1.bf16.msra.mxu0 %v246
    %267 = vmatprep.subr.bf16.mxu0 %v249
    %268 = vmatpush1.bf16.msra.mxu0 %v248
    %269 = vmatprep.subr.bf16.mxu0 %v251
    %270 = vmatpush1.bf16.msra.mxu0 %v250
    %271 = vmatprep.subr.bf16.mxu0 0
    %272 = vmatpush1.bf16.msra.mxu0 0
    %273 = vmatprep.subr.bf16.mxu0 0
    %274 = vmatpush1.bf16.msra.mxu0 0
    %275 = vmatprep.subr.bf16.mxu0 0
    %276 = vmatpush1.bf16.msra.mxu0 0
    %277 = vmatprep.subr.bf16.mxu0 0
    %278 = vmatpush1.bf16.msra.mxu0 0
    %279 = vmatprep.subr.bf16.mxu0 0
    %280 = vmatpush1.bf16.msra.mxu0 0
    %281 = vmatprep.subr.bf16.mxu0 0
    %282 = vmatpush1.bf16.msra.mxu0 0
    %283 = vmatprep.subr.bf16.mxu0 0
    %284 = vmatpush1.bf16.msra.mxu0 0
    %285 = vmatprep.subr.bf16.mxu0 0
    %286 = vmatpush1.bf16.msra.mxu0 0
    %287 = vmatprep.subr.bf16.mxu0 0
    %288 = vmatpush1.bf16.msra.mxu0 0
    %289 = vmatprep.subr.bf16.mxu0 0
    %290 = vmatpush1.bf16.msra.mxu0 0
    %291 = vmatprep.subr.bf16.mxu0 0
    %292 = vmatpush1.bf16.msra.mxu0 0
    %293 = vmatprep.subr.bf16.mxu0 0
    %294 = vmatpush1.bf16.msra.mxu0 0
    %295 = vmatprep.mubr.bf16.mxu0 0
    %296 = vmatmul.mubr.bf16.gmra.mrb[0].mxu0 %v261
    %v297 = vpop.f32.mrb[0].mxu0
    %v298 = vadd.f32 0.0, %v297
    %v299 = vpop.f32.mrb[0].mxu0
    %v300 = vadd.f32 0.0, %v299
    %v301 = vpop.f32.mrb[0].mxu0
    %v302 = vadd.f32 0.0, %v301
    %v303 = vpop.f32.mrb[0].mxu0
    %v304 = vadd.f32 0.0, %v303
    %305 = vdwg.mxu0
    %v306 = vsub.f32 0.0, %v298
    %308 = vrot.lane.b32.xlu0 %v306, 120
    %v309 = vpop.permute.xlu0 %308
    %312 = vrot.lane.b32.xlu0 %v298, 8
    %v313 = vpop.permute.xlu0 %312
    %vm315 = vcmask 64512
    %v316 = vsel %vm315, %v309, %v313
    %v317 = vmul.f32 %v298, %v182
    %v318 = vmul.f32 %v316, %v183
    %v319 = vadd.f32 %v317, %v318
    %320 = vrot.lane.b32.xlu0 %v306, 56
    %v321 = vpop.permute.xlu0 %320
    %323 = vrot.lane.b32.xlu0 %v298, 72
    %v324 = vpop.permute.xlu0 %323
    %v326 = vsel %vm315, %v321, %v324
    %328 = vrot.lane.b32.xlu0 %v182, 64
    %v329 = vpop.permute.xlu0 %328
    %v331 = vmul.f32 %v298, %v329
    %v332 = vmul.f32 %v326, %v183
    %334 = vrot.lane.b32.xlu0 %v332, 64
    %v335 = vpop.permute.xlu0 %334
    %v337 = vadd.f32 %v331, %v335
    %v338 = vpack.c.bf16 %v319, %v319
    %v339 = vpack.c.bf16 %v337, %v337
    %341 = vrot.lane.b32.xlu0 %v339, 64
    %v342 = vpop.permute.xlu0 %341
    %vm343 = vcmask 130048
    %v345 = vsel %vm343, %v338, 0
    %v348 = vsel %vm343, %v342, 0
    %350 = vmatprep.subr.bf16.mxu0 0
    %351 = vmatpush1.bf16.xpose.msra.mxu0 %v348
    %352 = vmatprep.subr.bf16.mxu0 0
    %353 = vmatpush1.bf16.xpose.msra.mxu0 0
    %354 = vmatprep.subr.bf16.mxu0 0
    %355 = vmatpush1.bf16.xpose.msra.mxu0 0
    %356 = vmatprep.subr.bf16.mxu0 0
    %357 = vmatpush1.bf16.xpose.msra.mxu0 0
    %358 = vmatprep.subr.bf16.mxu0 0
    %359 = vmatpush1.bf16.xpose.msra.mxu0 0
    %360 = vmatprep.subr.bf16.mxu0 0
    %361 = vmatpush1.bf16.xpose.msra.mxu0 0
    %362 = vmatprep.subr.bf16.mxu0 0
    %363 = vmatpush1.bf16.xpose.msra.mxu0 0
    %364 = vmatprep.subr.bf16.mxu0 0
    %365 = vmatpush1.bf16.xpose.msra.mxu0 0
    %366 = vmatprep.subr.bf16.mxu0 0
    %367 = vmatpush1.bf16.xpose.msra.mxu0 0
    %368 = vmatprep.subr.bf16.mxu0 0
    %369 = vmatpush1.bf16.xpose.msra.mxu0 0
    %370 = vmatprep.subr.bf16.mxu0 0
    %371 = vmatpush1.bf16.xpose.msra.mxu0 0
    %372 = vmatprep.subr.bf16.mxu0 0
    %373 = vmatpush1.bf16.xpose.msra.mxu0 0
    %374 = vmatprep.subr.bf16.mxu0 0
    %375 = vmatpush1.bf16.xpose.msra.mxu0 0
    %376 = vmatprep.subr.bf16.mxu0 0
    %377 = vmatpush1.bf16.xpose.msra.mxu0 0
    %378 = vmatprep.subr.bf16.mxu0 0
    %379 = vmatpush1.bf16.xpose.msra.mxu0 0
    %380 = vmatprep.subr.bf16.mxu0 0
    %381 = vmatpush1.bf16.xpose.msra.mxu0 0
    %382 = vmatprep.mubr.bf16.mxu0 0
    %383 = vmatmul.mubr.bf16.gmra.mrb[0].mxu0 %v345
    %v384 = vpop.f32.mrb[0].mxu0
    %v385 = vadd.f32 0.0, %v384
    %v386 = vpop.f32.mrb[0].mxu0
    %v387 = vpop.f32.mrb[0].mxu0
    %v388 = vpop.f32.mrb[0].mxu0
    %389 = vdwg.mxu0
    %v390 = vmul.f32 %v385, 0.25
    %v391 = vadd.f32 %v390, %v176
    %v392 = vsel %vm315, %v391, -inf
    %393 = vmax.xlane.f32.xlu0 %v392
    %v394 = vpop.xlane.xlu0 %393
    %v395 = vsub.f32 %v391, %v394
    %v396 = vmul.f32 %v395, 1.442695
    %v397 = vpow.pop %v396
    %v398 = vsel %vm315, %v397, 0.0
    %399 = vadd.xlane.f32.xlu0 %v398
    %v400 = vpop.xlane.xlu0 %399
    %v401 = vrcp.pop %v400
    %v402 = vmul.f32 %v397, %v401
    %v403 = vpack.c.bf16 %v402, %v402
    %v404 = vpack.c.bf16 %v300, %v300
    %v406 = vsel %vm315, %v403, 0
    %vm408 = vcmask 1043456
    %v410 = vsel %vm408, %v404, 0
    %412 = vmatprep.subr.bf16.mxu0 0
    %413 = vmatpush1.bf16.msra.mxu0 %v410
    %414 = vmatprep.subr.bf16.mxu0 0
    %415 = vmatpush1.bf16.msra.mxu0 0
    %416 = vmatprep.subr.bf16.mxu0 0
    %417 = vmatpush1.bf16.msra.mxu0 0
    %418 = vmatprep.subr.bf16.mxu0 0
    %419 = vmatpush1.bf16.msra.mxu0 0
    %420 = vmatprep.subr.bf16.mxu0 0
    %421 = vmatpush1.bf16.msra.mxu0 0
    %422 = vmatprep.subr.bf16.mxu0 0
    %423 = vmatpush1.bf16.msra.mxu0 0
    %424 = vmatprep.subr.bf16.mxu0 0
    %425 = vmatpush1.bf16.msra.mxu0 0
    %426 = vmatprep.subr.bf16.mxu0 0
    %427 = vmatpush1.bf16.msra.mxu0 0
    %428 = vmatprep.subr.bf16.mxu0 0
    %429 = vmatpush1.bf16.msra.mxu0 0
    %430 = vmatprep.subr.bf16.mxu0 0
    %431 = vmatpush1.bf16.msra.mxu0 0
    %432 = vmatprep.subr.bf16.mxu0 0
    %433 = vmatpush1.bf16.msra.mxu0 0
    %434 = vmatprep.subr.bf16.mxu0 0
    %435 = vmatpush1.bf16.msra.mxu0 0
    %436 = vmatprep.subr.bf16.mxu0 0
    %437 = vmatpush1.bf16.msra.mxu0 0
    %438 = vmatprep.subr.bf16.mxu0 0
    %439 = vmatpush1.bf16.msra.mxu0 0
    %440 = vmatprep.subr.bf16.mxu0 0
    %441 = vmatpush1.bf16.msra.mxu0 0
    %442 = vmatprep.subr.bf16.mxu0 0
    %443 = vmatpush1.bf16.msra.mxu0 0
    %444 = vmatprep.mubr.bf16.mxu0 0
    %445 = vmatmul.mubr.bf16.gmra.mrb[0].mxu0 %v406
    %v446 = vpop.f32.mrb[0].mxu0
    %v447 = vadd.f32 0.0, %v446
    %v448 = vpop.f32.mrb[0].mxu0
    %v449 = vpop.f32.mrb[0].mxu0
    %v450 = vpop.f32.mrb[0].mxu0
    %451 = vdwg.mxu0
    %452 = vrot.lane.b32.xlu0 %v306, 104
    %v453 = vpop.permute.xlu0 %452
    %455 = vrot.lane.b32.xlu0 %v298, 120
    %v456 = vpop.permute.xlu0 %455
    %v458 = vsel %vm315, %v453, %v456
    %459 = vrot.lane.b32.xlu0 %v182, 16
    %v460 = vpop.permute.xlu0 %459
    %v462 = vmul.f32 %v298, %v460
    %v463 = vmul.f32 %v458, %v183
    %465 = vrot.lane.b32.xlu0 %v463, 16
    %v466 = vpop.permute.xlu0 %465
    %v468 = vadd.f32 %v462, %v466
    %469 = vrot.lane.b32.xlu0 %v306, 40
    %v470 = vpop.permute.xlu0 %469
    %472 = vrot.lane.b32.xlu0 %v298, 56
    %v473 = vpop.permute.xlu0 %472
    %v475 = vsel %vm315, %v470, %v473
    %476 = vrot.lane.b32.xlu0 %v182, 80
    %v477 = vpop.permute.xlu0 %476
    %v479 = vmul.f32 %v298, %v477
    %v480 = vmul.f32 %v475, %v183
    %482 = vrot.lane.b32.xlu0 %v480, 80
    %v483 = vpop.permute.xlu0 %482
    %v485 = vadd.f32 %v479, %v483
    %v486 = vpack.c.bf16 %v468, %v468
    %v487 = vpack.c.bf16 %v485, %v485
    %489 = vrot.lane.b32.xlu0 %v486, 112
    %v490 = vpop.permute.xlu0 %489
    %492 = vrot.lane.b32.xlu0 %v487, 48
    %v493 = vpop.permute.xlu0 %492
    %v495 = vsel %vm343, %v490, 0
    %v498 = vsel %vm343, %v493, 0
    %500 = vmatprep.subr.bf16.mxu0 0
    %501 = vmatpush1.bf16.xpose.msra.mxu0 %v498
    %502 = vmatprep.subr.bf16.mxu0 0
    %503 = vmatpush1.bf16.xpose.msra.mxu0 0
    %504 = vmatprep.subr.bf16.mxu0 0
    %505 = vmatpush1.bf16.xpose.msra.mxu0 0
    %506 = vmatprep.subr.bf16.mxu0 0
    %507 = vmatpush1.bf16.xpose.msra.mxu0 0
    %508 = vmatprep.subr.bf16.mxu0 0
    %509 = vmatpush1.bf16.xpose.msra.mxu0 0
    %510 = vmatprep.subr.bf16.mxu0 0
    %511 = vmatpush1.bf16.xpose.msra.mxu0 0
    %512 = vmatprep.subr.bf16.mxu0 0
    %513 = vmatpush1.bf16.xpose.msra.mxu0 0
    %514 = vmatprep.subr.bf16.mxu0 0
    %515 = vmatpush1.bf16.xpose.msra.mxu0 0
    %516 = vmatprep.subr.bf16.mxu0 0
    %517 = vmatpush1.bf16.xpose.msra.mxu0 0
    %518 = vmatprep.subr.bf16.mxu0 0
    %519 = vmatpush1.bf16.xpose.msra.mxu0 0
    %520 = vmatprep.subr.bf16.mxu0 0
    %521 = vmatpush1.bf16.xpose.msra.mxu0 0
    %522 = vmatprep.subr.bf16.mxu0 0
    %523 = vmatpush1.bf16.xpose.msra.mxu0 0
    %524 = vmatprep.subr.bf16.mxu0 0
    %525 = vmatpush1.bf16.xpose.msra.mxu0 0
    %526 = vmatprep.subr.bf16.mxu0 0
    %527 = vmatpush1.bf16.xpose.msra.mxu0 0
    %528 = vmatprep.subr.bf16.mxu0 0
    %529 = vmatpush1.bf16.xpose.msra.mxu0 0
    %530 = vmatprep.subr.bf16.mxu0 0
    %531 = vmatpush1.bf16.xpose.msra.mxu0 0
    %532 = vmatprep.mubr.bf16.mxu0 0
    %533 = vmatmul.mubr.bf16.gmra.mrb[0].mxu0 %v495
    %v534 = vpop.f32.mrb[0].mxu0
    %v535 = vadd.f32 0.0, %v534
    %v536 = vpop.f32.mrb[0].mxu0
    %v537 = vpop.f32.mrb[0].mxu0
    %v538 = vpop.f32.mrb[0].mxu0
    %539 = vdwg.mxu0
    %v540 = vmul.f32 %v535, 0.25
    %v541 = vadd.f32 %v540, %v176
    %v542 = vsel %vm315, %v541, -inf
    %543 = vmax.xlane.f32.xlu0 %v542
    %v544 = vpop.xlane.xlu0 %543
    %v545 = vsub.f32 %v541, %v544
    %v546 = vmul.f32 %v545, 1.442695
    %v547 = vpow.pop %v546
    %v548 = vsel %vm315, %v547, 0.0
    %549 = vadd.xlane.f32.xlu0 %v548
    %v550 = vpop.xlane.xlu0 %549
    %v551 = vrcp.pop %v550
    %v552 = vmul.f32 %v547, %v551
    %v553 = vpack.c.bf16 %v552, %v552
    %555 = vrot.lane.b32.xlu0 %v404, 112
    %v556 = vpop.permute.xlu0 %555
    %v558 = vsel %vm315, %v553, 0
    %v561 = vsel %vm408, %v556, 0
    %563 = vmatprep.subr.bf16.mxu0 0
    %564 = vmatpush1.bf16.msra.mxu0 %v561
    %565 = vmatprep.subr.bf16.mxu0 0
    %566 = vmatpush1.bf16.msra.mxu0 0
    %567 = vmatprep.subr.bf16.mxu0 0
    %568 = vmatpush1.bf16.msra.mxu0 0
    %569 = vmatprep.subr.bf16.mxu0 0
    %570 = vmatpush1.bf16.msra.mxu0 0
    %571 = vmatprep.subr.bf16.mxu0 0
    %572 = vmatpush1.bf16.msra.mxu0 0
    %573 = vmatprep.subr.bf16.mxu0 0
    %574 = vmatpush1.bf16.msra.mxu0 0
    %575 = vmatprep.subr.bf16.mxu0 0
    %576 = vmatpush1.bf16.msra.mxu0 0
    %577 = vmatprep.subr.bf16.mxu0 0
    %578 = vmatpush1.bf16.msra.mxu0 0
    %579 = vmatprep.subr.bf16.mxu0 0
    %580 = vmatpush1.bf16.msra.mxu0 0
    %581 = vmatprep.subr.bf16.mxu0 0
    %582 = vmatpush1.bf16.msra.mxu0 0
    %583 = vmatprep.subr.bf16.mxu0 0
    %584 = vmatpush1.bf16.msra.mxu0 0
    %585 = vmatprep.subr.bf16.mxu0 0
    %586 = vmatpush1.bf16.msra.mxu0 0
    %587 = vmatprep.subr.bf16.mxu0 0
    %588 = vmatpush1.bf16.msra.mxu0 0
    %589 = vmatprep.subr.bf16.mxu0 0
    %590 = vmatpush1.bf16.msra.mxu0 0
    %591 = vmatprep.subr.bf16.mxu0 0
    %592 = vmatpush1.bf16.msra.mxu0 0
    %593 = vmatprep.subr.bf16.mxu0 0
    %594 = vmatpush1.bf16.msra.mxu0 0
    %595 = vmatprep.mubr.bf16.mxu0 0
    %596 = vmatmul.mubr.bf16.gmra.mrb[0].mxu0 %v558
    %v597 = vpop.f32.mrb[0].mxu0
    %v598 = vadd.f32 0.0, %v597
    %v599 = vpop.f32.mrb[0].mxu0
    %v600 = vpop.f32.mrb[0].mxu0
    %v601 = vpop.f32.mrb[0].mxu0
    %602 = vdwg.mxu0
    %603 = vrot.lane.b32.xlu0 %v306, 88
    %v604 = vpop.permute.xlu0 %603
    %606 = vrot.lane.b32.xlu0 %v298, 104
    %v607 = vpop.permute.xlu0 %606
    %v609 = vsel %vm315, %v604, %v607
    %610 = vrot.lane.b32.xlu0 %v182, 32
    %v611 = vpop.permute.xlu0 %610
    %v613 = vmul.f32 %v298, %v611
    %v614 = vmul.f32 %v609, %v183
    %616 = vrot.lane.b32.xlu0 %v614, 32
    %v617 = vpop.permute.xlu0 %616
    %v619 = vadd.f32 %v613, %v617
    %620 = vrot.lane.b32.xlu0 %v306, 24
    %v621 = vpop.permute.xlu0 %620
    %623 = vrot.lane.b32.xlu0 %v298, 40
    %v624 = vpop.permute.xlu0 %623
    %v626 = vsel %vm315, %v621, %v624
    %627 = vrot.lane.b32.xlu0 %v182, 96
    %v628 = vpop.permute.xlu0 %627
    %v630 = vmul.f32 %v298, %v628
    %v631 = vmul.f32 %v626, %v183
    %633 = vrot.lane.b32.xlu0 %v631, 96
    %v634 = vpop.permute.xlu0 %633
    %v636 = vadd.f32 %v630, %v634
    %v637 = vpack.c.bf16 %v619, %v619
    %v638 = vpack.c.bf16 %v636, %v636
    %640 = vrot.lane.b32.xlu0 %v637, 96
    %v641 = vpop.permute.xlu0 %640
    %643 = vrot.lane.b32.xlu0 %v638, 32
    %v644 = vpop.permute.xlu0 %643
    %v646 = vsel %vm343, %v641, 0
    %v649 = vsel %vm343, %v644, 0
    %651 = vmatprep.subr.bf16.mxu0 0
    %652 = vmatpush1.bf16.xpose.msra.mxu0 %v649
    %653 = vmatprep.subr.bf16.mxu0 0
    %654 = vmatpush1.bf16.xpose.msra.mxu0 0
    %655 = vmatprep.subr.bf16.mxu0 0
    %656 = vmatpush1.bf16.xpose.msra.mxu0 0
    %657 = vmatprep.subr.bf16.mxu0 0
    %658 = vmatpush1.bf16.xpose.msra.mxu0 0
    %659 = vmatprep.subr.bf16.mxu0 0
    %660 = vmatpush1.bf16.xpose.msra.mxu0 0
    %661 = vmatprep.subr.bf16.mxu0 0
    %662 = vmatpush1.bf16.xpose.msra.mxu0 0
    %663 = vmatprep.subr.bf16.mxu0 0
    %664 = vmatpush1.bf16.xpose.msra.mxu0 0
    %665 = vmatprep.subr.bf16.mxu0 0
    %666 = vmatpush1.bf16.xpose.msra.mxu0 0
    %667 = vmatprep.subr.bf16.mxu0 0
    %668 = vmatpush1.bf16.xpose.msra.mxu0 0
    %669 = vmatprep.subr.bf16.mxu0 0
    %670 = vmatpush1.bf16.xpose.msra.mxu0 0
    %671 = vmatprep.subr.bf16.mxu0 0
    %672 = vmatpush1.bf16.xpose.msra.mxu0 0
    %673 = vmatprep.subr.bf16.mxu0 0
    %674 = vmatpush1.bf16.xpose.msra.mxu0 0
    %675 = vmatprep.subr.bf16.mxu0 0
    %676 = vmatpush1.bf16.xpose.msra.mxu0 0
    %677 = vmatprep.subr.bf16.mxu0 0
    %678 = vmatpush1.bf16.xpose.msra.mxu0 0
    %679 = vmatprep.subr.bf16.mxu0 0
    %680 = vmatpush1.bf16.xpose.msra.mxu0 0
    %681 = vmatprep.subr.bf16.mxu0 0
    %682 = vmatpush1.bf16.xpose.msra.mxu0 0
    %683 = vmatprep.mubr.bf16.mxu0 0
    %684 = vmatmul.mubr.bf16.gmra.mrb[0].mxu0 %v646
    %v685 = vpop.f32.mrb[0].mxu0
    %v686 = vadd.f32 0.0, %v685
    %v687 = vpop.f32.mrb[0].mxu0
    %v688 = vpop.f32.mrb[0].mxu0
    %v689 = vpop.f32.mrb[0].mxu0
    %690 = vdwg.mxu0
    %v691 = vmul.f32 %v686, 0.25
    %v692 = vadd.f32 %v691, %v176
    %v693 = vsel %vm315, %v692, -inf
    %694 = vmax.xlane.f32.xlu0 %v693
    %v695 = vpop.xlane.xlu0 %694
    %v696 = vsub.f32 %v692, %v695
    %v697 = vmul.f32 %v696, 1.442695
    %v698 = vpow.pop %v697
    %v699 = vsel %vm315, %v698, 0.0
    %700 = vadd.xlane.f32.xlu0 %v699
    %v701 = vpop.xlane.xlu0 %700
    %v702 = vrcp.pop %v701
    %v703 = vmul.f32 %v698, %v702
    %v704 = vpack.c.bf16 %v703, %v703
    %705 = vrot.lane.b32.xlu0 %v404, 96
    %v706 = vpop.permute.xlu0 %705
    %v708 = vsel %vm315, %v704, 0
    %v711 = vsel %vm408, %v706, 0
    %713 = vmatprep.subr.bf16.mxu0 0
    %714 = vmatpush1.bf16.msra.mxu0 %v711
    %715 = vmatprep.subr.bf16.mxu0 0
    %716 = vmatpush1.bf16.msra.mxu0 0
    %717 = vmatprep.subr.bf16.mxu0 0
    %718 = vmatpush1.bf16.msra.mxu0 0
    %719 = vmatprep.subr.bf16.mxu0 0
    %720 = vmatpush1.bf16.msra.mxu0 0
    %721 = vmatprep.subr.bf16.mxu0 0
    %722 = vmatpush1.bf16.msra.mxu0 0
    %723 = vmatprep.subr.bf16.mxu0 0
    %724 = vmatpush1.bf16.msra.mxu0 0
    %725 = vmatprep.subr.bf16.mxu0 0
    %726 = vmatpush1.bf16.msra.mxu0 0
    %727 = vmatprep.subr.bf16.mxu0 0
    %728 = vmatpush1.bf16.msra.mxu0 0
    %729 = vmatprep.subr.bf16.mxu0 0
    %730 = vmatpush1.bf16.msra.mxu0 0
    %731 = vmatprep.subr.bf16.mxu0 0
    %732 = vmatpush1.bf16.msra.mxu0 0
    %733 = vmatprep.subr.bf16.mxu0 0
    %734 = vmatpush1.bf16.msra.mxu0 0
    %735 = vmatprep.subr.bf16.mxu0 0
    %736 = vmatpush1.bf16.msra.mxu0 0
    %737 = vmatprep.subr.bf16.mxu0 0
    %738 = vmatpush1.bf16.msra.mxu0 0
    %739 = vmatprep.subr.bf16.mxu0 0
    %740 = vmatpush1.bf16.msra.mxu0 0
    %741 = vmatprep.subr.bf16.mxu0 0
    %742 = vmatpush1.bf16.msra.mxu0 0
    %743 = vmatprep.subr.bf16.mxu0 0
    %744 = vmatpush1.bf16.msra.mxu0 0
    %745 = vmatprep.mubr.bf16.mxu0 0
    %746 = vmatmul.mubr.bf16.gmra.mrb[0].mxu0 %v708
    %v747 = vpop.f32.mrb[0].mxu0
    %v748 = vadd.f32 0.0, %v747
    %v749 = vpop.f32.mrb[0].mxu0
    %v750 = vpop.f32.mrb[0].mxu0
    %v751 = vpop.f32.mrb[0].mxu0
    %752 = vdwg.mxu0
    %753 = vrot.lane.b32.xlu0 %v306, 72
    %v754 = vpop.permute.xlu0 %753
    %756 = vrot.lane.b32.xlu0 %v298, 88
    %v757 = vpop.permute.xlu0 %756
    %v759 = vsel %vm315, %v754, %v757
    %760 = vrot.lane.b32.xlu0 %v182, 48
    %v761 = vpop.permute.xlu0 %760
    %v763 = vmul.f32 %v298, %v761
    %v764 = vmul.f32 %v759, %v183
    %766 = vrot.lane.b32.xlu0 %v764, 48
    %v767 = vpop.permute.xlu0 %766
    %v769 = vadd.f32 %v763, %v767
    %770 = vrot.lane.b32.xlu0 %v306, 8
    %v771 = vpop.permute.xlu0 %770
    %773 = vrot.lane.b32.xlu0 %v298, 24
    %v774 = vpop.permute.xlu0 %773
    %v776 = vsel %vm315, %v771, %v774
    %777 = vrot.lane.b32.xlu0 %v182, 112
    %v778 = vpop.permute.xlu0 %777
    %v780 = vmul.f32 %v298, %v778
    %v781 = vmul.f32 %v776, %v183
    %783 = vrot.lane.b32.xlu0 %v781, 112
    %v784 = vpop.permute.xlu0 %783
    %v786 = vadd.f32 %v780, %v784
    %v787 = vpack.c.bf16 %v769, %v769
    %v788 = vpack.c.bf16 %v786, %v786
    %790 = vrot.lane.b32.xlu0 %v787, 80
    %v791 = vpop.permute.xlu0 %790
    %793 = vrot.lane.b32.xlu0 %v788, 16
    %v794 = vpop.permute.xlu0 %793
    %v796 = vsel %vm343, %v791, 0
    %v799 = vsel %vm343, %v794, 0
    %801 = vmatprep.subr.bf16.mxu0 0
    %802 = vmatpush1.bf16.xpose.msra.mxu0 %v799
    %803 = vmatprep.subr.bf16.mxu0 0
    %804 = vmatpush1.bf16.xpose.msra.mxu0 0
    %805 = vmatprep.subr.bf16.mxu0 0
    %806 = vmatpush1.bf16.xpose.msra.mxu0 0
    %807 = vmatprep.subr.bf16.mxu0 0
    %808 = vmatpush1.bf16.xpose.msra.mxu0 0
    %809 = vmatprep.subr.bf16.mxu0 0
    %810 = vmatpush1.bf16.xpose.msra.mxu0 0
    %811 = vmatprep.subr.bf16.mxu0 0
    %812 = vmatpush1.bf16.xpose.msra.mxu0 0
    %813 = vmatprep.subr.bf16.mxu0 0
    %814 = vmatpush1.bf16.xpose.msra.mxu0 0
    %815 = vmatprep.subr.bf16.mxu0 0
    %816 = vmatpush1.bf16.xpose.msra.mxu0 0
    %817 = vmatprep.subr.bf16.mxu0 0
    %818 = vmatpush1.bf16.xpose.msra.mxu0 0
    %819 = vmatprep.subr.bf16.mxu0 0
    %820 = vmatpush1.bf16.xpose.msra.mxu0 0
    %821 = vmatprep.subr.bf16.mxu0 0
    %822 = vmatpush1.bf16.xpose.msra.mxu0 0
    %823 = vmatprep.subr.bf16.mxu0 0
    %824 = vmatpush1.bf16.xpose.msra.mxu0 0
    %825 = vmatprep.subr.bf16.mxu0 0
    %826 = vmatpush1.bf16.xpose.msra.mxu0 0
    %827 = vmatprep.subr.bf16.mxu0 0
    %828 = vmatpush1.bf16.xpose.msra.mxu0 0
    %829 = vmatprep.subr.bf16.mxu0 0
    %830 = vmatpush1.bf16.xpose.msra.mxu0 0
    %831 = vmatprep.subr.bf16.mxu0 0
    %832 = vmatpush1.bf16.xpose.msra.mxu0 0
    %833 = vmatprep.mubr.bf16.mxu0 0
    %834 = vmatmul.mubr.bf16.gmra.mrb[0].mxu0 %v796
    %v835 = vpop.f32.mrb[0].mxu0
    %v836 = vadd.f32 0.0, %v835
    %v837 = vpop.f32.mrb[0].mxu0
    %v838 = vpop.f32.mrb[0].mxu0
    %v839 = vpop.f32.mrb[0].mxu0
    %840 = vdwg.mxu0
    %v841 = vmul.f32 %v836, 0.25
    %v842 = vadd.f32 %v841, %v176
    %v843 = vsel %vm315, %v842, -inf
    %844 = vmax.xlane.f32.xlu0 %v843
    %v845 = vpop.xlane.xlu0 %844
    %v846 = vsub.f32 %v842, %v845
    %v847 = vmul.f32 %v846, 1.442695
    %v848 = vpow.pop %v847
    %v849 = vsel %vm315, %v848, 0.0
    %850 = vadd.xlane.f32.xlu0 %v849
    %v851 = vpop.xlane.xlu0 %850
    %v852 = vrcp.pop %v851
    %v853 = vmul.f32 %v848, %v852
    %v854 = vpack.c.bf16 %v853, %v853
    %855 = vrot.lane.b32.xlu0 %v404, 80
    %v856 = vpop.permute.xlu0 %855
    %v858 = vsel %vm315, %v854, 0
    %v861 = vsel %vm408, %v856, 0
    %863 = vmatprep.subr.bf16.mxu0 0
    %864 = vmatpush1.bf16.msra.mxu0 %v861
    %865 = vmatprep.subr.bf16.mxu0 0
    %866 = vmatpush1.bf16.msra.mxu0 0
    %867 = vmatprep.subr.bf16.mxu0 0
    %868 = vmatpush1.bf16.msra.mxu0 0
    %869 = vmatprep.subr.bf16.mxu0 0
    %870 = vmatpush1.bf16.msra.mxu0 0
    %871 = vmatprep.subr.bf16.mxu0 0
    %872 = vmatpush1.bf16.msra.mxu0 0
    %873 = vmatprep.subr.bf16.mxu0 0
    %874 = vmatpush1.bf16.msra.mxu0 0
    %875 = vmatprep.subr.bf16.mxu0 0
    %876 = vmatpush1.bf16.msra.mxu0 0
    %877 = vmatprep.subr.bf16.mxu0 0
    %878 = vmatpush1.bf16.msra.mxu0 0
    %879 = vmatprep.subr.bf16.mxu0 0
    %880 = vmatpush1.bf16.msra.mxu0 0
    %881 = vmatprep.subr.bf16.mxu0 0
    %882 = vmatpush1.bf16.msra.mxu0 0
    %883 = vmatprep.subr.bf16.mxu0 0
    %884 = vmatpush1.bf16.msra.mxu0 0
    %885 = vmatprep.subr.bf16.mxu0 0
    %886 = vmatpush1.bf16.msra.mxu0 0
    %887 = vmatprep.subr.bf16.mxu0 0
    %888 = vmatpush1.bf16.msra.mxu0 0
    %889 = vmatprep.subr.bf16.mxu0 0
    %890 = vmatpush1.bf16.msra.mxu0 0
    %891 = vmatprep.subr.bf16.mxu0 0
    %892 = vmatpush1.bf16.msra.mxu0 0
    %893 = vmatprep.subr.bf16.mxu0 0
    %894 = vmatpush1.bf16.msra.mxu0 0
    %895 = vmatprep.mubr.bf16.mxu0 0
    %896 = vmatmul.mubr.bf16.gmra.mrb[0].mxu0 %v858
    %v897 = vpop.f32.mrb[0].mxu0
    %v898 = vadd.f32 0.0, %v897
    %v899 = vpop.f32.mrb[0].mxu0
    %v900 = vpop.f32.mrb[0].mxu0
    %v901 = vpop.f32.mrb[0].mxu0
    %902 = vdwg.mxu0
    %904 = vrot.lane.b32.xlu0 %v598, 16
    %v905 = vpop.permute.xlu0 %904
    %908 = vrot.lane.b32.xlu0 %v748, 32
    %v909 = vpop.permute.xlu0 %908
    %912 = vrot.lane.b32.xlu0 %v898, 48
    %v913 = vpop.permute.xlu0 %912
    %v915 = vsel %vm343, %v447, %v905
    %vm916 = vcmask 261120
    %v917 = vsel %vm916, %v915, %v909
    %vm918 = vcmask 392192
    %v919 = vsel %vm918, %v917, %v913
    %v920 = vsub.f32 0.0, %v302
    %922 = vrot.lane.b32.xlu0 %v920, 120
    %v923 = vpop.permute.xlu0 %922
    %926 = vrot.lane.b32.xlu0 %v302, 8
    %v927 = vpop.permute.xlu0 %926
    %v929 = vsel %vm315, %v923, %v927
    %v930 = vmul.f32 %v302, %v182
    %v931 = vmul.f32 %v929, %v183
    %v932 = vadd.f32 %v930, %v931
    %933 = vrot.lane.b32.xlu0 %v920, 56
    %v934 = vpop.permute.xlu0 %933
    %936 = vrot.lane.b32.xlu0 %v302, 72
    %v937 = vpop.permute.xlu0 %936
    %v939 = vsel %vm315, %v934, %v937
    %v940 = vmul.f32 %v302, %v329
    %v941 = vmul.f32 %v939, %v183
    %943 = vrot.lane.b32.xlu0 %v941, 64
    %v944 = vpop.permute.xlu0 %943
    %v946 = vadd.f32 %v940, %v944
    %v947 = vpack.c.bf16 %v932, %v932
    %v948 = vpack.c.bf16 %v946, %v946
    %950 = vrot.lane.b32.xlu0 %v948, 64
    %v951 = vpop.permute.xlu0 %950
    %v953 = vsel %vm343, %v947, 0
    %v956 = vsel %vm343, %v951, 0
    %958 = vmatprep.subr.bf16.mxu0 0
    %959 = vmatpush1.bf16.xpose.msra.mxu0 %v956
    %960 = vmatprep.subr.bf16.mxu0 0
    %961 = vmatpush1.bf16.xpose.msra.mxu0 0
    %962 = vmatprep.subr.bf16.mxu0 0
    %963 = vmatpush1.bf16.xpose.msra.mxu0 0
    %964 = vmatprep.subr.bf16.mxu0 0
    %965 = vmatpush1.bf16.xpose.msra.mxu0 0
    %966 = vmatprep.subr.bf16.mxu0 0
    %967 = vmatpush1.bf16.xpose.msra.mxu0 0
    %968 = vmatprep.subr.bf16.mxu0 0
    %969 = vmatpush1.bf16.xpose.msra.mxu0 0
    %970 = vmatprep.subr.bf16.mxu0 0
    %971 = vmatpush1.bf16.xpose.msra.mxu0 0
    %972 = vmatprep.subr.bf16.mxu0 0
    %973 = vmatpush1.bf16.xpose.msra.mxu0 0
    %974 = vmatprep.subr.bf16.mxu0 0
    %975 = vmatpush1.bf16.xpose.msra.mxu0 0
    %976 = vmatprep.subr.bf16.mxu0 0
    %977 = vmatpush1.bf16.xpose.msra.mxu0 0
    %978 = vmatprep.subr.bf16.mxu0 0
    %979 = vmatpush1.bf16.xpose.msra.mxu0 0
    %980 = vmatprep.subr.bf16.mxu0 0
    %981 = vmatpush1.bf16.xpose.msra.mxu0 0
    %982 = vmatprep.subr.bf16.mxu0 0
    %983 = vmatpush1.bf16.xpose.msra.mxu0 0
    %984 = vmatprep.subr.bf16.mxu0 0
    %985 = vmatpush1.bf16.xpose.msra.mxu0 0
    %986 = vmatprep.subr.bf16.mxu0 0
    %987 = vmatpush1.bf16.xpose.msra.mxu0 0
    %988 = vmatprep.subr.bf16.mxu0 0
    %989 = vmatpush1.bf16.xpose.msra.mxu0 0
    %990 = vmatprep.mubr.bf16.mxu0 0
    %991 = vmatmul.mubr.bf16.gmra.mrb[0].mxu0 %v953
    %v992 = vpop.f32.mrb[0].mxu0
    %v993 = vadd.f32 0.0, %v992
    %v994 = vpop.f32.mrb[0].mxu0
    %v995 = vpop.f32.mrb[0].mxu0
    %v996 = vpop.f32.mrb[0].mxu0
    %997 = vdwg.mxu0
    %v998 = vmul.f32 %v993, 0.25
    %v999 = vadd.f32 %v998, %v181
    %v1000 = vsel %vm315, %v999, -inf
    %1001 = vmax.xlane.f32.xlu0 %v1000
    %v1002 = vpop.xlane.xlu0 %1001
    %v1003 = vsub.f32 %v999, %v1002
    %v1004 = vmul.f32 %v1003, 1.442695
    %v1005 = vpow.pop %v1004
    %v1006 = vsel %vm315, %v1005, 0.0
    %1007 = vadd.xlane.f32.xlu0 %v1006
    %v1008 = vpop.xlane.xlu0 %1007
    %v1009 = vrcp.pop %v1008
    %v1010 = vmul.f32 %v1005, %v1009
    %v1011 = vpack.c.bf16 %v1010, %v1010
    %v1012 = vpack.c.bf16 %v304, %v304
    %v1014 = vsel %vm315, %v1011, 0
    %v1017 = vsel %vm408, %v1012, 0
    %1019 = vmatprep.subr.bf16.mxu0 0
    %1020 = vmatpush1.bf16.msra.mxu0 %v1017
    %1021 = vmatprep.subr.bf16.mxu0 0
    %1022 = vmatpush1.bf16.msra.mxu0 0
    %1023 = vmatprep.subr.bf16.mxu0 0
    %1024 = vmatpush1.bf16.msra.mxu0 0
    %1025 = vmatprep.subr.bf16.mxu0 0
    %1026 = vmatpush1.bf16.msra.mxu0 0
    %1027 = vmatprep.subr.bf16.mxu0 0
    %1028 = vmatpush1.bf16.msra.mxu0 0
    %1029 = vmatprep.subr.bf16.mxu0 0
    %1030 = vmatpush1.bf16.msra.mxu0 0
    %1031 = vmatprep.subr.bf16.mxu0 0
    %1032 = vmatpush1.bf16.msra.mxu0 0
    %1033 = vmatprep.subr.bf16.mxu0 0
    %1034 = vmatpush1.bf16.msra.mxu0 0
    %1035 = vmatprep.subr.bf16.mxu0 0
    %1036 = vmatpush1.bf16.msra.mxu0 0
    %1037 = vmatprep.subr.bf16.mxu0 0
    %1038 = vmatpush1.bf16.msra.mxu0 0
    %1039 = vmatprep.subr.bf16.mxu0 0
    %1040 = vmatpush1.bf16.msra.mxu0 0
    %1041 = vmatprep.subr.bf16.mxu0 0
    %1042 = vmatpush1.bf16.msra.mxu0 0
    %1043 = vmatprep.subr.bf16.mxu0 0
    %1044 = vmatpush1.bf16.msra.mxu0 0
    %1045 = vmatprep.subr.bf16.mxu0 0
    %1046 = vmatpush1.bf16.msra.mxu0 0
    %1047 = vmatprep.subr.bf16.mxu0 0
    %1048 = vmatpush1.bf16.msra.mxu0 0
    %1049 = vmatprep.subr.bf16.mxu0 0
    %1050 = vmatpush1.bf16.msra.mxu0 0
    %1051 = vmatprep.mubr.bf16.mxu0 0
    %1052 = vmatmul.mubr.bf16.gmra.mrb[0].mxu0 %v1014
    %v1053 = vpop.f32.mrb[0].mxu0
    %v1054 = vadd.f32 0.0, %v1053
    %v1055 = vpop.f32.mrb[0].mxu0
    %v1056 = vpop.f32.mrb[0].mxu0
    %v1057 = vpop.f32.mrb[0].mxu0
    %1058 = vdwg.mxu0
    %1059 = vrot.lane.b32.xlu0 %v920, 104
    %v1060 = vpop.permute.xlu0 %1059
    %1062 = vrot.lane.b32.xlu0 %v302, 120
    %v1063 = vpop.permute.xlu0 %1062
    %v1065 = vsel %vm315, %v1060, %v1063
    %v1066 = vmul.f32 %v302, %v460
    %v1067 = vmul.f32 %v1065, %v183
    %1069 = vrot.lane.b32.xlu0 %v1067, 16
    %v1070 = vpop.permute.xlu0 %1069
    %v1072 = vadd.f32 %v1066, %v1070
    %1073 = vrot.lane.b32.xlu0 %v920, 40
    %v1074 = vpop.permute.xlu0 %1073
    %1076 = vrot.lane.b32.xlu0 %v302, 56
    %v1077 = vpop.permute.xlu0 %1076
    %v1079 = vsel %vm315, %v1074, %v1077
    %v1080 = vmul.f32 %v302, %v477
    %v1081 = vmul.f32 %v1079, %v183
    %1083 = vrot.lane.b32.xlu0 %v1081, 80
    %v1084 = vpop.permute.xlu0 %1083
    %v1086 = vadd.f32 %v1080, %v1084
    %v1087 = vpack.c.bf16 %v1072, %v1072
    %v1088 = vpack.c.bf16 %v1086, %v1086
    %1090 = vrot.lane.b32.xlu0 %v1087, 112
    %v1091 = vpop.permute.xlu0 %1090
    %1093 = vrot.lane.b32.xlu0 %v1088, 48
    %v1094 = vpop.permute.xlu0 %1093
    %v1096 = vsel %vm343, %v1091, 0
    %v1099 = vsel %vm343, %v1094, 0
    %1101 = vmatprep.subr.bf16.mxu0 0
    %1102 = vmatpush1.bf16.xpose.msra.mxu0 %v1099
    %1103 = vmatprep.subr.bf16.mxu0 0
    %1104 = vmatpush1.bf16.xpose.msra.mxu0 0
    %1105 = vmatprep.subr.bf16.mxu0 0
    %1106 = vmatpush1.bf16.xpose.msra.mxu0 0
    %1107 = vmatprep.subr.bf16.mxu0 0
    %1108 = vmatpush1.bf16.xpose.msra.mxu0 0
    %1109 = vmatprep.subr.bf16.mxu0 0
    %1110 = vmatpush1.bf16.xpose.msra.mxu0 0
    %1111 = vmatprep.subr.bf16.mxu0 0
    %1112 = vmatpush1.bf16.xpose.msra.mxu0 0
    %1113 = vmatprep.subr.bf16.mxu0 0
    %1114 = vmatpush1.bf16.xpose.msra.mxu0 0
    %1115 = vmatprep.subr.bf16.mxu0 0
    %1116 = vmatpush1.bf16.xpose.msra.mxu0 0
    %1117 = vmatprep.subr.bf16.mxu0 0
    %1118 = vmatpush1.bf16.xpose.msra.mxu0 0
    %1119 = vmatprep.subr.bf16.mxu0 0
    %1120 = vmatpush1.bf16.xpose.msra.mxu0 0
    %1121 = vmatprep.subr.bf16.mxu0 0
    %1122 = vmatpush1.bf16.xpose.msra.mxu0 0
    %1123 = vmatprep.subr.bf16.mxu0 0
    %1124 = vmatpush1.bf16.xpose.msra.mxu0 0
    %1125 = vmatprep.subr.bf16.mxu0 0
    %1126 = vmatpush1.bf16.xpose.msra.mxu0 0
    %1127 = vmatprep.subr.bf16.mxu0 0
    %1128 = vmatpush1.bf16.xpose.msra.mxu0 0
    %1129 = vmatprep.subr.bf16.mxu0 0
    %1130 = vmatpush1.bf16.xpose.msra.mxu0 0
    %1131 = vmatprep.subr.bf16.mxu0 0
    %1132 = vmatpush1.bf16.xpose.msra.mxu0 0
    %1133 = vmatprep.mubr.bf16.mxu0 0
    %1134 = vmatmul.mubr.bf16.gmra.mrb[0].mxu0 %v1096
    %v1135 = vpop.f32.mrb[0].mxu0
    %v1136 = vadd.f32 0.0, %v1135
    %v1137 = vpop.f32.mrb[0].mxu0
    %v1138 = vpop.f32.mrb[0].mxu0
    %v1139 = vpop.f32.mrb[0].mxu0
    %1140 = vdwg.mxu0
    %v1141 = vmul.f32 %v1136, 0.25
    %v1142 = vadd.f32 %v1141, %v181
    %v1143 = vsel %vm315, %v1142, -inf
    %1144 = vmax.xlane.f32.xlu0 %v1143
    %v1145 = vpop.xlane.xlu0 %1144
    %v1146 = vsub.f32 %v1142, %v1145
    %v1147 = vmul.f32 %v1146, 1.442695
    %v1148 = vpow.pop %v1147
    %v1149 = vsel %vm315, %v1148, 0.0
    %1150 = vadd.xlane.f32.xlu0 %v1149
    %v1151 = vpop.xlane.xlu0 %1150
    %v1152 = vrcp.pop %v1151
    %v1153 = vmul.f32 %v1148, %v1152
    %v1154 = vpack.c.bf16 %v1153, %v1153
    %1156 = vrot.lane.b32.xlu0 %v1012, 112
    %v1157 = vpop.permute.xlu0 %1156
    %v1159 = vsel %vm315, %v1154, 0
    %v1162 = vsel %vm408, %v1157, 0
    %1164 = vmatprep.subr.bf16.mxu0 0
    %1165 = vmatpush1.bf16.msra.mxu0 %v1162
    %1166 = vmatprep.subr.bf16.mxu0 0
    %1167 = vmatpush1.bf16.msra.mxu0 0
    %1168 = vmatprep.subr.bf16.mxu0 0
    %1169 = vmatpush1.bf16.msra.mxu0 0
    %1170 = vmatprep.subr.bf16.mxu0 0
    %1171 = vmatpush1.bf16.msra.mxu0 0
    %1172 = vmatprep.subr.bf16.mxu0 0
    %1173 = vmatpush1.bf16.msra.mxu0 0
    %1174 = vmatprep.subr.bf16.mxu0 0
    %1175 = vmatpush1.bf16.msra.mxu0 0
    %1176 = vmatprep.subr.bf16.mxu0 0
    %1177 = vmatpush1.bf16.msra.mxu0 0
    %1178 = vmatprep.subr.bf16.mxu0 0
    %1179 = vmatpush1.bf16.msra.mxu0 0
    %1180 = vmatprep.subr.bf16.mxu0 0
    %1181 = vmatpush1.bf16.msra.mxu0 0
    %1182 = vmatprep.subr.bf16.mxu0 0
    %1183 = vmatpush1.bf16.msra.mxu0 0
    %1184 = vmatprep.subr.bf16.mxu0 0
    %1185 = vmatpush1.bf16.msra.mxu0 0
    %1186 = vmatprep.subr.bf16.mxu0 0
    %1187 = vmatpush1.bf16.msra.mxu0 0
    %1188 = vmatprep.subr.bf16.mxu0 0
    %1189 = vmatpush1.bf16.msra.mxu0 0
    %1190 = vmatprep.subr.bf16.mxu0 0
    %1191 = vmatpush1.bf16.msra.mxu0 0
    %1192 = vmatprep.subr.bf16.mxu0 0
    %1193 = vmatpush1.bf16.msra.mxu0 0
    %1194 = vmatprep.subr.bf16.mxu0 0
    %1195 = vmatpush1.bf16.msra.mxu0 0
    %1196 = vmatprep.mubr.bf16.mxu0 0
    %1197 = vmatmul.mubr.bf16.gmra.mrb[0].mxu0 %v1159
    %v1198 = vpop.f32.mrb[0].mxu0
    %v1199 = vadd.f32 0.0, %v1198
    %v1200 = vpop.f32.mrb[0].mxu0
    %v1201 = vpop.f32.mrb[0].mxu0
    %v1202 = vpop.f32.mrb[0].mxu0
    %1203 = vdwg.mxu0
    %1204 = vrot.lane.b32.xlu0 %v920, 88
    %v1205 = vpop.permute.xlu0 %1204
    %1207 = vrot.lane.b32.xlu0 %v302, 104
    %v1208 = vpop.permute.xlu0 %1207
    %v1210 = vsel %vm315, %v1205, %v1208
    %v1211 = vmul.f32 %v302, %v611
    %v1212 = vmul.f32 %v1210, %v183
    %1214 = vrot.lane.b32.xlu0 %v1212, 32
    %v1215 = vpop.permute.xlu0 %1214
    %v1217 = vadd.f32 %v1211, %v1215
    %1218 = vrot.lane.b32.xlu0 %v920, 24
    %v1219 = vpop.permute.xlu0 %1218
    %1221 = vrot.lane.b32.xlu0 %v302, 40
    %v1222 = vpop.permute.xlu0 %1221
    %v1224 = vsel %vm315, %v1219, %v1222
    %v1225 = vmul.f32 %v302, %v628
    %v1226 = vmul.f32 %v1224, %v183
    %1228 = vrot.lane.b32.xlu0 %v1226, 96
    %v1229 = vpop.permute.xlu0 %1228
    %v1231 = vadd.f32 %v1225, %v1229
    %v1232 = vpack.c.bf16 %v1217, %v1217
    %v1233 = vpack.c.bf16 %v1231, %v1231
    %1235 = vrot.lane.b32.xlu0 %v1232, 96
    %v1236 = vpop.permute.xlu0 %1235
    %1238 = vrot.lane.b32.xlu0 %v1233, 32
    %v1239 = vpop.permute.xlu0 %1238
    %v1241 = vsel %vm343, %v1236, 0
    %v1244 = vsel %vm343, %v1239, 0
    %1246 = vmatprep.subr.bf16.mxu0 0
    %1247 = vmatpush1.bf16.xpose.msra.mxu0 %v1244
    %1248 = vmatprep.subr.bf16.mxu0 0
    %1249 = vmatpush1.bf16.xpose.msra.mxu0 0
    %1250 = vmatprep.subr.bf16.mxu0 0
    %1251 = vmatpush1.bf16.xpose.msra.mxu0 0
    %1252 = vmatprep.subr.bf16.mxu0 0
    %1253 = vmatpush1.bf16.xpose.msra.mxu0 0
    %1254 = vmatprep.subr.bf16.mxu0 0
    %1255 = vmatpush1.bf16.xpose.msra.mxu0 0
    %1256 = vmatprep.subr.bf16.mxu0 0
    %1257 = vmatpush1.bf16.xpose.msra.mxu0 0
    %1258 = vmatprep.subr.bf16.mxu0 0
    %1259 = vmatpush1.bf16.xpose.msra.mxu0 0
    %1260 = vmatprep.subr.bf16.mxu0 0
    %1261 = vmatpush1.bf16.xpose.msra.mxu0 0
    %1262 = vmatprep.subr.bf16.mxu0 0
    %1263 = vmatpush1.bf16.xpose.msra.mxu0 0
    %1264 = vmatprep.subr.bf16.mxu0 0
    %1265 = vmatpush1.bf16.xpose.msra.mxu0 0
    %1266 = vmatprep.subr.bf16.mxu0 0
    %1267 = vmatpush1.bf16.xpose.msra.mxu0 0
    %1268 = vmatprep.subr.bf16.mxu0 0
    %1269 = vmatpush1.bf16.xpose.msra.mxu0 0
    %1270 = vmatprep.subr.bf16.mxu0 0
    %1271 = vmatpush1.bf16.xpose.msra.mxu0 0
    %1272 = vmatprep.subr.bf16.mxu0 0
    %1273 = vmatpush1.bf16.xpose.msra.mxu0 0
    %1274 = vmatprep.subr.bf16.mxu0 0
    %1275 = vmatpush1.bf16.xpose.msra.mxu0 0
    %1276 = vmatprep.subr.bf16.mxu0 0
    %1277 = vmatpush1.bf16.xpose.msra.mxu0 0
    %1278 = vmatprep.mubr.bf16.mxu0 0
    %1279 = vmatmul.mubr.bf16.gmra.mrb[0].mxu0 %v1241
    %v1280 = vpop.f32.mrb[0].mxu0
    %v1281 = vadd.f32 0.0, %v1280
    %v1282 = vpop.f32.mrb[0].mxu0
    %v1283 = vpop.f32.mrb[0].mxu0
    %v1284 = vpop.f32.mrb[0].mxu0
    %1285 = vdwg.mxu0
    %v1286 = vmul.f32 %v1281, 0.25
    %v1287 = vadd.f32 %v1286, %v181
    %v1288 = vsel %vm315, %v1287, -inf
    %1289 = vmax.xlane.f32.xlu0 %v1288
    %v1290 = vpop.xlane.xlu0 %1289
    %v1291 = vsub.f32 %v1287, %v1290
    %v1292 = vmul.f32 %v1291, 1.442695
    %v1293 = vpow.pop %v1292
    %v1294 = vsel %vm315, %v1293, 0.0
    %1295 = vadd.xlane.f32.xlu0 %v1294
    %v1296 = vpop.xlane.xlu0 %1295
    %v1297 = vrcp.pop %v1296
    %v1298 = vmul.f32 %v1293, %v1297
    %v1299 = vpack.c.bf16 %v1298, %v1298
    %1300 = vrot.lane.b32.xlu0 %v1012, 96
    %v1301 = vpop.permute.xlu0 %1300
    %v1303 = vsel %vm315, %v1299, 0
    %v1306 = vsel %vm408, %v1301, 0
    %1308 = vmatprep.subr.bf16.mxu0 0
    %1309 = vmatpush1.bf16.msra.mxu0 %v1306
    %1310 = vmatprep.subr.bf16.mxu0 0
    %1311 = vmatpush1.bf16.msra.mxu0 0
    %1312 = vmatprep.subr.bf16.mxu0 0
    %1313 = vmatpush1.bf16.msra.mxu0 0
    %1314 = vmatprep.subr.bf16.mxu0 0
    %1315 = vmatpush1.bf16.msra.mxu0 0
    %1316 = vmatprep.subr.bf16.mxu0 0
    %1317 = vmatpush1.bf16.msra.mxu0 0
    %1318 = vmatprep.subr.bf16.mxu0 0
    %1319 = vmatpush1.bf16.msra.mxu0 0
    %1320 = vmatprep.subr.bf16.mxu0 0
    %1321 = vmatpush1.bf16.msra.mxu0 0
    %1322 = vmatprep.subr.bf16.mxu0 0
    %1323 = vmatpush1.bf16.msra.mxu0 0
    %1324 = vmatprep.subr.bf16.mxu0 0
    %1325 = vmatpush1.bf16.msra.mxu0 0
    %1326 = vmatprep.subr.bf16.mxu0 0
    %1327 = vmatpush1.bf16.msra.mxu0 0
    %1328 = vmatprep.subr.bf16.mxu0 0
    %1329 = vmatpush1.bf16.msra.mxu0 0
    %1330 = vmatprep.subr.bf16.mxu0 0
    %1331 = vmatpush1.bf16.msra.mxu0 0
    %1332 = vmatprep.subr.bf16.mxu0 0
    %1333 = vmatpush1.bf16.msra.mxu0 0
    %1334 = vmatprep.subr.bf16.mxu0 0
    %1335 = vmatpush1.bf16.msra.mxu0 0
    %1336 = vmatprep.subr.bf16.mxu0 0
    %1337 = vmatpush1.bf16.msra.mxu0 0
    %1338 = vmatprep.subr.bf16.mxu0 0
    %1339 = vmatpush1.bf16.msra.mxu0 0
    %1340 = vmatprep.mubr.bf16.mxu0 0
    %1341 = vmatmul.mubr.bf16.gmra.mrb[0].mxu0 %v1303
    %v1342 = vpop.f32.mrb[0].mxu0
    %v1343 = vadd.f32 0.0, %v1342
    %v1344 = vpop.f32.mrb[0].mxu0
    %v1345 = vpop.f32.mrb[0].mxu0
    %v1346 = vpop.f32.mrb[0].mxu0
    %1347 = vdwg.mxu0
    %1348 = vrot.lane.b32.xlu0 %v920, 72
    %v1349 = vpop.permute.xlu0 %1348
    %1351 = vrot.lane.b32.xlu0 %v302, 88
    %v1352 = vpop.permute.xlu0 %1351
    %v1354 = vsel %vm315, %v1349, %v1352
    %v1355 = vmul.f32 %v302, %v761
    %v1356 = vmul.f32 %v1354, %v183
    %1358 = vrot.lane.b32.xlu0 %v1356, 48
    %v1359 = vpop.permute.xlu0 %1358
    %v1361 = vadd.f32 %v1355, %v1359
    %1362 = vrot.lane.b32.xlu0 %v920, 8
    %v1363 = vpop.permute.xlu0 %1362
    %1365 = vrot.lane.b32.xlu0 %v302, 24
    %v1366 = vpop.permute.xlu0 %1365
    %v1368 = vsel %vm315, %v1363, %v1366
    %v1369 = vmul.f32 %v302, %v778
    %v1370 = vmul.f32 %v1368, %v183
    %1372 = vrot.lane.b32.xlu0 %v1370, 112
    %v1373 = vpop.permute.xlu0 %1372
    %v1375 = vadd.f32 %v1369, %v1373
    %v1376 = vpack.c.bf16 %v1361, %v1361
    %v1377 = vpack.c.bf16 %v1375, %v1375
    %1379 = vrot.lane.b32.xlu0 %v1376, 80
    %v1380 = vpop.permute.xlu0 %1379
    %1382 = vrot.lane.b32.xlu0 %v1377, 16
    %v1383 = vpop.permute.xlu0 %1382
    %v1385 = vsel %vm343, %v1380, 0
    %v1388 = vsel %vm343, %v1383, 0
    %1390 = vmatprep.subr.bf16.mxu0 0
    %1391 = vmatpush1.bf16.xpose.msra.mxu0 %v1388
    %1392 = vmatprep.subr.bf16.mxu0 0
    %1393 = vmatpush1.bf16.xpose.msra.mxu0 0
    %1394 = vmatprep.subr.bf16.mxu0 0
    %1395 = vmatpush1.bf16.xpose.msra.mxu0 0
    %1396 = vmatprep.subr.bf16.mxu0 0
    %1397 = vmatpush1.bf16.xpose.msra.mxu0 0
    %1398 = vmatprep.subr.bf16.mxu0 0
    %1399 = vmatpush1.bf16.xpose.msra.mxu0 0
    %1400 = vmatprep.subr.bf16.mxu0 0
    %1401 = vmatpush1.bf16.xpose.msra.mxu0 0
    %1402 = vmatprep.subr.bf16.mxu0 0
    %1403 = vmatpush1.bf16.xpose.msra.mxu0 0
    %1404 = vmatprep.subr.bf16.mxu0 0
    %1405 = vmatpush1.bf16.xpose.msra.mxu0 0
    %1406 = vmatprep.subr.bf16.mxu0 0
    %1407 = vmatpush1.bf16.xpose.msra.mxu0 0
    %1408 = vmatprep.subr.bf16.mxu0 0
    %1409 = vmatpush1.bf16.xpose.msra.mxu0 0
    %1410 = vmatprep.subr.bf16.mxu0 0
    %1411 = vmatpush1.bf16.xpose.msra.mxu0 0
    %1412 = vmatprep.subr.bf16.mxu0 0
    %1413 = vmatpush1.bf16.xpose.msra.mxu0 0
    %1414 = vmatprep.subr.bf16.mxu0 0
    %1415 = vmatpush1.bf16.xpose.msra.mxu0 0
    %1416 = vmatprep.subr.bf16.mxu0 0
    %1417 = vmatpush1.bf16.xpose.msra.mxu0 0
    %1418 = vmatprep.subr.bf16.mxu0 0
    %1419 = vmatpush1.bf16.xpose.msra.mxu0 0
    %1420 = vmatprep.subr.bf16.mxu0 0
    %1421 = vmatpush1.bf16.xpose.msra.mxu0 0
    %1422 = vmatprep.mubr.bf16.mxu0 0
    %1423 = vmatmul.mubr.bf16.gmra.mrb[0].mxu0 %v1385
    %v1424 = vpop.f32.mrb[0].mxu0
    %v1425 = vadd.f32 0.0, %v1424
    %v1426 = vpop.f32.mrb[0].mxu0
    %v1427 = vpop.f32.mrb[0].mxu0
    %v1428 = vpop.f32.mrb[0].mxu0
    %1429 = vdwg.mxu0
    %v1430 = vmul.f32 %v1425, 0.25
    %v1431 = vadd.f32 %v1430, %v181
    %v1432 = vsel %vm315, %v1431, -inf
    %1433 = vmax.xlane.f32.xlu0 %v1432
    %v1434 = vpop.xlane.xlu0 %1433
    %v1435 = vsub.f32 %v1431, %v1434
    %v1436 = vmul.f32 %v1435, 1.442695
    %v1437 = vpow.pop %v1436
    %v1438 = vsel %vm315, %v1437, 0.0
    %1439 = vadd.xlane.f32.xlu0 %v1438
    %v1440 = vpop.xlane.xlu0 %1439
    %v1441 = vrcp.pop %v1440
    %v1442 = vmul.f32 %v1437, %v1441
    %v1443 = vpack.c.bf16 %v1442, %v1442
    %1444 = vrot.lane.b32.xlu0 %v1012, 80
    %v1445 = vpop.permute.xlu0 %1444
    %v1447 = vsel %vm315, %v1443, 0
    %v1450 = vsel %vm408, %v1445, 0
    %1452 = vmatprep.subr.bf16.mxu0 0
    %1453 = vmatpush1.bf16.msra.mxu0 %v1450
    %1454 = vmatprep.subr.bf16.mxu0 0
    %1455 = vmatpush1.bf16.msra.mxu0 0
    %1456 = vmatprep.subr.bf16.mxu0 0
    %1457 = vmatpush1.bf16.msra.mxu0 0
    %1458 = vmatprep.subr.bf16.mxu0 0
    %1459 = vmatpush1.bf16.msra.mxu0 0
    %1460 = vmatprep.subr.bf16.mxu0 0
    %1461 = vmatpush1.bf16.msra.mxu0 0
    %1462 = vmatprep.subr.bf16.mxu0 0
    %1463 = vmatpush1.bf16.msra.mxu0 0
    %1464 = vmatprep.subr.bf16.mxu0 0
    %1465 = vmatpush1.bf16.msra.mxu0 0
    %1466 = vmatprep.subr.bf16.mxu0 0
    %1467 = vmatpush1.bf16.msra.mxu0 0
    %1468 = vmatprep.subr.bf16.mxu0 0
    %1469 = vmatpush1.bf16.msra.mxu0 0
    %1470 = vmatprep.subr.bf16.mxu0 0
    %1471 = vmatpush1.bf16.msra.mxu0 0
    %1472 = vmatprep.subr.bf16.mxu0 0
    %1473 = vmatpush1.bf16.msra.mxu0 0
    %1474 = vmatprep.subr.bf16.mxu0 0
    %1475 = vmatpush1.bf16.msra.mxu0 0
    %1476 = vmatprep.subr.bf16.mxu0 0
    %1477 = vmatpush1.bf16.msra.mxu0 0
    %1478 = vmatprep.subr.bf16.mxu0 0
    %1479 = vmatpush1.bf16.msra.mxu0 0
    %1480 = vmatprep.subr.bf16.mxu0 0
    %1481 = vmatpush1.bf16.msra.mxu0 0
    %1482 = vmatprep.subr.bf16.mxu0 0
    %1483 = vmatpush1.bf16.msra.mxu0 0
    %1484 = vmatprep.mubr.bf16.mxu0 0
    %1485 = vmatmul.mubr.bf16.gmra.mrb[0].mxu0 %v1447
    %v1486 = vpop.f32.mrb[0].mxu0
    %v1487 = vadd.f32 0.0, %v1486
    %v1488 = vpop.f32.mrb[0].mxu0
    %v1489 = vpop.f32.mrb[0].mxu0
    %v1490 = vpop.f32.mrb[0].mxu0
    %1491 = vdwg.mxu0
    %1493 = vrot.lane.b32.xlu0 %v1199, 16
    %v1494 = vpop.permute.xlu0 %1493
    %1497 = vrot.lane.b32.xlu0 %v1343, 32
    %v1498 = vpop.permute.xlu0 %1497
    %1501 = vrot.lane.b32.xlu0 %v1487, 48
    %v1502 = vpop.permute.xlu0 %1501
    %v1504 = vsel %vm343, %v1054, %v1494
    %v1505 = vsel %vm916, %v1504, %v1498
    %v1506 = vsel %vm918, %v1505, %v1502
    %v1507 = vpack.c.bf16 %v1506, %v919
    %v1508 = vld [vmem:[%s6] sm:$0xf]
    %v1509 = vld [vmem:[%s6 + $0x4] sm:$0xf]
    %v1510 = vld [vmem:[%s6 + $0x8] sm:$0xf]
    %v1511 = vld [vmem:[%s6 + $0xc] sm:$0xf]
    %v1512 = vld [vmem:[%s6 + $0x10] sm:$0xf]
    %v1513 = vld [vmem:[%s6 + $0x14] sm:$0xf]
    %v1514 = vld [vmem:[%s6 + $0x18] sm:$0xf]
    %v1515 = vld [vmem:[%s6 + $0x1c] sm:$0xf]
    %v1524 = vunpack.c.l.b16 %v1508
    %v1525 = vunpack.c.l.b16 %v1509
    %v1526 = vunpack.c.l.b16 %v1510
    %v1527 = vunpack.c.l.b16 %v1511
    %v1528 = vunpack.c.l.b16 %v1512
    %v1529 = vunpack.c.l.b16 %v1513
    %v1530 = vunpack.c.l.b16 %v1514
    %v1531 = vunpack.c.l.b16 %v1515
    %v1532 = vpack.c.b16 %v1525, %v1524
    %v1533 = vpack.c.b16 %v1527, %v1526
    %v1534 = vpack.c.b16 %v1529, %v1528
    %v1535 = vpack.c.b16 %v1531, %v1530
    %v1541 = vsel %vm187, %v1507, 0
    %1543 = vmatprep.subr.bf16.mxu0 0
    %1544 = vmatpush1.bf16.msra.mxu0 %v1532
    %1545 = vmatprep.subr.bf16.mxu0 0
    %1546 = vmatpush1.bf16.msra.mxu0 %v1533
    %1547 = vmatprep.subr.bf16.mxu0 0
    %1548 = vmatpush1.bf16.msra.mxu0 %v1534
    %1549 = vmatprep.subr.bf16.mxu0 0
    %1550 = vmatpush1.bf16.msra.mxu0 %v1535
    %1551 = vmatprep.subr.bf16.mxu0 0
    %1552 = vmatpush1.bf16.msra.mxu0 0
    %1553 = vmatprep.subr.bf16.mxu0 0
    %1554 = vmatpush1.bf16.msra.mxu0 0
    %1555 = vmatprep.subr.bf16.mxu0 0
    %1556 = vmatpush1.bf16.msra.mxu0 0
    %1557 = vmatprep.subr.bf16.mxu0 0
    %1558 = vmatpush1.bf16.msra.mxu0 0
    %1559 = vmatprep.subr.bf16.mxu0 0
    %1560 = vmatpush1.bf16.msra.mxu0 0
    %1561 = vmatprep.subr.bf16.mxu0 0
    %1562 = vmatpush1.bf16.msra.mxu0 0
    %1563 = vmatprep.subr.bf16.mxu0 0
    %1564 = vmatpush1.bf16.msra.mxu0 0
    %1565 = vmatprep.subr.bf16.mxu0 0
    %1566 = vmatpush1.bf16.msra.mxu0 0
    %1567 = vmatprep.subr.bf16.mxu0 0
    %1568 = vmatpush1.bf16.msra.mxu0 0
    %1569 = vmatprep.subr.bf16.mxu0 0
    %1570 = vmatpush1.bf16.msra.mxu0 0
    %1571 = vmatprep.subr.bf16.mxu0 0
    %1572 = vmatpush1.bf16.msra.mxu0 0
    %1573 = vmatprep.subr.bf16.mxu0 0
    %1574 = vmatpush1.bf16.msra.mxu0 0
    %1575 = vmatprep.mubr.bf16.mxu0 0
    %1576 = vmatmul.mubr.bf16.gmra.mrb[0].mxu0 %v1541
    %v1577 = vpop.f32.mrb[0].mxu0
    %v1578 = vadd.f32 0.0, %v1577
    %v1579 = vpop.f32.mrb[0].mxu0
    %v1580 = vpop.f32.mrb[0].mxu0
    %v1581 = vadd.f32 0.0, %v1580
    %v1582 = vpop.f32.mrb[0].mxu0
    %1583 = vdwg.mxu0
    %v1584 = vadd.f32 %v159, %v1578
    %v1585 = vadd.f32 %v162, %v1581
    %v1586 = vld [vmem:[%s4] sm:$0x1]
    %v1587 = vmul.f32 %v1584, %v1584
    %v1588 = vmul.f32 %v1585, %v1585
    %v1589 = vsel %vm187, %v1587, 0.0
    %1590 = vadd.xlane.f32.xlu0 %v1589
    %v1591 = vpop.xlane.xlu0 %1590
    %v1592 = vsel %vm187, %v1588, 0.0
    %1593 = vadd.xlane.f32.xlu0 %v1592
    %v1594 = vpop.xlane.xlu0 %1593
    %v1595 = vmul.f32 %v1591, %v194
    %v1596 = vmul.f32 %v1594, %v194
    %v1597 = vadd.f32 %v1595, 1e-05
    %v1598 = vadd.f32 %v1596, 1e-05
    %v1599 = vrsqrt.pop %v1597
    %v1600 = vrsqrt.pop %v1598
    %v1601 = vmul.f32 %v1584, %v1599
    %v1602 = vmul.f32 %v1585, %v1600
    %v1604 = vlaneseq
    %v1605 = vshrl.u32 %v1604, 7
    %v1606 = vsub.s32 0, %v1605
    %v1607 = vrot.slane %v1586, %v1606
    %v1609 = vmul.f32 %v1601, %v1607
    %v1610 = vmul.f32 %v1602, %v1607
    %v1611 = vpack.c.bf16 %v1610, %v1609
    %v1612 = vld [vmem:[%s7] sm:$0xff]
    %v1613 = vld [vmem:[%s7 + $0x8] sm:$0xff]
    %v1614 = vld [vmem:[%s7 + $0x10] sm:$0xff]
    %v1615 = vld [vmem:[%s7 + $0x18] sm:$0xff]
    %v1616 = vld [vmem:[%s7 + $0x20] sm:$0xff]
    %v1617 = vld [vmem:[%s7 + $0x28] sm:$0xff]
    %v1618 = vld [vmem:[%s7 + $0x30] sm:$0xff]
    %v1619 = vld [vmem:[%s7 + $0x38] sm:$0xff]
    %v1628 = vunpack.c.l.b16 %v1612
    %v1629 = vunpack.c.h.b16 %v1612
    %v1630 = vunpack.c.l.b16 %v1613
    %v1631 = vunpack.c.h.b16 %v1613
    %v1632 = vunpack.c.l.b16 %v1614
    %v1633 = vunpack.c.h.b16 %v1614
    %v1634 = vunpack.c.l.b16 %v1615
    %v1635 = vunpack.c.h.b16 %v1615
    %v1636 = vunpack.c.l.b16 %v1616
    %v1637 = vunpack.c.h.b16 %v1616
    %v1638 = vunpack.c.l.b16 %v1617
    %v1639 = vunpack.c.h.b16 %v1617
    %v1640 = vunpack.c.l.b16 %v1618
    %v1641 = vunpack.c.h.b16 %v1618
    %v1642 = vunpack.c.l.b16 %v1619
    %v1643 = vunpack.c.h.b16 %v1619
    %v1644 = vpack.c.b16 %v1630, %v1628
    %v1645 = vpack.c.b16 %v1631, %v1629
    %v1646 = vpack.c.b16 %v1634, %v1632
    %v1647 = vpack.c.b16 %v1635, %v1633
    %v1648 = vpack.c.b16 %v1638, %v1636
    %v1649 = vpack.c.b16 %v1639, %v1637
    %v1650 = vpack.c.b16 %v1642, %v1640
    %v1651 = vpack.c.b16 %v1643, %v1641
    %v1661 = vsel %vm187, %v1611, 0
    %1663 = vmatprep.subr.bf16.mxu0 %v1645
    %1664 = vmatpush1.bf16.msra.mxu0 %v1644
    %1665 = vmatprep.subr.bf16.mxu0 %v1647
    %1666 = vmatpush1.bf16.msra.mxu0 %v1646
    %1667 = vmatprep.subr.bf16.mxu0 %v1649
    %1668 = vmatpush1.bf16.msra.mxu0 %v1648
    %1669 = vmatprep.subr.bf16.mxu0 %v1651
    %1670 = vmatpush1.bf16.msra.mxu0 %v1650
    %1671 = vmatprep.subr.bf16.mxu0 0
    %1672 = vmatpush1.bf16.msra.mxu0 0
    %1673 = vmatprep.subr.bf16.mxu0 0
    %1674 = vmatpush1.bf16.msra.mxu0 0
    %1675 = vmatprep.subr.bf16.mxu0 0
    %1676 = vmatpush1.bf16.msra.mxu0 0
    %1677 = vmatprep.subr.bf16.mxu0 0
    %1678 = vmatpush1.bf16.msra.mxu0 0
    %1679 = vmatprep.subr.bf16.mxu0 0
    %1680 = vmatpush1.bf16.msra.mxu0 0
    %1681 = vmatprep.subr.bf16.mxu0 0
    %1682 = vmatpush1.bf16.msra.mxu0 0
    %1683 = vmatprep.subr.bf16.mxu0 0
    %1684 = vmatpush1.bf16.msra.mxu0 0
    %1685 = vmatprep.subr.bf16.mxu0 0
    %1686 = vmatpush1.bf16.msra.mxu0 0
    %1687 = vmatprep.subr.bf16.mxu0 0
    %1688 = vmatpush1.bf16.msra.mxu0 0
    %1689 = vmatprep.subr.bf16.mxu0 0
    %1690 = vmatpush1.bf16.msra.mxu0 0
    %1691 = vmatprep.subr.bf16.mxu0 0
    %1692 = vmatpush1.bf16.msra.mxu0 0
    %1693 = vmatprep.subr.bf16.mxu0 0
    %1694 = vmatpush1.bf16.msra.mxu0 0
    %1695 = vmatprep.mubr.bf16.mxu0 0
    %1696 = vmatmul.mubr.bf16.gmra.mrb[0].mxu0 %v1661
    %v1697 = vpop.f32.mrb[0].mxu0
    %v1698 = vadd.f32 0.0, %v1697
    %v1699 = vpop.f32.mrb[0].mxu0
    %v1700 = vadd.f32 0.0, %v1699
    %v1701 = vpop.f32.mrb[0].mxu0
    %v1702 = vadd.f32 0.0, %v1701
    %v1703 = vpop.f32.mrb[0].mxu0
    %v1704 = vadd.f32 0.0, %v1703
    %1705 = vdwg.mxu0
    %v1706 = vxor.u32 %v1698, 2147483648
    %v1707 = vxor.u32 %v1702, 2147483648
    %v1708 = vmul.f32 %v1706, 1.442695
    %v1709 = vpow.pop %v1708
    %v1710 = vmul.f32 %v1707, 1.442695
    %v1711 = vpow.pop %v1710
    %v1712 = vadd.f32 %v1709, 1.0
    %v1713 = vadd.f32 %v1711, 1.0
    %v1714 = vrcp.pop %v1712
    %v1715 = vmul.f32 1.0, %v1714
    %v1716 = vrcp.pop %v1713
    %v1717 = vmul.f32 1.0, %v1716
    %v1718 = vmul.f32 %v1698, %v1715
    %v1719 = vmul.f32 %v1702, %v1717
    %v1720 = vmul.f32 %v1718, %v1700
    %v1721 = vmul.f32 %v1719, %v1704
    %v1722 = vpack.c.bf16 %v1721, %v1720
    %v1723 = vld [vmem:[%s8] sm:$0xf]
    %v1724 = vld [vmem:[%s8 + $0x4] sm:$0xf]
    %v1725 = vld [vmem:[%s8 + $0x8] sm:$0xf]
    %v1726 = vld [vmem:[%s8 + $0xc] sm:$0xf]
    %v1727 = vld [vmem:[%s8 + $0x10] sm:$0xf]
    %v1728 = vld [vmem:[%s8 + $0x14] sm:$0xf]
    %v1729 = vld [vmem:[%s8 + $0x18] sm:$0xf]
    %v1730 = vld [vmem:[%s8 + $0x1c] sm:$0xf]
    %v1731 = vld [vmem:[%s8 + $0x20] sm:$0xf]
    %v1732 = vld [vmem:[%s8 + $0x24] sm:$0xf]
    %v1733 = vld [vmem:[%s8 + $0x28] sm:$0xf]
    %v1734 = vld [vmem:[%s8 + $0x2c] sm:$0xf]
    %v1735 = vld [vmem:[%s8 + $0x30] sm:$0xf]
    %v1736 = vld [vmem:[%s8 + $0x34] sm:$0xf]
    %v1737 = vld [vmem:[%s8 + $0x38] sm:$0xf]
    %v1738 = vld [vmem:[%s8 + $0x3c] sm:$0xf]
    %v1755 = vunpack.c.l.b16 %v1723
    %v1756 = vunpack.c.l.b16 %v1724
    %v1757 = vunpack.c.l.b16 %v1725
    %v1758 = vunpack.c.l.b16 %v1726
    %v1759 = vunpack.c.l.b16 %v1727
    %v1760 = vunpack.c.l.b16 %v1728
    %v1761 = vunpack.c.l.b16 %v1729
    %v1762 = vunpack.c.l.b16 %v1730
    %v1763 = vunpack.c.l.b16 %v1731
    %v1764 = vunpack.c.l.b16 %v1732
    %v1765 = vunpack.c.l.b16 %v1733
    %v1766 = vunpack.c.l.b16 %v1734
    %v1767 = vunpack.c.l.b16 %v1735
    %v1768 = vunpack.c.l.b16 %v1736
    %v1769 = vunpack.c.l.b16 %v1737
    %v1770 = vunpack.c.l.b16 %v1738
    %v1771 = vpack.c.b16 %v1756, %v1755
    %v1772 = vpack.c.b16 %v1758, %v1757
    %v1773 = vpack.c.b16 %v1760, %v1759
    %v1774 = vpack.c.b16 %v1762, %v1761
    %v1775 = vpack.c.b16 %v1764, %v1763
    %v1776 = vpack.c.b16 %v1766, %v1765
    %v1777 = vpack.c.b16 %v1768, %v1767
    %v1778 = vpack.c.b16 %v1770, %v1769
    %1787 = vmatprep.subr.bf16.mxu0 0
    %1788 = vmatpush1.bf16.msra.mxu0 %v1771
    %1789 = vmatprep.subr.bf16.mxu0 0
    %1790 = vmatpush1.bf16.msra.mxu0 %v1772
    %1791 = vmatprep.subr.bf16.mxu0 0
    %1792 = vmatpush1.bf16.msra.mxu0 %v1773
    %1793 = vmatprep.subr.bf16.mxu0 0
    %1794 = vmatpush1.bf16.msra.mxu0 %v1774
    %1795 = vmatprep.subr.bf16.mxu0 0
    %1796 = vmatpush1.bf16.msra.mxu0 %v1775
    %1797 = vmatprep.subr.bf16.mxu0 0
    %1798 = vmatpush1.bf16.msra.mxu0 %v1776
    %1799 = vmatprep.subr.bf16.mxu0 0
    %1800 = vmatpush1.bf16.msra.mxu0 %v1777
    %1801 = vmatprep.subr.bf16.mxu0 0
    %1802 = vmatpush1.bf16.msra.mxu0 %v1778
    %1803 = vmatprep.subr.bf16.mxu0 0
    %1804 = vmatpush1.bf16.msra.mxu0 0
    %1805 = vmatprep.subr.bf16.mxu0 0
    %1806 = vmatpush1.bf16.msra.mxu0 0
    %1807 = vmatprep.subr.bf16.mxu0 0
    %1808 = vmatpush1.bf16.msra.mxu0 0
    %1809 = vmatprep.subr.bf16.mxu0 0
    %1810 = vmatpush1.bf16.msra.mxu0 0
    %1811 = vmatprep.subr.bf16.mxu0 0
    %1812 = vmatpush1.bf16.msra.mxu0 0
    %1813 = vmatprep.subr.bf16.mxu0 0
    %1814 = vmatpush1.bf16.msra.mxu0 0
    %1815 = vmatprep.subr.bf16.mxu0 0
    %1816 = vmatpush1.bf16.msra.mxu0 0
    %1817 = vmatprep.subr.bf16.mxu0 0
    %1818 = vmatpush1.bf16.msra.mxu0 0
    %1819 = vmatprep.mubr.bf16.mxu0 0
    %1820 = vmatmul.mubr.bf16.gmra.mrb[0].mxu0 %v1722
    %v1821 = vpop.f32.mrb[0].mxu0
    %v1822 = vadd.f32 0.0, %v1821
    %v1823 = vpop.f32.mrb[0].mxu0
    %v1824 = vpop.f32.mrb[0].mxu0
    %v1825 = vadd.f32 0.0, %v1824
    %v1826 = vpop.f32.mrb[0].mxu0
    %1827 = vdwg.mxu0
    %v1828 = vadd.f32 %v1584, %v1822
    %v1829 = vadd.f32 %v1585, %v1825
    %s1830 = scalar_lea.vmem %s3, 1
    %v1831 = vld [vmem:[%s1830] sm:$0x1]
    %v1832 = vmul.f32 %v1828, %v1828
    %v1833 = vmul.f32 %v1829, %v1829
    %v1834 = vsel %vm187, %v1832, 0.0
    %1835 = vadd.xlane.f32.xlu0 %v1834
    %v1836 = vpop.xlane.xlu0 %1835
    %v1837 = vsel %vm187, %v1833, 0.0
    %1838 = vadd.xlane.f32.xlu0 %v1837
    %v1839 = vpop.xlane.xlu0 %1838
    %v1840 = vmul.f32 %v1836, %v194
    %v1841 = vmul.f32 %v1839, %v194
    %v1842 = vadd.f32 %v1840, 1e-05
    %v1843 = vadd.f32 %v1841, 1e-05
    %v1844 = vrsqrt.pop %v1842
    %v1845 = vrsqrt.pop %v1843
    %v1846 = vmul.f32 %v1828, %v1844
    %v1847 = vmul.f32 %v1829, %v1845
    %v1849 = vlaneseq
    %v1850 = vshrl.u32 %v1849, 7
    %v1851 = vsub.s32 0, %v1850
    %v1852 = vrot.slane %v1831, %v1851
    %v1854 = vmul.f32 %v1846, %v1852
    %v1855 = vmul.f32 %v1847, %v1852
    %v1856 = vpack.c.bf16 %v1855, %v1854
    %s1857 = scalar_lea.vmem %s5, 64
    %v1858 = vld [vmem:[%s1857] sm:$0xff]
    %v1859 = vld [vmem:[%s1857 + $0x8] sm:$0xff]
    %v1860 = vld [vmem:[%s1857 + $0x10] sm:$0xff]
    %v1861 = vld [vmem:[%s1857 + $0x18] sm:$0xff]
    %v1862 = vld [vmem:[%s1857 + $0x20] sm:$0xff]
    %v1863 = vld [vmem:[%s1857 + $0x28] sm:$0xff]
    %v1864 = vld [vmem:[%s1857 + $0x30] sm:$0xff]
    %v1865 = vld [vmem:[%s1857 + $0x38] sm:$0xff]
    %v1874 = vunpack.c.l.b16 %v1858
    %v1875 = vunpack.c.h.b16 %v1858
    %v1876 = vunpack.c.l.b16 %v1859
    %v1877 = vunpack.c.h.b16 %v1859
    %v1878 = vunpack.c.l.b16 %v1860
    %v1879 = vunpack.c.h.b16 %v1860
    %v1880 = vunpack.c.l.b16 %v1861
    %v1881 = vunpack.c.h.b16 %v1861
    %v1882 = vunpack.c.l.b16 %v1862
    %v1883 = vunpack.c.h.b16 %v1862
    %v1884 = vunpack.c.l.b16 %v1863
    %v1885 = vunpack.c.h.b16 %v1863
    %v1886 = vunpack.c.l.b16 %v1864
    %v1887 = vunpack.c.h.b16 %v1864
    %v1888 = vunpack.c.l.b16 %v1865
    %v1889 = vunpack.c.h.b16 %v1865
    %v1890 = vpack.c.b16 %v1876, %v1874
    %v1891 = vpack.c.b16 %v1877, %v1875
    %v1892 = vpack.c.b16 %v1880, %v1878
    %v1893 = vpack.c.b16 %v1881, %v1879
    %v1894 = vpack.c.b16 %v1884, %v1882
    %v1895 = vpack.c.b16 %v1885, %v1883
    %v1896 = vpack.c.b16 %v1888, %v1886
    %v1897 = vpack.c.b16 %v1889, %v1887
    %v1907 = vsel %vm187, %v1856, 0
    %1909 = vmatprep.subr.bf16.mxu0 %v1891
    %1910 = vmatpush1.bf16.msra.mxu0 %v1890
    %1911 = vmatprep.subr.bf16.mxu0 %v1893
    %1912 = vmatpush1.bf16.msra.mxu0 %v1892
    %1913 = vmatprep.subr.bf16.mxu0 %v1895
    %1914 = vmatpush1.bf16.msra.mxu0 %v1894
    %1915 = vmatprep.subr.bf16.mxu0 %v1897
    %1916 = vmatpush1.bf16.msra.mxu0 %v1896
    %1917 = vmatprep.subr.bf16.mxu0 0
    %1918 = vmatpush1.bf16.msra.mxu0 0
    %1919 = vmatprep.subr.bf16.mxu0 0
    %1920 = vmatpush1.bf16.msra.mxu0 0
    %1921 = vmatprep.subr.bf16.mxu0 0
    %1922 = vmatpush1.bf16.msra.mxu0 0
    %1923 = vmatprep.subr.bf16.mxu0 0
    %1924 = vmatpush1.bf16.msra.mxu0 0
    %1925 = vmatprep.subr.bf16.mxu0 0
    %1926 = vmatpush1.bf16.msra.mxu0 0
    %1927 = vmatprep.subr.bf16.mxu0 0
    %1928 = vmatpush1.bf16.msra.mxu0 0
    %1929 = vmatprep.subr.bf16.mxu0 0
    %1930 = vmatpush1.bf16.msra.mxu0 0
    %1931 = vmatprep.subr.bf16.mxu0 0
    %1932 = vmatpush1.bf16.msra.mxu0 0
    %1933 = vmatprep.subr.bf16.mxu0 0
    %1934 = vmatpush1.bf16.msra.mxu0 0
    %1935 = vmatprep.subr.bf16.mxu0 0
    %1936 = vmatpush1.bf16.msra.mxu0 0
    %1937 = vmatprep.subr.bf16.mxu0 0
    %1938 = vmatpush1.bf16.msra.mxu0 0
    %1939 = vmatprep.subr.bf16.mxu0 0
    %1940 = vmatpush1.bf16.msra.mxu0 0
    %1941 = vmatprep.mubr.bf16.mxu0 0
    %1942 = vmatmul.mubr.bf16.gmra.mrb[0].mxu0 %v1907
    %v1943 = vpop.f32.mrb[0].mxu0
    %v1944 = vadd.f32 0.0, %v1943
    %v1945 = vpop.f32.mrb[0].mxu0
    %v1946 = vadd.f32 0.0, %v1945
    %v1947 = vpop.f32.mrb[0].mxu0
    %v1948 = vadd.f32 0.0, %v1947
    %v1949 = vpop.f32.mrb[0].mxu0
    %v1950 = vadd.f32 0.0, %v1949
    %1951 = vdwg.mxu0
    %v1952 = vsub.f32 0.0, %v1944
    %1954 = vrot.lane.b32.xlu0 %v1952, 120
    %v1955 = vpop.permute.xlu0 %1954
    %1958 = vrot.lane.b32.xlu0 %v1944, 8
    %v1959 = vpop.permute.xlu0 %1958
    %v1961 = vsel %vm315, %v1955, %v1959
    %v1962 = vmul.f32 %v1944, %v182
    %v1963 = vmul.f32 %v1961, %v183
    %v1964 = vadd.f32 %v1962, %v1963
    %1965 = vrot.lane.b32.xlu0 %v1952, 56
    %v1966 = vpop.permute.xlu0 %1965
    %1968 = vrot.lane.b32.xlu0 %v1944, 72
    %v1969 = vpop.permute.xlu0 %1968
    %v1971 = vsel %vm315, %v1966, %v1969
    %v1972 = vmul.f32 %v1944, %v329
    %v1973 = vmul.f32 %v1971, %v183
    %1975 = vrot.lane.b32.xlu0 %v1973, 64
    %v1976 = vpop.permute.xlu0 %1975
    %v1978 = vadd.f32 %v1972, %v1976
    %v1979 = vpack.c.bf16 %v1964, %v1964
    %v1980 = vpack.c.bf16 %v1978, %v1978
    %1982 = vrot.lane.b32.xlu0 %v1980, 64
    %v1983 = vpop.permute.xlu0 %1982
    %v1985 = vsel %vm343, %v1979, 0
    %v1988 = vsel %vm343, %v1983, 0
    %1990 = vmatprep.subr.bf16.mxu0 0
    %1991 = vmatpush1.bf16.xpose.msra.mxu0 %v1988
    %1992 = vmatprep.subr.bf16.mxu0 0
    %1993 = vmatpush1.bf16.xpose.msra.mxu0 0
    %1994 = vmatprep.subr.bf16.mxu0 0
    %1995 = vmatpush1.bf16.xpose.msra.mxu0 0
    %1996 = vmatprep.subr.bf16.mxu0 0
    %1997 = vmatpush1.bf16.xpose.msra.mxu0 0
    %1998 = vmatprep.subr.bf16.mxu0 0
    %1999 = vmatpush1.bf16.xpose.msra.mxu0 0
    %2000 = vmatprep.subr.bf16.mxu0 0
    %2001 = vmatpush1.bf16.xpose.msra.mxu0 0
    %2002 = vmatprep.subr.bf16.mxu0 0
    %2003 = vmatpush1.bf16.xpose.msra.mxu0 0
    %2004 = vmatprep.subr.bf16.mxu0 0
    %2005 = vmatpush1.bf16.xpose.msra.mxu0 0
    %2006 = vmatprep.subr.bf16.mxu0 0
    %2007 = vmatpush1.bf16.xpose.msra.mxu0 0
    %2008 = vmatprep.subr.bf16.mxu0 0
    %2009 = vmatpush1.bf16.xpose.msra.mxu0 0
    %2010 = vmatprep.subr.bf16.mxu0 0
    %2011 = vmatpush1.bf16.xpose.msra.mxu0 0
    %2012 = vmatprep.subr.bf16.mxu0 0
    %2013 = vmatpush1.bf16.xpose.msra.mxu0 0
    %2014 = vmatprep.subr.bf16.mxu0 0
    %2015 = vmatpush1.bf16.xpose.msra.mxu0 0
    %2016 = vmatprep.subr.bf16.mxu0 0
    %2017 = vmatpush1.bf16.xpose.msra.mxu0 0
    %2018 = vmatprep.subr.bf16.mxu0 0
    %2019 = vmatpush1.bf16.xpose.msra.mxu0 0
    %2020 = vmatprep.subr.bf16.mxu0 0
    %2021 = vmatpush1.bf16.xpose.msra.mxu0 0
    %2022 = vmatprep.mubr.bf16.mxu0 0
    %2023 = vmatmul.mubr.bf16.gmra.mrb[0].mxu0 %v1985
    %v2024 = vpop.f32.mrb[0].mxu0
    %v2025 = vadd.f32 0.0, %v2024
    %v2026 = vpop.f32.mrb[0].mxu0
    %v2027 = vpop.f32.mrb[0].mxu0
    %v2028 = vpop.f32.mrb[0].mxu0
    %2029 = vdwg.mxu0
    %v2030 = vmul.f32 %v2025, 0.25
    %v2031 = vadd.f32 %v2030, %v176
    %v2032 = vsel %vm315, %v2031, -inf
    %2033 = vmax.xlane.f32.xlu0 %v2032
    %v2034 = vpop.xlane.xlu0 %2033
    %v2035 = vsub.f32 %v2031, %v2034
    %v2036 = vmul.f32 %v2035, 1.442695
    %v2037 = vpow.pop %v2036
    %v2038 = vsel %vm315, %v2037, 0.0
    %2039 = vadd.xlane.f32.xlu0 %v2038
    %v2040 = vpop.xlane.xlu0 %2039
    %v2041 = vrcp.pop %v2040
    %v2042 = vmul.f32 %v2037, %v2041
    %v2043 = vpack.c.bf16 %v2042, %v2042
    %v2044 = vpack.c.bf16 %v1946, %v1946
    %v2046 = vsel %vm315, %v2043, 0
    %v2049 = vsel %vm408, %v2044, 0
    %2051 = vmatprep.subr.bf16.mxu0 0
    %2052 = vmatpush1.bf16.msra.mxu0 %v2049
    %2053 = vmatprep.subr.bf16.mxu0 0
    %2054 = vmatpush1.bf16.msra.mxu0 0
    %2055 = vmatprep.subr.bf16.mxu0 0
    %2056 = vmatpush1.bf16.msra.mxu0 0
    %2057 = vmatprep.subr.bf16.mxu0 0
    %2058 = vmatpush1.bf16.msra.mxu0 0
    %2059 = vmatprep.subr.bf16.mxu0 0
    %2060 = vmatpush1.bf16.msra.mxu0 0
    %2061 = vmatprep.subr.bf16.mxu0 0
    %2062 = vmatpush1.bf16.msra.mxu0 0
    %2063 = vmatprep.subr.bf16.mxu0 0
    %2064 = vmatpush1.bf16.msra.mxu0 0
    %2065 = vmatprep.subr.bf16.mxu0 0
    %2066 = vmatpush1.bf16.msra.mxu0 0
    %2067 = vmatprep.subr.bf16.mxu0 0
    %2068 = vmatpush1.bf16.msra.mxu0 0
    %2069 = vmatprep.subr.bf16.mxu0 0
    %2070 = vmatpush1.bf16.msra.mxu0 0
    %2071 = vmatprep.subr.bf16.mxu0 0
    %2072 = vmatpush1.bf16.msra.mxu0 0
    %2073 = vmatprep.subr.bf16.mxu0 0
    %2074 = vmatpush1.bf16.msra.mxu0 0
    %2075 = vmatprep.subr.bf16.mxu0 0
    %2076 = vmatpush1.bf16.msra.mxu0 0
    %2077 = vmatprep.subr.bf16.mxu0 0
    %2078 = vmatpush1.bf16.msra.mxu0 0
    %2079 = vmatprep.subr.bf16.mxu0 0
    %2080 = vmatpush1.bf16.msra.mxu0 0
    %2081 = vmatprep.subr.bf16.mxu0 0
    %2082 = vmatpush1.bf16.msra.mxu0 0
    %2083 = vmatprep.mubr.bf16.mxu0 0
    %2084 = vmatmul.mubr.bf16.gmra.mrb[0].mxu0 %v2046
    %v2085 = vpop.f32.mrb[0].mxu0
    %v2086 = vadd.f32 0.0, %v2085
    %v2087 = vpop.f32.mrb[0].mxu0
    %v2088 = vpop.f32.mrb[0].mxu0
    %v2089 = vpop.f32.mrb[0].mxu0
    %2090 = vdwg.mxu0
    %2091 = vrot.lane.b32.xlu0 %v1952, 104
    %v2092 = vpop.permute.xlu0 %2091
    %2094 = vrot.lane.b32.xlu0 %v1944, 120
    %v2095 = vpop.permute.xlu0 %2094
    %v2097 = vsel %vm315, %v2092, %v2095
    %v2098 = vmul.f32 %v1944, %v460
    %v2099 = vmul.f32 %v2097, %v183
    %2101 = vrot.lane.b32.xlu0 %v2099, 16
    %v2102 = vpop.permute.xlu0 %2101
    %v2104 = vadd.f32 %v2098, %v2102
    %2105 = vrot.lane.b32.xlu0 %v1952, 40
    %v2106 = vpop.permute.xlu0 %2105
    %2108 = vrot.lane.b32.xlu0 %v1944, 56
    %v2109 = vpop.permute.xlu0 %2108
    %v2111 = vsel %vm315, %v2106, %v2109
    %v2112 = vmul.f32 %v1944, %v477
    %v2113 = vmul.f32 %v2111, %v183
    %2115 = vrot.lane.b32.xlu0 %v2113, 80
    %v2116 = vpop.permute.xlu0 %2115
    %v2118 = vadd.f32 %v2112, %v2116
    %v2119 = vpack.c.bf16 %v2104, %v2104
    %v2120 = vpack.c.bf16 %v2118, %v2118
    %2122 = vrot.lane.b32.xlu0 %v2119, 112
    %v2123 = vpop.permute.xlu0 %2122
    %2125 = vrot.lane.b32.xlu0 %v2120, 48
    %v2126 = vpop.permute.xlu0 %2125
    %v2128 = vsel %vm343, %v2123, 0
    %v2131 = vsel %vm343, %v2126, 0
    %2133 = vmatprep.subr.bf16.mxu0 0
    %2134 = vmatpush1.bf16.xpose.msra.mxu0 %v2131
    %2135 = vmatprep.subr.bf16.mxu0 0
    %2136 = vmatpush1.bf16.xpose.msra.mxu0 0
    %2137 = vmatprep.subr.bf16.mxu0 0
    %2138 = vmatpush1.bf16.xpose.msra.mxu0 0
    %2139 = vmatprep.subr.bf16.mxu0 0
    %2140 = vmatpush1.bf16.xpose.msra.mxu0 0
    %2141 = vmatprep.subr.bf16.mxu0 0
    %2142 = vmatpush1.bf16.xpose.msra.mxu0 0
    %2143 = vmatprep.subr.bf16.mxu0 0
    %2144 = vmatpush1.bf16.xpose.msra.mxu0 0
    %2145 = vmatprep.subr.bf16.mxu0 0
    %2146 = vmatpush1.bf16.xpose.msra.mxu0 0
    %2147 = vmatprep.subr.bf16.mxu0 0
    %2148 = vmatpush1.bf16.xpose.msra.mxu0 0
    %2149 = vmatprep.subr.bf16.mxu0 0
    %2150 = vmatpush1.bf16.xpose.msra.mxu0 0
    %2151 = vmatprep.subr.bf16.mxu0 0
    %2152 = vmatpush1.bf16.xpose.msra.mxu0 0
    %2153 = vmatprep.subr.bf16.mxu0 0
    %2154 = vmatpush1.bf16.xpose.msra.mxu0 0
    %2155 = vmatprep.subr.bf16.mxu0 0
    %2156 = vmatpush1.bf16.xpose.msra.mxu0 0
    %2157 = vmatprep.subr.bf16.mxu0 0
    %2158 = vmatpush1.bf16.xpose.msra.mxu0 0
    %2159 = vmatprep.subr.bf16.mxu0 0
    %2160 = vmatpush1.bf16.xpose.msra.mxu0 0
    %2161 = vmatprep.subr.bf16.mxu0 0
    %2162 = vmatpush1.bf16.xpose.msra.mxu0 0
    %2163 = vmatprep.subr.bf16.mxu0 0
    %2164 = vmatpush1.bf16.xpose.msra.mxu0 0
    %2165 = vmatprep.mubr.bf16.mxu0 0
    %2166 = vmatmul.mubr.bf16.gmra.mrb[0].mxu0 %v2128
    %v2167 = vpop.f32.mrb[0].mxu0
    %v2168 = vadd.f32 0.0, %v2167
    %v2169 = vpop.f32.mrb[0].mxu0
    %v2170 = vpop.f32.mrb[0].mxu0
    %v2171 = vpop.f32.mrb[0].mxu0
    %2172 = vdwg.mxu0
    %v2173 = vmul.f32 %v2168, 0.25
    %v2174 = vadd.f32 %v2173, %v176
    %v2175 = vsel %vm315, %v2174, -inf
    %2176 = vmax.xlane.f32.xlu0 %v2175
    %v2177 = vpop.xlane.xlu0 %2176
    %v2178 = vsub.f32 %v2174, %v2177
    %v2179 = vmul.f32 %v2178, 1.442695
    %v2180 = vpow.pop %v2179
    %v2181 = vsel %vm315, %v2180, 0.0
    %2182 = vadd.xlane.f32.xlu0 %v2181
    %v2183 = vpop.xlane.xlu0 %2182
    %v2184 = vrcp.pop %v2183
    %v2185 = vmul.f32 %v2180, %v2184
    %v2186 = vpack.c.bf16 %v2185, %v2185
    %2188 = vrot.lane.b32.xlu0 %v2044, 112
    %v2189 = vpop.permute.xlu0 %2188
    %v2191 = vsel %vm315, %v2186, 0
    %v2194 = vsel %vm408, %v2189, 0
    %2196 = vmatprep.subr.bf16.mxu0 0
    %2197 = vmatpush1.bf16.msra.mxu0 %v2194
    %2198 = vmatprep.subr.bf16.mxu0 0
    %2199 = vmatpush1.bf16.msra.mxu0 0
    %2200 = vmatprep.subr.bf16.mxu0 0
    %2201 = vmatpush1.bf16.msra.mxu0 0
    %2202 = vmatprep.subr.bf16.mxu0 0
    %2203 = vmatpush1.bf16.msra.mxu0 0
    %2204 = vmatprep.subr.bf16.mxu0 0
    %2205 = vmatpush1.bf16.msra.mxu0 0
    %2206 = vmatprep.subr.bf16.mxu0 0
    %2207 = vmatpush1.bf16.msra.mxu0 0
    %2208 = vmatprep.subr.bf16.mxu0 0
    %2209 = vmatpush1.bf16.msra.mxu0 0
    %2210 = vmatprep.subr.bf16.mxu0 0
    %2211 = vmatpush1.bf16.msra.mxu0 0
    %2212 = vmatprep.subr.bf16.mxu0 0
    %2213 = vmatpush1.bf16.msra.mxu0 0
    %2214 = vmatprep.subr.bf16.mxu0 0
    %2215 = vmatpush1.bf16.msra.mxu0 0
    %2216 = vmatprep.subr.bf16.mxu0 0
    %2217 = vmatpush1.bf16.msra.mxu0 0
    %2218 = vmatprep.subr.bf16.mxu0 0
    %2219 = vmatpush1.bf16.msra.mxu0 0
    %2220 = vmatprep.subr.bf16.mxu0 0
    %2221 = vmatpush1.bf16.msra.mxu0 0
    %2222 = vmatprep.subr.bf16.mxu0 0
    %2223 = vmatpush1.bf16.msra.mxu0 0
    %2224 = vmatprep.subr.bf16.mxu0 0
    %2225 = vmatpush1.bf16.msra.mxu0 0
    %2226 = vmatprep.subr.bf16.mxu0 0
    %2227 = vmatpush1.bf16.msra.mxu0 0
    %2228 = vmatprep.mubr.bf16.mxu0 0
    %2229 = vmatmul.mubr.bf16.gmra.mrb[0].mxu0 %v2191
    %v2230 = vpop.f32.mrb[0].mxu0
    %v2231 = vadd.f32 0.0, %v2230
    %v2232 = vpop.f32.mrb[0].mxu0
    %v2233 = vpop.f32.mrb[0].mxu0
    %v2234 = vpop.f32.mrb[0].mxu0
    %2235 = vdwg.mxu0
    %2236 = vrot.lane.b32.xlu0 %v1952, 88
    %v2237 = vpop.permute.xlu0 %2236
    %2239 = vrot.lane.b32.xlu0 %v1944, 104
    %v2240 = vpop.permute.xlu0 %2239
    %v2242 = vsel %vm315, %v2237, %v2240
    %v2243 = vmul.f32 %v1944, %v611
    %v2244 = vmul.f32 %v2242, %v183
    %2246 = vrot.lane.b32.xlu0 %v2244, 32
    %v2247 = vpop.permute.xlu0 %2246
    %v2249 = vadd.f32 %v2243, %v2247
    %2250 = vrot.lane.b32.xlu0 %v1952, 24
    %v2251 = vpop.permute.xlu0 %2250
    %2253 = vrot.lane.b32.xlu0 %v1944, 40
    %v2254 = vpop.permute.xlu0 %2253
    %v2256 = vsel %vm315, %v2251, %v2254
    %v2257 = vmul.f32 %v1944, %v628
    %v2258 = vmul.f32 %v2256, %v183
    %2260 = vrot.lane.b32.xlu0 %v2258, 96
    %v2261 = vpop.permute.xlu0 %2260
    %v2263 = vadd.f32 %v2257, %v2261
    %v2264 = vpack.c.bf16 %v2249, %v2249
    %v2265 = vpack.c.bf16 %v2263, %v2263
    %2267 = vrot.lane.b32.xlu0 %v2264, 96
    %v2268 = vpop.permute.xlu0 %2267
    %2270 = vrot.lane.b32.xlu0 %v2265, 32
    %v2271 = vpop.permute.xlu0 %2270
    %v2273 = vsel %vm343, %v2268, 0
    %v2276 = vsel %vm343, %v2271, 0
    %2278 = vmatprep.subr.bf16.mxu0 0
    %2279 = vmatpush1.bf16.xpose.msra.mxu0 %v2276
    %2280 = vmatprep.subr.bf16.mxu0 0
    %2281 = vmatpush1.bf16.xpose.msra.mxu0 0
    %2282 = vmatprep.subr.bf16.mxu0 0
    %2283 = vmatpush1.bf16.xpose.msra.mxu0 0
    %2284 = vmatprep.subr.bf16.mxu0 0
    %2285 = vmatpush1.bf16.xpose.msra.mxu0 0
    %2286 = vmatprep.subr.bf16.mxu0 0
    %2287 = vmatpush1.bf16.xpose.msra.mxu0 0
    %2288 = vmatprep.subr.bf16.mxu0 0
    %2289 = vmatpush1.bf16.xpose.msra.mxu0 0
    %2290 = vmatprep.subr.bf16.mxu0 0
    %2291 = vmatpush1.bf16.xpose.msra.mxu0 0
    %2292 = vmatprep.subr.bf16.mxu0 0
    %2293 = vmatpush1.bf16.xpose.msra.mxu0 0
    %2294 = vmatprep.subr.bf16.mxu0 0
    %2295 = vmatpush1.bf16.xpose.msra.mxu0 0
    %2296 = vmatprep.subr.bf16.mxu0 0
    %2297 = vmatpush1.bf16.xpose.msra.mxu0 0
    %2298 = vmatprep.subr.bf16.mxu0 0
    %2299 = vmatpush1.bf16.xpose.msra.mxu0 0
    %2300 = vmatprep.subr.bf16.mxu0 0
    %2301 = vmatpush1.bf16.xpose.msra.mxu0 0
    %2302 = vmatprep.subr.bf16.mxu0 0
    %2303 = vmatpush1.bf16.xpose.msra.mxu0 0
    %2304 = vmatprep.subr.bf16.mxu0 0
    %2305 = vmatpush1.bf16.xpose.msra.mxu0 0
    %2306 = vmatprep.subr.bf16.mxu0 0
    %2307 = vmatpush1.bf16.xpose.msra.mxu0 0
    %2308 = vmatprep.subr.bf16.mxu0 0
    %2309 = vmatpush1.bf16.xpose.msra.mxu0 0
    %2310 = vmatprep.mubr.bf16.mxu0 0
    %2311 = vmatmul.mubr.bf16.gmra.mrb[0].mxu0 %v2273
    %v2312 = vpop.f32.mrb[0].mxu0
    %v2313 = vadd.f32 0.0, %v2312
    %v2314 = vpop.f32.mrb[0].mxu0
    %v2315 = vpop.f32.mrb[0].mxu0
    %v2316 = vpop.f32.mrb[0].mxu0
    %2317 = vdwg.mxu0
    %v2318 = vmul.f32 %v2313, 0.25
    %v2319 = vadd.f32 %v2318, %v176
    %v2320 = vsel %vm315, %v2319, -inf
    %2321 = vmax.xlane.f32.xlu0 %v2320
    %v2322 = vpop.xlane.xlu0 %2321
    %v2323 = vsub.f32 %v2319, %v2322
    %v2324 = vmul.f32 %v2323, 1.442695
    %v2325 = vpow.pop %v2324
    %v2326 = vsel %vm315, %v2325, 0.0
    %2327 = vadd.xlane.f32.xlu0 %v2326
    %v2328 = vpop.xlane.xlu0 %2327
    %v2329 = vrcp.pop %v2328
    %v2330 = vmul.f32 %v2325, %v2329
    %v2331 = vpack.c.bf16 %v2330, %v2330
    %2332 = vrot.lane.b32.xlu0 %v2044, 96
    %v2333 = vpop.permute.xlu0 %2332
    %v2335 = vsel %vm315, %v2331, 0
    %v2338 = vsel %vm408, %v2333, 0
    %2340 = vmatprep.subr.bf16.mxu0 0
    %2341 = vmatpush1.bf16.msra.mxu0 %v2338
    %2342 = vmatprep.subr.bf16.mxu0 0
    %2343 = vmatpush1.bf16.msra.mxu0 0
    %2344 = vmatprep.subr.bf16.mxu0 0
    %2345 = vmatpush1.bf16.msra.mxu0 0
    %2346 = vmatprep.subr.bf16.mxu0 0
    %2347 = vmatpush1.bf16.msra.mxu0 0
    %2348 = vmatprep.subr.bf16.mxu0 0
    %2349 = vmatpush1.bf16.msra.mxu0 0
    %2350 = vmatprep.subr.bf16.mxu0 0
    %2351 = vmatpush1.bf16.msra.mxu0 0
    %2352 = vmatprep.subr.bf16.mxu0 0
    %2353 = vmatpush1.bf16.msra.mxu0 0
    %2354 = vmatprep.subr.bf16.mxu0 0
    %2355 = vmatpush1.bf16.msra.mxu0 0
    %2356 = vmatprep.subr.bf16.mxu0 0
    %2357 = vmatpush1.bf16.msra.mxu0 0
    %2358 = vmatprep.subr.bf16.mxu0 0
    %2359 = vmatpush1.bf16.msra.mxu0 0
    %2360 = vmatprep.subr.bf16.mxu0 0
    %2361 = vmatpush1.bf16.msra.mxu0 0
    %2362 = vmatprep.subr.bf16.mxu0 0
    %2363 = vmatpush1.bf16.msra.mxu0 0
    %2364 = vmatprep.subr.bf16.mxu0 0
    %2365 = vmatpush1.bf16.msra.mxu0 0
    %2366 = vmatprep.subr.bf16.mxu0 0
    %2367 = vmatpush1.bf16.msra.mxu0 0
    %2368 = vmatprep.subr.bf16.mxu0 0
    %2369 = vmatpush1.bf16.msra.mxu0 0
    %2370 = vmatprep.subr.bf16.mxu0 0
    %2371 = vmatpush1.bf16.msra.mxu0 0
    %2372 = vmatprep.mubr.bf16.mxu0 0
    %2373 = vmatmul.mubr.bf16.gmra.mrb[0].mxu0 %v2335
    %v2374 = vpop.f32.mrb[0].mxu0
    %v2375 = vadd.f32 0.0, %v2374
    %v2376 = vpop.f32.mrb[0].mxu0
    %v2377 = vpop.f32.mrb[0].mxu0
    %v2378 = vpop.f32.mrb[0].mxu0
    %2379 = vdwg.mxu0
    %2380 = vrot.lane.b32.xlu0 %v1952, 72
    %v2381 = vpop.permute.xlu0 %2380
    %2383 = vrot.lane.b32.xlu0 %v1944, 88
    %v2384 = vpop.permute.xlu0 %2383
    %v2386 = vsel %vm315, %v2381, %v2384
    %v2387 = vmul.f32 %v1944, %v761
    %v2388 = vmul.f32 %v2386, %v183
    %2390 = vrot.lane.b32.xlu0 %v2388, 48
    %v2391 = vpop.permute.xlu0 %2390
    %v2393 = vadd.f32 %v2387, %v2391
    %2394 = vrot.lane.b32.xlu0 %v1952, 8
    %v2395 = vpop.permute.xlu0 %2394
    %2397 = vrot.lane.b32.xlu0 %v1944, 24
    %v2398 = vpop.permute.xlu0 %2397
    %v2400 = vsel %vm315, %v2395, %v2398
    %v2401 = vmul.f32 %v1944, %v778
    %v2402 = vmul.f32 %v2400, %v183
    %2404 = vrot.lane.b32.xlu0 %v2402, 112
    %v2405 = vpop.permute.xlu0 %2404
    %v2407 = vadd.f32 %v2401, %v2405
    %v2408 = vpack.c.bf16 %v2393, %v2393
    %v2409 = vpack.c.bf16 %v2407, %v2407
    %2411 = vrot.lane.b32.xlu0 %v2408, 80
    %v2412 = vpop.permute.xlu0 %2411
    %2414 = vrot.lane.b32.xlu0 %v2409, 16
    %v2415 = vpop.permute.xlu0 %2414
    %v2417 = vsel %vm343, %v2412, 0
    %v2420 = vsel %vm343, %v2415, 0
    %2422 = vmatprep.subr.bf16.mxu0 0
    %2423 = vmatpush1.bf16.xpose.msra.mxu0 %v2420
    %2424 = vmatprep.subr.bf16.mxu0 0
    %2425 = vmatpush1.bf16.xpose.msra.mxu0 0
    %2426 = vmatprep.subr.bf16.mxu0 0
    %2427 = vmatpush1.bf16.xpose.msra.mxu0 0
    %2428 = vmatprep.subr.bf16.mxu0 0
    %2429 = vmatpush1.bf16.xpose.msra.mxu0 0
    %2430 = vmatprep.subr.bf16.mxu0 0
    %2431 = vmatpush1.bf16.xpose.msra.mxu0 0
    %2432 = vmatprep.subr.bf16.mxu0 0
    %2433 = vmatpush1.bf16.xpose.msra.mxu0 0
    %2434 = vmatprep.subr.bf16.mxu0 0
    %2435 = vmatpush1.bf16.xpose.msra.mxu0 0
    %2436 = vmatprep.subr.bf16.mxu0 0
    %2437 = vmatpush1.bf16.xpose.msra.mxu0 0
    %2438 = vmatprep.subr.bf16.mxu0 0
    %2439 = vmatpush1.bf16.xpose.msra.mxu0 0
    %2440 = vmatprep.subr.bf16.mxu0 0
    %2441 = vmatpush1.bf16.xpose.msra.mxu0 0
    %2442 = vmatprep.subr.bf16.mxu0 0
    %2443 = vmatpush1.bf16.xpose.msra.mxu0 0
    %2444 = vmatprep.subr.bf16.mxu0 0
    %2445 = vmatpush1.bf16.xpose.msra.mxu0 0
    %2446 = vmatprep.subr.bf16.mxu0 0
    %2447 = vmatpush1.bf16.xpose.msra.mxu0 0
    %2448 = vmatprep.subr.bf16.mxu0 0
    %2449 = vmatpush1.bf16.xpose.msra.mxu0 0
    %2450 = vmatprep.subr.bf16.mxu0 0
    %2451 = vmatpush1.bf16.xpose.msra.mxu0 0
    %2452 = vmatprep.subr.bf16.mxu0 0
    %2453 = vmatpush1.bf16.xpose.msra.mxu0 0
    %2454 = vmatprep.mubr.bf16.mxu0 0
    %2455 = vmatmul.mubr.bf16.gmra.mrb[0].mxu0 %v2417
    %v2456 = vpop.f32.mrb[0].mxu0
    %v2457 = vadd.f32 0.0, %v2456
    %v2458 = vpop.f32.mrb[0].mxu0
    %v2459 = vpop.f32.mrb[0].mxu0
    %v2460 = vpop.f32.mrb[0].mxu0
    %2461 = vdwg.mxu0
    %v2462 = vmul.f32 %v2457, 0.25
    %v2463 = vadd.f32 %v2462, %v176
    %v2464 = vsel %vm315, %v2463, -inf
    %2465 = vmax.xlane.f32.xlu0 %v2464
    %v2466 = vpop.xlane.xlu0 %2465
    %v2467 = vsub.f32 %v2463, %v2466
    %v2468 = vmul.f32 %v2467, 1.442695
    %v2469 = vpow.pop %v2468
    %v2470 = vsel %vm315, %v2469, 0.0
    %2471 = vadd.xlane.f32.xlu0 %v2470
    %v2472 = vpop.xlane.xlu0 %2471
    %v2473 = vrcp.pop %v2472
    %v2474 = vmul.f32 %v2469, %v2473
    %v2475 = vpack.c.bf16 %v2474, %v2474
    %2476 = vrot.lane.b32.xlu0 %v2044, 80
    %v2477 = vpop.permute.xlu0 %2476
    %v2479 = vsel %vm315, %v2475, 0
    %v2482 = vsel %vm408, %v2477, 0
    %2484 = vmatprep.subr.bf16.mxu0 0
    %2485 = vmatpush1.bf16.msra.mxu0 %v2482
    %2486 = vmatprep.subr.bf16.mxu0 0
    %2487 = vmatpush1.bf16.msra.mxu0 0
    %2488 = vmatprep.subr.bf16.mxu0 0
    %2489 = vmatpush1.bf16.msra.mxu0 0
    %2490 = vmatprep.subr.bf16.mxu0 0
    %2491 = vmatpush1.bf16.msra.mxu0 0
    %2492 = vmatprep.subr.bf16.mxu0 0
    %2493 = vmatpush1.bf16.msra.mxu0 0
    %2494 = vmatprep.subr.bf16.mxu0 0
    %2495 = vmatpush1.bf16.msra.mxu0 0
    %2496 = vmatprep.subr.bf16.mxu0 0
    %2497 = vmatpush1.bf16.msra.mxu0 0
    %2498 = vmatprep.subr.bf16.mxu0 0
    %2499 = vmatpush1.bf16.msra.mxu0 0
    %2500 = vmatprep.subr.bf16.mxu0 0
    %2501 = vmatpush1.bf16.msra.mxu0 0
    %2502 = vmatprep.subr.bf16.mxu0 0
    %2503 = vmatpush1.bf16.msra.mxu0 0
    %2504 = vmatprep.subr.bf16.mxu0 0
    %2505 = vmatpush1.bf16.msra.mxu0 0
    %2506 = vmatprep.subr.bf16.mxu0 0
    %2507 = vmatpush1.bf16.msra.mxu0 0
    %2508 = vmatprep.subr.bf16.mxu0 0
    %2509 = vmatpush1.bf16.msra.mxu0 0
    %2510 = vmatprep.subr.bf16.mxu0 0
    %2511 = vmatpush1.bf16.msra.mxu0 0
    %2512 = vmatprep.subr.bf16.mxu0 0
    %2513 = vmatpush1.bf16.msra.mxu0 0
    %2514 = vmatprep.subr.bf16.mxu0 0
    %2515 = vmatpush1.bf16.msra.mxu0 0
    %2516 = vmatprep.mubr.bf16.mxu0 0
    %2517 = vmatmul.mubr.bf16.gmra.mrb[0].mxu0 %v2479
    %v2518 = vpop.f32.mrb[0].mxu0
    %v2519 = vadd.f32 0.0, %v2518
    %v2520 = vpop.f32.mrb[0].mxu0
    %v2521 = vpop.f32.mrb[0].mxu0
    %v2522 = vpop.f32.mrb[0].mxu0
    %2523 = vdwg.mxu0
    %2525 = vrot.lane.b32.xlu0 %v2231, 16
    %v2526 = vpop.permute.xlu0 %2525
    %2529 = vrot.lane.b32.xlu0 %v2375, 32
    %v2530 = vpop.permute.xlu0 %2529
    %2533 = vrot.lane.b32.xlu0 %v2519, 48
    %v2534 = vpop.permute.xlu0 %2533
    %v2536 = vsel %vm343, %v2086, %v2526
    %v2537 = vsel %vm916, %v2536, %v2530
    %v2538 = vsel %vm918, %v2537, %v2534
    %v2539 = vsub.f32 0.0, %v1948
    %2541 = vrot.lane.b32.xlu0 %v2539, 120
    %v2542 = vpop.permute.xlu0 %2541
    %2545 = vrot.lane.b32.xlu0 %v1948, 8
    %v2546 = vpop.permute.xlu0 %2545
    %v2548 = vsel %vm315, %v2542, %v2546
    %v2549 = vmul.f32 %v1948, %v182
    %v2550 = vmul.f32 %v2548, %v183
    %v2551 = vadd.f32 %v2549, %v2550
    %2552 = vrot.lane.b32.xlu0 %v2539, 56
    %v2553 = vpop.permute.xlu0 %2552
    %2555 = vrot.lane.b32.xlu0 %v1948, 72
    %v2556 = vpop.permute.xlu0 %2555
    %v2558 = vsel %vm315, %v2553, %v2556
    %v2559 = vmul.f32 %v1948, %v329
    %v2560 = vmul.f32 %v2558, %v183
    %2562 = vrot.lane.b32.xlu0 %v2560, 64
    %v2563 = vpop.permute.xlu0 %2562
    %v2565 = vadd.f32 %v2559, %v2563
    %v2566 = vpack.c.bf16 %v2551, %v2551
    %v2567 = vpack.c.bf16 %v2565, %v2565
    %2569 = vrot.lane.b32.xlu0 %v2567, 64
    %v2570 = vpop.permute.xlu0 %2569
    %v2572 = vsel %vm343, %v2566, 0
    %v2575 = vsel %vm343, %v2570, 0
    %2577 = vmatprep.subr.bf16.mxu0 0
    %2578 = vmatpush1.bf16.xpose.msra.mxu0 %v2575
    %2579 = vmatprep.subr.bf16.mxu0 0
    %2580 = vmatpush1.bf16.xpose.msra.mxu0 0
    %2581 = vmatprep.subr.bf16.mxu0 0
    %2582 = vmatpush1.bf16.xpose.msra.mxu0 0
    %2583 = vmatprep.subr.bf16.mxu0 0
    %2584 = vmatpush1.bf16.xpose.msra.mxu0 0
    %2585 = vmatprep.subr.bf16.mxu0 0
    %2586 = vmatpush1.bf16.xpose.msra.mxu0 0
    %2587 = vmatprep.subr.bf16.mxu0 0
    %2588 = vmatpush1.bf16.xpose.msra.mxu0 0
    %2589 = vmatprep.subr.bf16.mxu0 0
    %2590 = vmatpush1.bf16.xpose.msra.mxu0 0
    %2591 = vmatprep.subr.bf16.mxu0 0
    %2592 = vmatpush1.bf16.xpose.msra.mxu0 0
    %2593 = vmatprep.subr.bf16.mxu0 0
    %2594 = vmatpush1.bf16.xpose.msra.mxu0 0
    %2595 = vmatprep.subr.bf16.mxu0 0
    %2596 = vmatpush1.bf16.xpose.msra.mxu0 0
    %2597 = vmatprep.subr.bf16.mxu0 0
    %2598 = vmatpush1.bf16.xpose.msra.mxu0 0
    %2599 = vmatprep.subr.bf16.mxu0 0
    %2600 = vmatpush1.bf16.xpose.msra.mxu0 0
    %2601 = vmatprep.subr.bf16.mxu0 0
    %2602 = vmatpush1.bf16.xpose.msra.mxu0 0
    %2603 = vmatprep.subr.bf16.mxu0 0
    %2604 = vmatpush1.bf16.xpose.msra.mxu0 0
    %2605 = vmatprep.subr.bf16.mxu0 0
    %2606 = vmatpush1.bf16.xpose.msra.mxu0 0
    %2607 = vmatprep.subr.bf16.mxu0 0
    %2608 = vmatpush1.bf16.xpose.msra.mxu0 0
    %2609 = vmatprep.mubr.bf16.mxu0 0
    %2610 = vmatmul.mubr.bf16.gmra.mrb[0].mxu0 %v2572
    %v2611 = vpop.f32.mrb[0].mxu0
    %v2612 = vadd.f32 0.0, %v2611
    %v2613 = vpop.f32.mrb[0].mxu0
    %v2614 = vpop.f32.mrb[0].mxu0
    %v2615 = vpop.f32.mrb[0].mxu0
    %2616 = vdwg.mxu0
    %v2617 = vmul.f32 %v2612, 0.25
    %v2618 = vadd.f32 %v2617, %v181
    %v2619 = vsel %vm315, %v2618, -inf
    %2620 = vmax.xlane.f32.xlu0 %v2619
    %v2621 = vpop.xlane.xlu0 %2620
    %v2622 = vsub.f32 %v2618, %v2621
    %v2623 = vmul.f32 %v2622, 1.442695
    %v2624 = vpow.pop %v2623
    %v2625 = vsel %vm315, %v2624, 0.0
    %2626 = vadd.xlane.f32.xlu0 %v2625
    %v2627 = vpop.xlane.xlu0 %2626
    %v2628 = vrcp.pop %v2627
    %v2629 = vmul.f32 %v2624, %v2628
    %v2630 = vpack.c.bf16 %v2629, %v2629
    %v2631 = vpack.c.bf16 %v1950, %v1950
    %v2633 = vsel %vm315, %v2630, 0
    %v2636 = vsel %vm408, %v2631, 0
    %2638 = vmatprep.subr.bf16.mxu0 0
    %2639 = vmatpush1.bf16.msra.mxu0 %v2636
    %2640 = vmatprep.subr.bf16.mxu0 0
    %2641 = vmatpush1.bf16.msra.mxu0 0
    %2642 = vmatprep.subr.bf16.mxu0 0
    %2643 = vmatpush1.bf16.msra.mxu0 0
    %2644 = vmatprep.subr.bf16.mxu0 0
    %2645 = vmatpush1.bf16.msra.mxu0 0
    %2646 = vmatprep.subr.bf16.mxu0 0
    %2647 = vmatpush1.bf16.msra.mxu0 0
    %2648 = vmatprep.subr.bf16.mxu0 0
    %2649 = vmatpush1.bf16.msra.mxu0 0
    %2650 = vmatprep.subr.bf16.mxu0 0
    %2651 = vmatpush1.bf16.msra.mxu0 0
    %2652 = vmatprep.subr.bf16.mxu0 0
    %2653 = vmatpush1.bf16.msra.mxu0 0
    %2654 = vmatprep.subr.bf16.mxu0 0
    %2655 = vmatpush1.bf16.msra.mxu0 0
    %2656 = vmatprep.subr.bf16.mxu0 0
    %2657 = vmatpush1.bf16.msra.mxu0 0
    %2658 = vmatprep.subr.bf16.mxu0 0
    %2659 = vmatpush1.bf16.msra.mxu0 0
    %2660 = vmatprep.subr.bf16.mxu0 0
    %2661 = vmatpush1.bf16.msra.mxu0 0
    %2662 = vmatprep.subr.bf16.mxu0 0
    %2663 = vmatpush1.bf16.msra.mxu0 0
    %2664 = vmatprep.subr.bf16.mxu0 0
    %2665 = vmatpush1.bf16.msra.mxu0 0
    %2666 = vmatprep.subr.bf16.mxu0 0
    %2667 = vmatpush1.bf16.msra.mxu0 0
    %2668 = vmatprep.subr.bf16.mxu0 0
    %2669 = vmatpush1.bf16.msra.mxu0 0
    %2670 = vmatprep.mubr.bf16.mxu0 0
    %2671 = vmatmul.mubr.bf16.gmra.mrb[0].mxu0 %v2633
    %v2672 = vpop.f32.mrb[0].mxu0
    %v2673 = vadd.f32 0.0, %v2672
    %v2674 = vpop.f32.mrb[0].mxu0
    %v2675 = vpop.f32.mrb[0].mxu0
    %v2676 = vpop.f32.mrb[0].mxu0
    %2677 = vdwg.mxu0
    %2678 = vrot.lane.b32.xlu0 %v2539, 104
    %v2679 = vpop.permute.xlu0 %2678
    %2681 = vrot.lane.b32.xlu0 %v1948, 120
    %v2682 = vpop.permute.xlu0 %2681
    %v2684 = vsel %vm315, %v2679, %v2682
    %v2685 = vmul.f32 %v1948, %v460
    %v2686 = vmul.f32 %v2684, %v183
    %2688 = vrot.lane.b32.xlu0 %v2686, 16
    %v2689 = vpop.permute.xlu0 %2688
    %v2691 = vadd.f32 %v2685, %v2689
    %2692 = vrot.lane.b32.xlu0 %v2539, 40
    %v2693 = vpop.permute.xlu0 %2692
    %2695 = vrot.lane.b32.xlu0 %v1948, 56
    %v2696 = vpop.permute.xlu0 %2695
    %v2698 = vsel %vm315, %v2693, %v2696
    %v2699 = vmul.f32 %v1948, %v477
    %v2700 = vmul.f32 %v2698, %v183
    %2702 = vrot.lane.b32.xlu0 %v2700, 80
    %v2703 = vpop.permute.xlu0 %2702
    %v2705 = vadd.f32 %v2699, %v2703
    %v2706 = vpack.c.bf16 %v2691, %v2691
    %v2707 = vpack.c.bf16 %v2705, %v2705
    %2709 = vrot.lane.b32.xlu0 %v2706, 112
    %v2710 = vpop.permute.xlu0 %2709
    %2712 = vrot.lane.b32.xlu0 %v2707, 48
    %v2713 = vpop.permute.xlu0 %2712
    %v2715 = vsel %vm343, %v2710, 0
    %v2718 = vsel %vm343, %v2713, 0
    %2720 = vmatprep.subr.bf16.mxu0 0
    %2721 = vmatpush1.bf16.xpose.msra.mxu0 %v2718
    %2722 = vmatprep.subr.bf16.mxu0 0
    %2723 = vmatpush1.bf16.xpose.msra.mxu0 0
    %2724 = vmatprep.subr.bf16.mxu0 0
    %2725 = vmatpush1.bf16.xpose.msra.mxu0 0
    %2726 = vmatprep.subr.bf16.mxu0 0
    %2727 = vmatpush1.bf16.xpose.msra.mxu0 0
    %2728 = vmatprep.subr.bf16.mxu0 0
    %2729 = vmatpush1.bf16.xpose.msra.mxu0 0
    %2730 = vmatprep.subr.bf16.mxu0 0
    %2731 = vmatpush1.bf16.xpose.msra.mxu0 0
    %2732 = vmatprep.subr.bf16.mxu0 0
    %2733 = vmatpush1.bf16.xpose.msra.mxu0 0
    %2734 = vmatprep.subr.bf16.mxu0 0
    %2735 = vmatpush1.bf16.xpose.msra.mxu0 0
    %2736 = vmatprep.subr.bf16.mxu0 0
    %2737 = vmatpush1.bf16.xpose.msra.mxu0 0
    %2738 = vmatprep.subr.bf16.mxu0 0
    %2739 = vmatpush1.bf16.xpose.msra.mxu0 0
    %2740 = vmatprep.subr.bf16.mxu0 0
    %2741 = vmatpush1.bf16.xpose.msra.mxu0 0
    %2742 = vmatprep.subr.bf16.mxu0 0
    %2743 = vmatpush1.bf16.xpose.msra.mxu0 0
    %2744 = vmatprep.subr.bf16.mxu0 0
    %2745 = vmatpush1.bf16.xpose.msra.mxu0 0
    %2746 = vmatprep.subr.bf16.mxu0 0
    %2747 = vmatpush1.bf16.xpose.msra.mxu0 0
    %2748 = vmatprep.subr.bf16.mxu0 0
    %2749 = vmatpush1.bf16.xpose.msra.mxu0 0
    %2750 = vmatprep.subr.bf16.mxu0 0
    %2751 = vmatpush1.bf16.xpose.msra.mxu0 0
    %2752 = vmatprep.mubr.bf16.mxu0 0
    %2753 = vmatmul.mubr.bf16.gmra.mrb[0].mxu0 %v2715
    %v2754 = vpop.f32.mrb[0].mxu0
    %v2755 = vadd.f32 0.0, %v2754
    %v2756 = vpop.f32.mrb[0].mxu0
    %v2757 = vpop.f32.mrb[0].mxu0
    %v2758 = vpop.f32.mrb[0].mxu0
    %2759 = vdwg.mxu0
    %v2760 = vmul.f32 %v2755, 0.25
    %v2761 = vadd.f32 %v2760, %v181
    %v2762 = vsel %vm315, %v2761, -inf
    %2763 = vmax.xlane.f32.xlu0 %v2762
    %v2764 = vpop.xlane.xlu0 %2763
    %v2765 = vsub.f32 %v2761, %v2764
    %v2766 = vmul.f32 %v2765, 1.442695
    %v2767 = vpow.pop %v2766
    %v2768 = vsel %vm315, %v2767, 0.0
    %2769 = vadd.xlane.f32.xlu0 %v2768
    %v2770 = vpop.xlane.xlu0 %2769
    %v2771 = vrcp.pop %v2770
    %v2772 = vmul.f32 %v2767, %v2771
    %v2773 = vpack.c.bf16 %v2772, %v2772
    %2775 = vrot.lane.b32.xlu0 %v2631, 112
    %v2776 = vpop.permute.xlu0 %2775
    %v2778 = vsel %vm315, %v2773, 0
    %v2781 = vsel %vm408, %v2776, 0
    %2783 = vmatprep.subr.bf16.mxu0 0
    %2784 = vmatpush1.bf16.msra.mxu0 %v2781
    %2785 = vmatprep.subr.bf16.mxu0 0
    %2786 = vmatpush1.bf16.msra.mxu0 0
    %2787 = vmatprep.subr.bf16.mxu0 0
    %2788 = vmatpush1.bf16.msra.mxu0 0
    %2789 = vmatprep.subr.bf16.mxu0 0
    %2790 = vmatpush1.bf16.msra.mxu0 0
    %2791 = vmatprep.subr.bf16.mxu0 0
    %2792 = vmatpush1.bf16.msra.mxu0 0
    %2793 = vmatprep.subr.bf16.mxu0 0
    %2794 = vmatpush1.bf16.msra.mxu0 0
    %2795 = vmatprep.subr.bf16.mxu0 0
    %2796 = vmatpush1.bf16.msra.mxu0 0
    %2797 = vmatprep.subr.bf16.mxu0 0
    %2798 = vmatpush1.bf16.msra.mxu0 0
    %2799 = vmatprep.subr.bf16.mxu0 0
    %2800 = vmatpush1.bf16.msra.mxu0 0
    %2801 = vmatprep.subr.bf16.mxu0 0
    %2802 = vmatpush1.bf16.msra.mxu0 0
    %2803 = vmatprep.subr.bf16.mxu0 0
    %2804 = vmatpush1.bf16.msra.mxu0 0
    %2805 = vmatprep.subr.bf16.mxu0 0
    %2806 = vmatpush1.bf16.msra.mxu0 0
    %2807 = vmatprep.subr.bf16.mxu0 0
    %2808 = vmatpush1.bf16.msra.mxu0 0
    %2809 = vmatprep.subr.bf16.mxu0 0
    %2810 = vmatpush1.bf16.msra.mxu0 0
    %2811 = vmatprep.subr.bf16.mxu0 0
    %2812 = vmatpush1.bf16.msra.mxu0 0
    %2813 = vmatprep.subr.bf16.mxu0 0
    %2814 = vmatpush1.bf16.msra.mxu0 0
    %2815 = vmatprep.mubr.bf16.mxu0 0
    %2816 = vmatmul.mubr.bf16.gmra.mrb[0].mxu0 %v2778
    %v2817 = vpop.f32.mrb[0].mxu0
    %v2818 = vadd.f32 0.0, %v2817
    %v2819 = vpop.f32.mrb[0].mxu0
    %v2820 = vpop.f32.mrb[0].mxu0
    %v2821 = vpop.f32.mrb[0].mxu0
    %2822 = vdwg.mxu0
    %2823 = vrot.lane.b32.xlu0 %v2539, 88
    %v2824 = vpop.permute.xlu0 %2823
    %2826 = vrot.lane.b32.xlu0 %v1948, 104
    %v2827 = vpop.permute.xlu0 %2826
    %v2829 = vsel %vm315, %v2824, %v2827
    %v2830 = vmul.f32 %v1948, %v611
    %v2831 = vmul.f32 %v2829, %v183
    %2833 = vrot.lane.b32.xlu0 %v2831, 32
    %v2834 = vpop.permute.xlu0 %2833
    %v2836 = vadd.f32 %v2830, %v2834
    %2837 = vrot.lane.b32.xlu0 %v2539, 24
    %v2838 = vpop.permute.xlu0 %2837
    %2840 = vrot.lane.b32.xlu0 %v1948, 40
    %v2841 = vpop.permute.xlu0 %2840
    %v2843 = vsel %vm315, %v2838, %v2841
    %v2844 = vmul.f32 %v1948, %v628
    %v2845 = vmul.f32 %v2843, %v183
    %2847 = vrot.lane.b32.xlu0 %v2845, 96
    %v2848 = vpop.permute.xlu0 %2847
    %v2850 = vadd.f32 %v2844, %v2848
    %v2851 = vpack.c.bf16 %v2836, %v2836
    %v2852 = vpack.c.bf16 %v2850, %v2850
    %2854 = vrot.lane.b32.xlu0 %v2851, 96
    %v2855 = vpop.permute.xlu0 %2854
    %2857 = vrot.lane.b32.xlu0 %v2852, 32
    %v2858 = vpop.permute.xlu0 %2857
    %v2860 = vsel %vm343, %v2855, 0
    %v2863 = vsel %vm343, %v2858, 0
    %2865 = vmatprep.subr.bf16.mxu0 0
    %2866 = vmatpush1.bf16.xpose.msra.mxu0 %v2863
    %2867 = vmatprep.subr.bf16.mxu0 0
    %2868 = vmatpush1.bf16.xpose.msra.mxu0 0
    %2869 = vmatprep.subr.bf16.mxu0 0
    %2870 = vmatpush1.bf16.xpose.msra.mxu0 0
    %2871 = vmatprep.subr.bf16.mxu0 0
    %2872 = vmatpush1.bf16.xpose.msra.mxu0 0
    %2873 = vmatprep.subr.bf16.mxu0 0
    %2874 = vmatpush1.bf16.xpose.msra.mxu0 0
    %2875 = vmatprep.subr.bf16.mxu0 0
    %2876 = vmatpush1.bf16.xpose.msra.mxu0 0
    %2877 = vmatprep.subr.bf16.mxu0 0
    %2878 = vmatpush1.bf16.xpose.msra.mxu0 0
    %2879 = vmatprep.subr.bf16.mxu0 0
    %2880 = vmatpush1.bf16.xpose.msra.mxu0 0
    %2881 = vmatprep.subr.bf16.mxu0 0
    %2882 = vmatpush1.bf16.xpose.msra.mxu0 0
    %2883 = vmatprep.subr.bf16.mxu0 0
    %2884 = vmatpush1.bf16.xpose.msra.mxu0 0
    %2885 = vmatprep.subr.bf16.mxu0 0
    %2886 = vmatpush1.bf16.xpose.msra.mxu0 0
    %2887 = vmatprep.subr.bf16.mxu0 0
    %2888 = vmatpush1.bf16.xpose.msra.mxu0 0
    %2889 = vmatprep.subr.bf16.mxu0 0
    %2890 = vmatpush1.bf16.xpose.msra.mxu0 0
    %2891 = vmatprep.subr.bf16.mxu0 0
    %2892 = vmatpush1.bf16.xpose.msra.mxu0 0
    %2893 = vmatprep.subr.bf16.mxu0 0
    %2894 = vmatpush1.bf16.xpose.msra.mxu0 0
    %2895 = vmatprep.subr.bf16.mxu0 0
    %2896 = vmatpush1.bf16.xpose.msra.mxu0 0
    %2897 = vmatprep.mubr.bf16.mxu0 0
    %2898 = vmatmul.mubr.bf16.gmra.mrb[0].mxu0 %v2860
    %v2899 = vpop.f32.mrb[0].mxu0
    %v2900 = vadd.f32 0.0, %v2899
    %v2901 = vpop.f32.mrb[0].mxu0
    %v2902 = vpop.f32.mrb[0].mxu0
    %v2903 = vpop.f32.mrb[0].mxu0
    %2904 = vdwg.mxu0
    %v2905 = vmul.f32 %v2900, 0.25
    %v2906 = vadd.f32 %v2905, %v181
    %v2907 = vsel %vm315, %v2906, -inf
    %2908 = vmax.xlane.f32.xlu0 %v2907
    %v2909 = vpop.xlane.xlu0 %2908
    %v2910 = vsub.f32 %v2906, %v2909
    %v2911 = vmul.f32 %v2910, 1.442695
    %v2912 = vpow.pop %v2911
    %v2913 = vsel %vm315, %v2912, 0.0
    %2914 = vadd.xlane.f32.xlu0 %v2913
    %v2915 = vpop.xlane.xlu0 %2914
    %v2916 = vrcp.pop %v2915
    %v2917 = vmul.f32 %v2912, %v2916
    %v2918 = vpack.c.bf16 %v2917, %v2917
    %2919 = vrot.lane.b32.xlu0 %v2631, 96
    %v2920 = vpop.permute.xlu0 %2919
    %v2922 = vsel %vm315, %v2918, 0
    %v2925 = vsel %vm408, %v2920, 0
    %2927 = vmatprep.subr.bf16.mxu0 0
    %2928 = vmatpush1.bf16.msra.mxu0 %v2925
    %2929 = vmatprep.subr.bf16.mxu0 0
    %2930 = vmatpush1.bf16.msra.mxu0 0
    %2931 = vmatprep.subr.bf16.mxu0 0
    %2932 = vmatpush1.bf16.msra.mxu0 0
    %2933 = vmatprep.subr.bf16.mxu0 0
    %2934 = vmatpush1.bf16.msra.mxu0 0
    %2935 = vmatprep.subr.bf16.mxu0 0
    %2936 = vmatpush1.bf16.msra.mxu0 0
    %2937 = vmatprep.subr.bf16.mxu0 0
    %2938 = vmatpush1.bf16.msra.mxu0 0
    %2939 = vmatprep.subr.bf16.mxu0 0
    %2940 = vmatpush1.bf16.msra.mxu0 0
    %2941 = vmatprep.subr.bf16.mxu0 0
    %2942 = vmatpush1.bf16.msra.mxu0 0
    %2943 = vmatprep.subr.bf16.mxu0 0
    %2944 = vmatpush1.bf16.msra.mxu0 0
    %2945 = vmatprep.subr.bf16.mxu0 0
    %2946 = vmatpush1.bf16.msra.mxu0 0
    %2947 = vmatprep.subr.bf16.mxu0 0
    %2948 = vmatpush1.bf16.msra.mxu0 0
    %2949 = vmatprep.subr.bf16.mxu0 0
    %2950 = vmatpush1.bf16.msra.mxu0 0
    %2951 = vmatprep.subr.bf16.mxu0 0
    %2952 = vmatpush1.bf16.msra.mxu0 0
    %2953 = vmatprep.subr.bf16.mxu0 0
    %2954 = vmatpush1.bf16.msra.mxu0 0
    %2955 = vmatprep.subr.bf16.mxu0 0
    %2956 = vmatpush1.bf16.msra.mxu0 0
    %2957 = vmatprep.subr.bf16.mxu0 0
    %2958 = vmatpush1.bf16.msra.mxu0 0
    %2959 = vmatprep.mubr.bf16.mxu0 0
    %2960 = vmatmul.mubr.bf16.gmra.mrb[0].mxu0 %v2922
    %v2961 = vpop.f32.mrb[0].mxu0
    %v2962 = vadd.f32 0.0, %v2961
    %v2963 = vpop.f32.mrb[0].mxu0
    %v2964 = vpop.f32.mrb[0].mxu0
    %v2965 = vpop.f32.mrb[0].mxu0
    %2966 = vdwg.mxu0
    %2967 = vrot.lane.b32.xlu0 %v2539, 72
    %v2968 = vpop.permute.xlu0 %2967
    %2970 = vrot.lane.b32.xlu0 %v1948, 88
    %v2971 = vpop.permute.xlu0 %2970
    %v2973 = vsel %vm315, %v2968, %v2971
    %v2974 = vmul.f32 %v1948, %v761
    %v2975 = vmul.f32 %v2973, %v183
    %2977 = vrot.lane.b32.xlu0 %v2975, 48
    %v2978 = vpop.permute.xlu0 %2977
    %v2980 = vadd.f32 %v2974, %v2978
    %2981 = vrot.lane.b32.xlu0 %v2539, 8
    %v2982 = vpop.permute.xlu0 %2981
    %2984 = vrot.lane.b32.xlu0 %v1948, 24
    %v2985 = vpop.permute.xlu0 %2984
    %v2987 = vsel %vm315, %v2982, %v2985
    %v2988 = vmul.f32 %v1948, %v778
    %v2989 = vmul.f32 %v2987, %v183
    %2991 = vrot.lane.b32.xlu0 %v2989, 112
    %v2992 = vpop.permute.xlu0 %2991
    %v2994 = vadd.f32 %v2988, %v2992
    %v2995 = vpack.c.bf16 %v2980, %v2980
    %v2996 = vpack.c.bf16 %v2994, %v2994
    %2998 = vrot.lane.b32.xlu0 %v2995, 80
    %v2999 = vpop.permute.xlu0 %2998
    %3001 = vrot.lane.b32.xlu0 %v2996, 16
    %v3002 = vpop.permute.xlu0 %3001
    %v3004 = vsel %vm343, %v2999, 0
    %v3007 = vsel %vm343, %v3002, 0
    %3009 = vmatprep.subr.bf16.mxu0 0
    %3010 = vmatpush1.bf16.xpose.msra.mxu0 %v3007
    %3011 = vmatprep.subr.bf16.mxu0 0
    %3012 = vmatpush1.bf16.xpose.msra.mxu0 0
    %3013 = vmatprep.subr.bf16.mxu0 0
    %3014 = vmatpush1.bf16.xpose.msra.mxu0 0
    %3015 = vmatprep.subr.bf16.mxu0 0
    %3016 = vmatpush1.bf16.xpose.msra.mxu0 0
    %3017 = vmatprep.subr.bf16.mxu0 0
    %3018 = vmatpush1.bf16.xpose.msra.mxu0 0
    %3019 = vmatprep.subr.bf16.mxu0 0
    %3020 = vmatpush1.bf16.xpose.msra.mxu0 0
    %3021 = vmatprep.subr.bf16.mxu0 0
    %3022 = vmatpush1.bf16.xpose.msra.mxu0 0
    %3023 = vmatprep.subr.bf16.mxu0 0
    %3024 = vmatpush1.bf16.xpose.msra.mxu0 0
    %3025 = vmatprep.subr.bf16.mxu0 0
    %3026 = vmatpush1.bf16.xpose.msra.mxu0 0
    %3027 = vmatprep.subr.bf16.mxu0 0
    %3028 = vmatpush1.bf16.xpose.msra.mxu0 0
    %3029 = vmatprep.subr.bf16.mxu0 0
    %3030 = vmatpush1.bf16.xpose.msra.mxu0 0
    %3031 = vmatprep.subr.bf16.mxu0 0
    %3032 = vmatpush1.bf16.xpose.msra.mxu0 0
    %3033 = vmatprep.subr.bf16.mxu0 0
    %3034 = vmatpush1.bf16.xpose.msra.mxu0 0
    %3035 = vmatprep.subr.bf16.mxu0 0
    %3036 = vmatpush1.bf16.xpose.msra.mxu0 0
    %3037 = vmatprep.subr.bf16.mxu0 0
    %3038 = vmatpush1.bf16.xpose.msra.mxu0 0
    %3039 = vmatprep.subr.bf16.mxu0 0
    %3040 = vmatpush1.bf16.xpose.msra.mxu0 0
    %3041 = vmatprep.mubr.bf16.mxu0 0
    %3042 = vmatmul.mubr.bf16.gmra.mrb[0].mxu0 %v3004
    %v3043 = vpop.f32.mrb[0].mxu0
    %v3044 = vadd.f32 0.0, %v3043
    %v3045 = vpop.f32.mrb[0].mxu0
    %v3046 = vpop.f32.mrb[0].mxu0
    %v3047 = vpop.f32.mrb[0].mxu0
    %3048 = vdwg.mxu0
    %v3049 = vmul.f32 %v3044, 0.25
    %v3050 = vadd.f32 %v3049, %v181
    %v3051 = vsel %vm315, %v3050, -inf
    %3052 = vmax.xlane.f32.xlu0 %v3051
    %v3053 = vpop.xlane.xlu0 %3052
    %v3054 = vsub.f32 %v3050, %v3053
    %v3055 = vmul.f32 %v3054, 1.442695
    %v3056 = vpow.pop %v3055
    %v3057 = vsel %vm315, %v3056, 0.0
    %3058 = vadd.xlane.f32.xlu0 %v3057
    %v3059 = vpop.xlane.xlu0 %3058
    %v3060 = vrcp.pop %v3059
    %v3061 = vmul.f32 %v3056, %v3060
    %v3062 = vpack.c.bf16 %v3061, %v3061
    %3063 = vrot.lane.b32.xlu0 %v2631, 80
    %v3064 = vpop.permute.xlu0 %3063
    %v3066 = vsel %vm315, %v3062, 0
    %v3069 = vsel %vm408, %v3064, 0
    %3071 = vmatprep.subr.bf16.mxu0 0
    %3072 = vmatpush1.bf16.msra.mxu0 %v3069
    %3073 = vmatprep.subr.bf16.mxu0 0
    %3074 = vmatpush1.bf16.msra.mxu0 0
    %3075 = vmatprep.subr.bf16.mxu0 0
    %3076 = vmatpush1.bf16.msra.mxu0 0
    %3077 = vmatprep.subr.bf16.mxu0 0
    %3078 = vmatpush1.bf16.msra.mxu0 0
    %3079 = vmatprep.subr.bf16.mxu0 0
    %3080 = vmatpush1.bf16.msra.mxu0 0
    %3081 = vmatprep.subr.bf16.mxu0 0
    %3082 = vmatpush1.bf16.msra.mxu0 0
    %3083 = vmatprep.subr.bf16.mxu0 0
    %3084 = vmatpush1.bf16.msra.mxu0 0
    %3085 = vmatprep.subr.bf16.mxu0 0
    %3086 = vmatpush1.bf16.msra.mxu0 0
    %3087 = vmatprep.subr.bf16.mxu0 0
    %3088 = vmatpush1.bf16.msra.mxu0 0
    %3089 = vmatprep.subr.bf16.mxu0 0
    %3090 = vmatpush1.bf16.msra.mxu0 0
    %3091 = vmatprep.subr.bf16.mxu0 0
    %3092 = vmatpush1.bf16.msra.mxu0 0
    %3093 = vmatprep.subr.bf16.mxu0 0
    %3094 = vmatpush1.bf16.msra.mxu0 0
    %3095 = vmatprep.subr.bf16.mxu0 0
    %3096 = vmatpush1.bf16.msra.mxu0 0
    %3097 = vmatprep.subr.bf16.mxu0 0
    %3098 = vmatpush1.bf16.msra.mxu0 0
    %3099 = vmatprep.subr.bf16.mxu0 0
    %3100 = vmatpush1.bf16.msra.mxu0 0
    %3101 = vmatprep.subr.bf16.mxu0 0
    %3102 = vmatpush1.bf16.msra.mxu0 0
    %3103 = vmatprep.mubr.bf16.mxu0 0
    %3104 = vmatmul.mubr.bf16.gmra.mrb[0].mxu0 %v3066
    %v3105 = vpop.f32.mrb[0].mxu0
    %v3106 = vadd.f32 0.0, %v3105
    %v3107 = vpop.f32.mrb[0].mxu0
    %v3108 = vpop.f32.mrb[0].mxu0
    %v3109 = vpop.f32.mrb[0].mxu0
    %3110 = vdwg.mxu0
    %3112 = vrot.lane.b32.xlu0 %v2818, 16
    %v3113 = vpop.permute.xlu0 %3112
    %3116 = vrot.lane.b32.xlu0 %v2962, 32
    %v3117 = vpop.permute.xlu0 %3116
    %3120 = vrot.lane.b32.xlu0 %v3106, 48
    %v3121 = vpop.permute.xlu0 %3120
    %v3123 = vsel %vm343, %v2673, %v3113
    %v3124 = vsel %vm916, %v3123, %v3117
    %v3125 = vsel %vm918, %v3124, %v3121
    %v3126 = vpack.c.bf16 %v3125, %v2538
    %s3127 = scalar_lea.vmem %s6, 32
    %v3128 = vld [vmem:[%s3127] sm:$0xf]
    %v3129 = vld [vmem:[%s3127 + $0x4] sm:$0xf]
    %v3130 = vld [vmem:[%s3127 + $0x8] sm:$0xf]
    %v3131 = vld [vmem:[%s3127 + $0xc] sm:$0xf]
    %v3132 = vld [vmem:[%s3127 + $0x10] sm:$0xf]
    %v3133 = vld [vmem:[%s3127 + $0x14] sm:$0xf]
    %v3134 = vld [vmem:[%s3127 + $0x18] sm:$0xf]
    %v3135 = vld [vmem:[%s3127 + $0x1c] sm:$0xf]
    %v3144 = vunpack.c.l.b16 %v3128
    %v3145 = vunpack.c.l.b16 %v3129
    %v3146 = vunpack.c.l.b16 %v3130
    %v3147 = vunpack.c.l.b16 %v3131
    %v3148 = vunpack.c.l.b16 %v3132
    %v3149 = vunpack.c.l.b16 %v3133
    %v3150 = vunpack.c.l.b16 %v3134
    %v3151 = vunpack.c.l.b16 %v3135
    %v3152 = vpack.c.b16 %v3145, %v3144
    %v3153 = vpack.c.b16 %v3147, %v3146
    %v3154 = vpack.c.b16 %v3149, %v3148
    %v3155 = vpack.c.b16 %v3151, %v3150
    %v3161 = vsel %vm187, %v3126, 0
    %3163 = vmatprep.subr.bf16.mxu0 0
    %3164 = vmatpush1.bf16.msra.mxu0 %v3152
    %3165 = vmatprep.subr.bf16.mxu0 0
    %3166 = vmatpush1.bf16.msra.mxu0 %v3153
    %3167 = vmatprep.subr.bf16.mxu0 0
    %3168 = vmatpush1.bf16.msra.mxu0 %v3154
    %3169 = vmatprep.subr.bf16.mxu0 0
    %3170 = vmatpush1.bf16.msra.mxu0 %v3155
    %3171 = vmatprep.subr.bf16.mxu0 0
    %3172 = vmatpush1.bf16.msra.mxu0 0
    %3173 = vmatprep.subr.bf16.mxu0 0
    %3174 = vmatpush1.bf16.msra.mxu0 0
    %3175 = vmatprep.subr.bf16.mxu0 0
    %3176 = vmatpush1.bf16.msra.mxu0 0
    %3177 = vmatprep.subr.bf16.mxu0 0
    %3178 = vmatpush1.bf16.msra.mxu0 0
    %3179 = vmatprep.subr.bf16.mxu0 0
    %3180 = vmatpush1.bf16.msra.mxu0 0
    %3181 = vmatprep.subr.bf16.mxu0 0
    %3182 = vmatpush1.bf16.msra.mxu0 0
    %3183 = vmatprep.subr.bf16.mxu0 0
    %3184 = vmatpush1.bf16.msra.mxu0 0
    %3185 = vmatprep.subr.bf16.mxu0 0
    %3186 = vmatpush1.bf16.msra.mxu0 0
    %3187 = vmatprep.subr.bf16.mxu0 0
    %3188 = vmatpush1.bf16.msra.mxu0 0
    %3189 = vmatprep.subr.bf16.mxu0 0
    %3190 = vmatpush1.bf16.msra.mxu0 0
    %3191 = vmatprep.subr.bf16.mxu0 0
    %3192 = vmatpush1.bf16.msra.mxu0 0
    %3193 = vmatprep.subr.bf16.mxu0 0
    %3194 = vmatpush1.bf16.msra.mxu0 0
    %3195 = vmatprep.mubr.bf16.mxu0 0
    %3196 = vmatmul.mubr.bf16.gmra.mrb[0].mxu0 %v3161
    %v3197 = vpop.f32.mrb[0].mxu0
    %v3198 = vadd.f32 0.0, %v3197
    %v3199 = vpop.f32.mrb[0].mxu0
    %v3200 = vpop.f32.mrb[0].mxu0
    %v3201 = vadd.f32 0.0, %v3200
    %v3202 = vpop.f32.mrb[0].mxu0
    %3203 = vdwg.mxu0
    %v3204 = vadd.f32 %v1828, %v3198
    %v3205 = vadd.f32 %v1829, %v3201
    %s3206 = scalar_lea.vmem %s4, 1
    %v3207 = vld [vmem:[%s3206] sm:$0x1]
    %v3208 = vmul.f32 %v3204, %v3204
    %v3209 = vmul.f32 %v3205, %v3205
    %v3210 = vsel %vm187, %v3208, 0.0
    %3211 = vadd.xlane.f32.xlu0 %v3210
    %v3212 = vpop.xlane.xlu0 %3211
    %v3213 = vsel %vm187, %v3209, 0.0
    %3214 = vadd.xlane.f32.xlu0 %v3213
    %v3215 = vpop.xlane.xlu0 %3214
    %v3216 = vmul.f32 %v3212, %v194
    %v3217 = vmul.f32 %v3215, %v194
    %v3218 = vadd.f32 %v3216, 1e-05
    %v3219 = vadd.f32 %v3217, 1e-05
    %v3220 = vrsqrt.pop %v3218
    %v3221 = vrsqrt.pop %v3219
    %v3222 = vmul.f32 %v3204, %v3220
    %v3223 = vmul.f32 %v3205, %v3221
    %v3225 = vlaneseq
    %v3226 = vshrl.u32 %v3225, 7
    %v3227 = vsub.s32 0, %v3226
    %v3228 = vrot.slane %v3207, %v3227
    %v3230 = vmul.f32 %v3222, %v3228
    %v3231 = vmul.f32 %v3223, %v3228
    %v3232 = vpack.c.bf16 %v3231, %v3230
    %s3233 = scalar_lea.vmem %s7, 64
    %v3234 = vld [vmem:[%s3233] sm:$0xff]
    %v3235 = vld [vmem:[%s3233 + $0x8] sm:$0xff]
    %v3236 = vld [vmem:[%s3233 + $0x10] sm:$0xff]
    %v3237 = vld [vmem:[%s3233 + $0x18] sm:$0xff]
    %v3238 = vld [vmem:[%s3233 + $0x20] sm:$0xff]
    %v3239 = vld [vmem:[%s3233 + $0x28] sm:$0xff]
    %v3240 = vld [vmem:[%s3233 + $0x30] sm:$0xff]
    %v3241 = vld [vmem:[%s3233 + $0x38] sm:$0xff]
    %v3250 = vunpack.c.l.b16 %v3234
    %v3251 = vunpack.c.h.b16 %v3234
    %v3252 = vunpack.c.l.b16 %v3235
    %v3253 = vunpack.c.h.b16 %v3235
    %v3254 = vunpack.c.l.b16 %v3236
    %v3255 = vunpack.c.h.b16 %v3236
    %v3256 = vunpack.c.l.b16 %v3237
    %v3257 = vunpack.c.h.b16 %v3237
    %v3258 = vunpack.c.l.b16 %v3238
    %v3259 = vunpack.c.h.b16 %v3238
    %v3260 = vunpack.c.l.b16 %v3239
    %v3261 = vunpack.c.h.b16 %v3239
    %v3262 = vunpack.c.l.b16 %v3240
    %v3263 = vunpack.c.h.b16 %v3240
    %v3264 = vunpack.c.l.b16 %v3241
    %v3265 = vunpack.c.h.b16 %v3241
    %v3266 = vpack.c.b16 %v3252, %v3250
    %v3267 = vpack.c.b16 %v3253, %v3251
    %v3268 = vpack.c.b16 %v3256, %v3254
    %v3269 = vpack.c.b16 %v3257, %v3255
    %v3270 = vpack.c.b16 %v3260, %v3258
    %v3271 = vpack.c.b16 %v3261, %v3259
    %v3272 = vpack.c.b16 %v3264, %v3262
    %v3273 = vpack.c.b16 %v3265, %v3263
    %v3283 = vsel %vm187, %v3232, 0
    %3285 = vmatprep.subr.bf16.mxu0 %v3267
    %3286 = vmatpush1.bf16.msra.mxu0 %v3266
    %3287 = vmatprep.subr.bf16.mxu0 %v3269
    %3288 = vmatpush1.bf16.msra.mxu0 %v3268
    %3289 = vmatprep.subr.bf16.mxu0 %v3271
    %3290 = vmatpush1.bf16.msra.mxu0 %v3270
    %3291 = vmatprep.subr.bf16.mxu0 %v3273
    %3292 = vmatpush1.bf16.msra.mxu0 %v3272
    %3293 = vmatprep.subr.bf16.mxu0 0
    %3294 = vmatpush1.bf16.msra.mxu0 0
    %3295 = vmatprep.subr.bf16.mxu0 0
    %3296 = vmatpush1.bf16.msra.mxu0 0
    %3297 = vmatprep.subr.bf16.mxu0 0
    %3298 = vmatpush1.bf16.msra.mxu0 0
    %3299 = vmatprep.subr.bf16.mxu0 0
    %3300 = vmatpush1.bf16.msra.mxu0 0
    %3301 = vmatprep.subr.bf16.mxu0 0
    %3302 = vmatpush1.bf16.msra.mxu0 0
    %3303 = vmatprep.subr.bf16.mxu0 0
    %3304 = vmatpush1.bf16.msra.mxu0 0
    %3305 = vmatprep.subr.bf16.mxu0 0
    %3306 = vmatpush1.bf16.msra.mxu0 0
    %3307 = vmatprep.subr.bf16.mxu0 0
    %3308 = vmatpush1.bf16.msra.mxu0 0
    %3309 = vmatprep.subr.bf16.mxu0 0
    %3310 = vmatpush1.bf16.msra.mxu0 0
    %3311 = vmatprep.subr.bf16.mxu0 0
    %3312 = vmatpush1.bf16.msra.mxu0 0
    %3313 = vmatprep.subr.bf16.mxu0 0
    %3314 = vmatpush1.bf16.msra.mxu0 0
    %3315 = vmatprep.subr.bf16.mxu0 0
    %3316 = vmatpush1.bf16.msra.mxu0 0
    %3317 = vmatprep.mubr.bf16.mxu0 0
    %3318 = vmatmul.mubr.bf16.gmra.mrb[0].mxu0 %v3283
    %v3319 = vpop.f32.mrb[0].mxu0
    %v3320 = vadd.f32 0.0, %v3319
    %v3321 = vpop.f32.mrb[0].mxu0
    %v3322 = vadd.f32 0.0, %v3321
    %v3323 = vpop.f32.mrb[0].mxu0
    %v3324 = vadd.f32 0.0, %v3323
    %v3325 = vpop.f32.mrb[0].mxu0
    %v3326 = vadd.f32 0.0, %v3325
    %3327 = vdwg.mxu0
    %v3328 = vxor.u32 %v3320, 2147483648
    %v3329 = vxor.u32 %v3324, 2147483648
    %v3330 = vmul.f32 %v3328, 1.442695
    %v3331 = vpow.pop %v3330
    %v3332 = vmul.f32 %v3329, 1.442695
    %v3333 = vpow.pop %v3332
    %v3334 = vadd.f32 %v3331, 1.0
    %v3335 = vadd.f32 %v3333, 1.0
    %v3336 = vrcp.pop %v3334
    %v3337 = vmul.f32 1.0, %v3336
    %v3338 = vrcp.pop %v3335
    %v3339 = vmul.f32 1.0, %v3338
    %v3340 = vmul.f32 %v3320, %v3337
    %v3341 = vmul.f32 %v3324, %v3339
    %v3342 = vmul.f32 %v3340, %v3322
    %v3343 = vmul.f32 %v3341, %v3326
    %v3344 = vpack.c.bf16 %v3343, %v3342
    %s3345 = scalar_lea.vmem %s8, 64
    %v3346 = vld [vmem:[%s3345] sm:$0xf]
    %v3347 = vld [vmem:[%s3345 + $0x4] sm:$0xf]
    %v3348 = vld [vmem:[%s3345 + $0x8] sm:$0xf]
    %v3349 = vld [vmem:[%s3345 + $0xc] sm:$0xf]
    %v3350 = vld [vmem:[%s3345 + $0x10] sm:$0xf]
    %v3351 = vld [vmem:[%s3345 + $0x14] sm:$0xf]
    %v3352 = vld [vmem:[%s3345 + $0x18] sm:$0xf]
    %v3353 = vld [vmem:[%s3345 + $0x1c] sm:$0xf]
    %v3354 = vld [vmem:[%s3345 + $0x20] sm:$0xf]
    %v3355 = vld [vmem:[%s3345 + $0x24] sm:$0xf]
    %v3356 = vld [vmem:[%s3345 + $0x28] sm:$0xf]
    %v3357 = vld [vmem:[%s3345 + $0x2c] sm:$0xf]
    %v3358 = vld [vmem:[%s3345 + $0x30] sm:$0xf]
    %v3359 = vld [vmem:[%s3345 + $0x34] sm:$0xf]
    %v3360 = vld [vmem:[%s3345 + $0x38] sm:$0xf]
    %v3361 = vld [vmem:[%s3345 + $0x3c] sm:$0xf]
    %v3378 = vunpack.c.l.b16 %v3346
    %v3379 = vunpack.c.l.b16 %v3347
    %v3380 = vunpack.c.l.b16 %v3348
    %v3381 = vunpack.c.l.b16 %v3349
    %v3382 = vunpack.c.l.b16 %v3350
    %v3383 = vunpack.c.l.b16 %v3351
    %v3384 = vunpack.c.l.b16 %v3352
    %v3385 = vunpack.c.l.b16 %v3353
    %v3386 = vunpack.c.l.b16 %v3354
    %v3387 = vunpack.c.l.b16 %v3355
    %v3388 = vunpack.c.l.b16 %v3356
    %v3389 = vunpack.c.l.b16 %v3357
    %v3390 = vunpack.c.l.b16 %v3358
    %v3391 = vunpack.c.l.b16 %v3359
    %v3392 = vunpack.c.l.b16 %v3360
    %v3393 = vunpack.c.l.b16 %v3361
    %v3394 = vpack.c.b16 %v3379, %v3378
    %v3395 = vpack.c.b16 %v3381, %v3380
    %v3396 = vpack.c.b16 %v3383, %v3382
    %v3397 = vpack.c.b16 %v3385, %v3384
    %v3398 = vpack.c.b16 %v3387, %v3386
    %v3399 = vpack.c.b16 %v3389, %v3388
    %v3400 = vpack.c.b16 %v3391, %v3390
    %v3401 = vpack.c.b16 %v3393, %v3392
    %3410 = vmatprep.subr.bf16.mxu0 0
    %3411 = vmatpush1.bf16.msra.mxu0 %v3394
    %3412 = vmatprep.subr.bf16.mxu0 0
    %3413 = vmatpush1.bf16.msra.mxu0 %v3395
    %3414 = vmatprep.subr.bf16.mxu0 0
    %3415 = vmatpush1.bf16.msra.mxu0 %v3396
    %3416 = vmatprep.subr.bf16.mxu0 0
    %3417 = vmatpush1.bf16.msra.mxu0 %v3397
    %3418 = vmatprep.subr.bf16.mxu0 0
    %3419 = vmatpush1.bf16.msra.mxu0 %v3398
    %3420 = vmatprep.subr.bf16.mxu0 0
    %3421 = vmatpush1.bf16.msra.mxu0 %v3399
    %3422 = vmatprep.subr.bf16.mxu0 0
    %3423 = vmatpush1.bf16.msra.mxu0 %v3400
    %3424 = vmatprep.subr.bf16.mxu0 0
    %3425 = vmatpush1.bf16.msra.mxu0 %v3401
    %3426 = vmatprep.subr.bf16.mxu0 0
    %3427 = vmatpush1.bf16.msra.mxu0 0
    %3428 = vmatprep.subr.bf16.mxu0 0
    %3429 = vmatpush1.bf16.msra.mxu0 0
    %3430 = vmatprep.subr.bf16.mxu0 0
    %3431 = vmatpush1.bf16.msra.mxu0 0
    %3432 = vmatprep.subr.bf16.mxu0 0
    %3433 = vmatpush1.bf16.msra.mxu0 0
    %3434 = vmatprep.subr.bf16.mxu0 0
    %3435 = vmatpush1.bf16.msra.mxu0 0
    %3436 = vmatprep.subr.bf16.mxu0 0
    %3437 = vmatpush1.bf16.msra.mxu0 0
    %3438 = vmatprep.subr.bf16.mxu0 0
    %3439 = vmatpush1.bf16.msra.mxu0 0
    %3440 = vmatprep.subr.bf16.mxu0 0
    %3441 = vmatpush1.bf16.msra.mxu0 0
    %3442 = vmatprep.mubr.bf16.mxu0 0
    %3443 = vmatmul.mubr.bf16.gmra.mrb[0].mxu0 %v3344
    %v3444 = vpop.f32.mrb[0].mxu0
    %v3445 = vadd.f32 0.0, %v3444
    %v3446 = vpop.f32.mrb[0].mxu0
    %v3447 = vpop.f32.mrb[0].mxu0
    %v3448 = vadd.f32 0.0, %v3447
    %v3449 = vpop.f32.mrb[0].mxu0
    %3450 = vdwg.mxu0
    %v3451 = vadd.f32 %v3204, %v3445
    %v3452 = vadd.f32 %v3205, %v3448
    %v3453 = vld [vmem:[%s9] sm:$0x1]
    %v3454 = vmul.f32 %v3451, %v3451
    %v3455 = vmul.f32 %v3452, %v3452
    %v3456 = vsel %vm187, %v3454, 0.0
    %3457 = vadd.xlane.f32.xlu0 %v3456
    %v3458 = vpop.xlane.xlu0 %3457
    %v3459 = vsel %vm187, %v3455, 0.0
    %3460 = vadd.xlane.f32.xlu0 %v3459
    %v3461 = vpop.xlane.xlu0 %3460
    %v3462 = vmul.f32 %v3458, %v194
    %v3463 = vmul.f32 %v3461, %v194
    %v3464 = vadd.f32 %v3462, 1e-05
    %v3465 = vadd.f32 %v3463, 1e-05
    %v3466 = vrsqrt.pop %v3464
    %v3467 = vrsqrt.pop %v3465
    %v3468 = vmul.f32 %v3451, %v3466
    %v3469 = vmul.f32 %v3452, %v3467
    %v3471 = vlaneseq
    %v3472 = vshrl.u32 %v3471, 7
    %v3473 = vsub.s32 0, %v3472
    %v3474 = vrot.slane %v3453, %v3473
    %v3476 = vmul.f32 %v3468, %v3474
    %v3477 = vmul.f32 %v3469, %v3474
    %3478 = vst.msk [vmem:[#allocation2] sm:$0xff] %vm187, %v3476
    %3479 = vst.msk [vmem:[#allocation2 + $0x8] sm:$0xff] %vm187, %v3477
    // Predicated region
    $region50: #{smol_model.1} parent=1 // pred_check
      _
    $region51: #{smol_model.1} parent=1 // pred_check_branch
      %3481 = sbr.rel (0) target = $region53
    $region52: #{smol_model.1} parent=1 // pred_region
      %s3483 = ssub.s32 256, 256
      %3484 = vsyncadd [#allocation3], %s3483
      %s3485 = sshll.u32 [#allocation2], 4
      %s3486 = int_to_ptr.vmem [resolvable:$true] %s3485
      %3491 = dma.vmem_to_hbm [thread:$0]  %s3486, 256, %s12, [#allocation3], 128, 128, 8
    $region53: #{smol_model.1} parent=1 // pred_fallthru
      _
    // Predicated region
    $region54: #{smol_model.1} parent=1 // pred_check
      _
    $region55: #{smol_model.1} parent=1 // pred_check_branch
      %3493 = sbr.rel (0) target = $region57
    $region56: #{smol_model.1} parent=1 // pred_region
      %3494 = dma.done [#allocation3], 256
    $region57: #{smol_model.1} parent=1 // pred_fallthru
      _
    %3495 = vsyncpa [#allocation3], 1

</llo_original>
